<compile_context>
chip_gen: v6e
topology: v6e:2x2x1
jax: 0.10.0
libtpu: 0.0.40
codegen_flags: <defaults>
</compile_context>

<pallas_src>
import jax
import jax.numpy as jnp
from jax import lax
from jax.experimental import pallas as pl
from jax.experimental.pallas import tpu as pltpu

_HALO = 6    # cascaded 5x5 pools -> 13x13 receptive field -> +/-6 rows
_PAD_L = 8   # left halo of the W-pool scratch; 8 keeps the interior store aligned


def _make_spp_kernel(H, W, C1, C_, C2, TH, mm_dtype, pool_dtype, approx_recip):
    """Build the fused SPP kernel for static shapes / one H tile per step."""
    E = TH + 2 * _HALO
    pad_l = _PAD_L
    f32 = jnp.float32

    def silu(v):
        # SiLU = v * sigmoid(v).  exp runs on the EUP; with approx_recip the
        # divide also moves to the EUP slot (frees VALU cycles for the pools).
        den = 1.0 + jnp.exp(-v)
        if approx_recip:
            return v * pl.reciprocal(den, approx=True)
        return v / den

    def kernel(x_ref, w1_ref, b1_ref, w2_ref, b2_ref, o_ref, pw_ref):
        h = pl.program_id(1)
        r0 = h * TH                                  # first output row (global)

        # -inf halo *strips* of the W-pool scratch (2 columns each side); the
        # interior is overwritten by every pool_w call before it is read.
        # Re-done every step on purpose: under "parallel" megacore each core
        # owns its own scratch copy, so a program_id==0 guard would be wrong.
        ninf = jnp.full((E, 2, C_), -jnp.inf, dtype=pw_ref.dtype)
        pw_ref[:, pad_l - 2:pad_l, :] = ninf
        pw_ref[:, pad_l + W:pad_l + W + 2, :] = ninf

        # ---- cv1: 1x1 conv (BN folded) + SiLU over the tile + row halo ------
        # Padded-x rows r0 .. r0+E-1  ==  global rows r0-6 .. r0+TH+5.
        xw = x_ref[pl.ds(r0, E), :, :]
        y = jnp.dot(xw.reshape(E * W, C1).astype(mm_dtype), w1_ref[...],
                    preferred_element_type=f32)
        y = silu(y + b1_ref[...])
        y_ext = y.reshape(E, W, C_).astype(pool_dtype)

        # Rows outside the real image are -inf for the max pools (the wrapper
        # zero-pads x along H; cv1 of those rows is recomputed garbage).
        g = lax.broadcasted_iota(jnp.int32, (E, 1, 1), 0) + (r0 - _HALO)
        y_ext = jnp.where((g >= 0) & (g < H), y_ext,
                          jnp.array(-jnp.inf, dtype=pool_dtype))

        # ---- separable 5x5 max pool (stride 1, -inf padding along W) --------
        def pool_w(a, rows):                         # (rows, W, C_) -> same
            pw_ref[0:rows, pad_l:pad_l + W, :] = a
            m = pw_ref[0:rows, pad_l - 2:pad_l - 2 + W, :]
            for i in range(1, 5):
                m = jnp.maximum(m, pw_ref[0:rows, pad_l - 2 + i:pad_l - 2 + i + W, :])
            return m

        def pool5(a, rows_out):                      # (rows_out+4, W, C_) -> (rows_out, W, C_)
            aw = pool_w(a, rows_out + 4)
            m = aw[0:rows_out]
            for i in range(1, 5):
                m = jnp.maximum(m, aw[i:i + rows_out])
            return m

        def part(a):                                 # (TH, W, C_) tile -> MXU operand
            return a.reshape(TH * W, C_).astype(mm_dtype)

        # ---- cv2 over the (virtual) channel concat, interleaved with the ----
        # ---- pool cascade so MXU pushes co-issue with the VPU max chains ----
        acc = jnp.dot(part(y_ext[_HALO:_HALO + TH]), w2_ref[0:C_, :],
                      preferred_element_type=f32)
        p5 = pool5(y_ext, TH + 8)                    # MaxPool2d(5)
        acc = acc + jnp.dot(part(p5[4:4 + TH]), w2_ref[C_:2 * C_, :],
                            preferred_element_type=f32)
        p9 = pool5(p5, TH + 4)                       # MaxPool2d(9)  == 5 o 5
        acc = acc + jnp.dot(part(p9[2:2 + TH]), w2_ref[2 * C_:3 * C_, :],
                            preferred_element_type=f32)
        p13 = pool5(p9, TH)                          # MaxPool2d(13) == 5 o 5 o 5
        acc = acc + jnp.dot(part(p13), w2_ref[3 * C_:4 * C_, :],
                            preferred_element_type=f32)

        out = silu(acc + b2_ref[...])
        o_ref[...] = out.reshape(TH, W, C2).astype(o_ref.dtype)

    return kernel


def _choose_tile_h(H, target=24):
    """Largest divisor of H not exceeding `target` (falls back to a single tile)."""
    if H <= target:
        return H
    best = max(d for d in range(1, target + 1) if H % d == 0)
    return best if best >= 8 else H


def spp_forward_nhwc(x, w1, gamma1, beta1, mean1, var1,
                     w2, gamma2, beta2, mean2, var2, *,
                     eps=1e-3, compute_dtype=None, tile_h=None):
    """SPP forward on NHWC input x: (B, H, W, C1).  No layout transposes."""
    B, H, W, C1 = x.shape
    C_ = w1.shape[0]
    C2 = w2.shape[0]
    assert w2.shape[1] == 4 * C_

    if compute_dtype is None:
        compute_dtype = jnp.bfloat16 if x.dtype == jnp.bfloat16 else jnp.float32
    compute_dtype = jnp.dtype(compute_dtype)
    approx_recip = compute_dtype == jnp.dtype(jnp.bfloat16)

    TH = tile_h if tile_h is not None else _choose_tile_h(H)
    assert H % TH == 0, (H, TH)
    nH = H // TH
    E = TH + 2 * _HALO

    # Fold eval-mode BatchNorm into the conv weights and a per-channel bias
    # (fold in f32, then cast the weights to the matmul dtype).
    s1 = (gamma1 / jnp.sqrt(var1 + eps)).astype(jnp.float32)                 # (C_,)
    w1f = (w1.reshape(C_, C1).astype(jnp.float32) * s1[:, None]).T.astype(compute_dtype)
    b1f = (beta1 - mean1 * s1).astype(jnp.float32).reshape(1, C_)
    s2 = (gamma2 / jnp.sqrt(var2 + eps)).astype(jnp.float32)                 # (C2,)
    w2f = (w2.reshape(C2, 4 * C_).astype(jnp.float32) * s2[:, None]).T.astype(compute_dtype)
    b2f = (beta2 - mean2 * s2).astype(jnp.float32).reshape(1, C2)

    # +/-6 row zero-pad so each H tile slices its halo with one static-size
    # dynamic slice; the padded rows are masked to -inf inside the kernel.
    x_pad = jnp.pad(x, ((0, 0), (_HALO, _HALO), (0, 0), (0, 0)))
    Hp = H + 2 * _HALO

    kernel = _make_spp_kernel(H, W, C1, C_, C2, TH,
                              compute_dtype, compute_dtype, approx_recip)

    bx = x.dtype.itemsize
    bw = compute_dtype.itemsize
    # Footprint: 2x x/out blocks (double-buffered), 2x weights, W-pool scratch,
    # plus the live intermediates of one step (x window, f32 y, 2 pool planes,
    # f32 accumulator).  Clamp to the v7x physical ceiling.
    est = (2 * Hp * W * C1 * bx
           + 2 * TH * W * C2 * bx
           + 2 * (C1 * C_ + 4 * C_ * C2) * bw
           + 2 * (C_ + C2) * 4
           + E * (W + _PAD_L + 2) * C_ * bw
           + E * W * (C1 * bx + 4 * C_ + 2 * C_ * bw)
           + TH * W * C2 * 4)
    vmem_limit = int(min(max(1.5 * est + (4 << 20), 32 << 20), 64 << 20))

    cost = pl.CostEstimate(
        flops=2 * B * nH * (E * W * C1 * C_ + 4 * TH * W * C_ * C2)
        + 24 * B * H * W * C_,
        transcendentals=B * nH * E * W * C_ + B * H * W * C2,
        bytes_accessed=(x_pad.size + B * H * W * C2) * bx
        + (w1f.size + w2f.size) * bw + (b1f.size + b2f.size) * 4,
    )

    out = pl.pallas_call(
        kernel,
        out_shape=jax.ShapeDtypeStruct((B, H, W, C2), x.dtype),
        grid_spec=pltpu.PrefetchScalarGridSpec(
            num_scalar_prefetch=0,
            grid=(B, nH),
            in_specs=[
                # x block index is constant across the h axis -> fetched once
                # per image and kept resident while its row tiles are swept.
                pl.BlockSpec((None, Hp, W, C1), lambda b, h: (b, 0, 0, 0)),
                pl.BlockSpec((C1, C_), lambda b, h: (0, 0)),
                pl.BlockSpec((1, C_), lambda b, h: (0, 0)),
                pl.BlockSpec((4 * C_, C2), lambda b, h: (0, 0)),
                pl.BlockSpec((1, C2), lambda b, h: (0, 0)),
            ],
            out_specs=pl.BlockSpec((None, TH, W, C2), lambda b, h: (b, h, 0, 0)),
            scratch_shapes=[
                pltpu.VMEM((E, W + _PAD_L + 2, C_), compute_dtype),  # W-pool halo buf
            ],
        ),
        compiler_params=pltpu.CompilerParams(
            dimension_semantics=("parallel", "parallel"),
            vmem_limit_bytes=vmem_limit),
        cost_estimate=cost,
    )(x_pad, w1f, b1f, w2f, b2f)
    return out


def spp_forward(x, w1, gamma1, beta1, mean1, var1,
                w2, gamma2, beta2, mean2, var2, *,
                eps=1e-3, compute_dtype=None, tile_h=None):
    """SPP forward, NCHW API matching the PyTorch module.

    Keep the surrounding graph NHWC and call `spp_forward_nhwc` directly to
    drop the two layout transposes below (they each cost a full HBM pass)."""
    out = spp_forward_nhwc(jnp.transpose(x, (0, 2, 3, 1)),
                           w1, gamma1, beta1, mean1, var1,
                           w2, gamma2, beta2, mean2, var2,
                           eps=eps, compute_dtype=compute_dtype, tile_h=tile_h)
    return jnp.transpose(out, (0, 3, 1, 2))


# ----------------------- pure-JAX reference (for checking) -----------------------

def _maxpool(x, k):
    # Matches nn.MaxPool2d(k, stride=1, padding=k//2): -inf padding.
    return jax.lax.reduce_window(
        x, -jnp.inf, jax.lax.max,
        window_dimensions=(1, 1, k, k),
        window_strides=(1, 1, 1, 1),
        padding=((0, 0), (0, 0), (k // 2, k // 2), (k // 2, k // 2)))


def _reference(x, w1, g1, b1, m1, v1, w2, g2, b2, m2, v2, eps=1e-3):
    def conv_bn_silu(t, w, g, b, m, v):
        y = jnp.einsum('bchw,oc->bohw', t, w.reshape(w.shape[0], -1))
        y = (y - m[None, :, None, None]) / jnp.sqrt(v[None, :, None, None] + eps)
        y = y * g[None, :, None, None] + b[None, :, None, None]
        return y * jax.nn.sigmoid(y)
    y = conv_bn_silu(x, w1, g1, b1, m1, v1)
    z = jnp.concatenate([y] + [_maxpool(y, k) for k in (5, 9, 13)], axis=1)
    return conv_bn_silu(z, w2, g2, b2, m2, v2)


if __name__ == "__main__":
    key = jax.random.PRNGKey(0)
    ks = jax.random.split(key, 11)

    B, C1, H, W = 2, 4, 16, 16
    C2 = 32
    C_ = C1 // 2

    x = jax.random.normal(ks[0], (B, C1, H, W), dtype=jnp.float32)

    w1 = 0.1 * jax.random.normal(ks[1], (C_, C1, 1, 1), dtype=jnp.float32)
    g1 = 1.0 + 0.1 * jax.random.normal(ks[2], (C_,), dtype=jnp.float32)
    b1 = 0.1 * jax.random.normal(ks[3], (C_,), dtype=jnp.float32)
    m1 = 0.1 * jax.random.normal(ks[4], (C_,), dtype=jnp.float32)
    v1 = jnp.abs(jax.random.normal(ks[5], (C_,), dtype=jnp.float32)) + 0.5

    w2 = 0.1 * jax.random.normal(ks[6], (C2, 4 * C_, 1, 1), dtype=jnp.float32)
    g2 = 1.0 + 0.1 * jax.random.normal(ks[7], (C2,), dtype=jnp.float32)
    b2 = 0.1 * jax.random.normal(ks[8], (C2,), dtype=jnp.float32)
    m2 = 0.1 * jax.random.normal(ks[9], (C2,), dtype=jnp.float32)
    v2 = jnp.abs(jax.random.normal(ks[10], (C2,), dtype=jnp.float32)) + 0.5

    params = (w1, g1, b1, m1, v1, w2, g2, b2, m2, v2)
    ref = _reference(x, *params)

    # 1) f32 path, default tiling (single H tile per image).
    out = jax.block_until_ready(spp_forward(x, *params))
    assert out.shape == (B, C2, H, W), out.shape
    assert jnp.allclose(out, ref, atol=1e-4, rtol=1e-4), \
        float(jnp.max(jnp.abs(out - ref)))

    # 2) f32 path with explicit H tiling (exercises the +/-6-row halo /
    #    cv1-recompute path: grid=(B, 2)).
    out_t = jax.block_until_ready(spp_forward(x, *params, tile_h=8))
    assert jnp.allclose(out_t, ref, atol=1e-4, rtol=1e-4), \
        float(jnp.max(jnp.abs(out_t - ref)))

    # 3) bf16 compute path (bf16 MXU operands + bf16 pools + approx-reciprocal
    #    SiLU); looser tolerance is inherent to the reduced precision.
    out_bf = jax.block_until_ready(
        spp_forward(x, *params, compute_dtype=jnp.bfloat16, tile_h=8))
    assert jnp.allclose(out_bf, ref, atol=3e-2, rtol=3e-2), \
        float(jnp.max(jnp.abs(out_bf - ref)))

    print("KERNEL_OK")
</pallas_src>

<mosaic_0001>
module attributes {stable_mosaic.version = 11 : i64} {
  func.func @kernel(%arg0: i32, %arg1: i32, %arg2: memref<1x28x16x4xf32, #tpu.memory_space<vmem>>, %arg3: memref<4x2xf32, #tpu.memory_space<vmem>>, %arg4: memref<1x2xf32, #tpu.memory_space<vmem>>, %arg5: memref<8x32xf32, #tpu.memory_space<vmem>>, %arg6: memref<1x32xf32, #tpu.memory_space<vmem>>, %arg7: memref<1x16x16x32xf32, #tpu.memory_space<vmem>>, %arg8: memref<28x26x2xf32, #tpu.memory_space<vmem>>) attributes {dimension_semantics = [#tpu.dimension_semantics<parallel>, #tpu.dimension_semantics<parallel>], iteration_bounds = array<i64: 2, 1>, scalar_prefetch = 0 : i64, scratch_operands = 1 : i64, tpu.core_type = #tpu.core_type<tc>, window_params = [{transform_indices = @transform_0, window_bounds = array<i64: 1, 28, 16, 4>}, {pipeline_mode = #tpu.pipeline_mode<synchronous>, transform_indices = @transform_1, window_bounds = array<i64: 4, 2>}, {pipeline_mode = #tpu.pipeline_mode<synchronous>, transform_indices = @transform_2, window_bounds = array<i64: 1, 2>}, {pipeline_mode = #tpu.pipeline_mode<synchronous>, transform_indices = @transform_3, window_bounds = array<i64: 8, 32>}, {pipeline_mode = #tpu.pipeline_mode<synchronous>, transform_indices = @transform_4, window_bounds = array<i64: 1, 32>}, {transform_indices = @transform_5, window_bounds = array<i64: 1, 16, 16, 32>}]} {
    %c16_i32 = arith.constant 16 : i32
    %0 = arith.muli %arg1, %c16_i32 : i32
    %cst = arith.constant 0xFF800000 : f32
    %1 = vector.broadcast %cst : f32 to vector<28x2x2xf32>
    %c0 = arith.constant 0 : index
    %c6 = arith.constant 6 : index
    %c0_0 = arith.constant 0 : index
    %2 = vector.load %arg8[%c0, %c6, %c0_0] : memref<28x26x2xf32, #tpu.memory_space<vmem>>, vector<28x2x2xf32>
    tpu.vector_store %arg8[%c0, %c6, %c0_0], %1 {strides = array<i32>} : memref<28x26x2xf32, #tpu.memory_space<vmem>>, vector<28x2x2xf32>,
    %c0_1 = arith.constant 0 : index
    %c24 = arith.constant 24 : index
    %c0_2 = arith.constant 0 : index
    %3 = vector.load %arg8[%c0_1, %c24, %c0_2] : memref<28x26x2xf32, #tpu.memory_space<vmem>>, vector<28x2x2xf32>
    tpu.vector_store %arg8[%c0_1, %c24, %c0_2], %1 {strides = array<i32>} : memref<28x26x2xf32, #tpu.memory_space<vmem>>, vector<28x2x2xf32>,
    %c0_3 = arith.constant 0 : index
    %4 = arith.index_cast %0 : i32 to index
    %c0_4 = arith.constant 0 : index
    %c0_5 = arith.constant 0 : index
    %5 = vector.load %arg2[%c0_3, %4, %c0_4, %c0_5] : memref<1x28x16x4xf32, #tpu.memory_space<vmem>>, vector<1x28x16x4xf32>
    %6 = vector.shape_cast %5 : vector<1x28x16x4xf32> to vector<28x16x4xf32>
    %7 = vector.shape_cast %6 : vector<28x16x4xf32> to vector<448x4xf32>
    %c0_6 = arith.constant 0 : index
    %c0_7 = arith.constant 0 : index
    %8 = vector.load %arg3[%c0_6, %c0_7] : memref<4x2xf32, #tpu.memory_space<vmem>>, vector<4x2xf32>
    %cst_8 = arith.constant dense<0.000000e+00> : vector<448x2xf32>
    %9 = tpu.matmul %7, %8, %cst_8 {dimension_numbers = #tpu.dot_dimension_numbers<[1], [0], [0], [1], [0, 0, 1, 1], [], []>} : vector<448x4xf32>, vector<4x2xf32>, vector<448x2xf32> -> vector<448x2xf32>
    %c0_9 = arith.constant 0 : index
    %c0_10 = arith.constant 0 : index
    %10 = vector.load %arg4[%c0_9, %c0_10] : memref<1x2xf32, #tpu.memory_space<vmem>>, vector<1x2xf32>
    %11 = vector.broadcast %10 : vector<1x2xf32> to vector<448x2xf32>
    %12 = arith.addf %9, %11 : vector<448x2xf32>
    %cst_11 = arith.constant 0.000000e+00 : f32
    %13 = vector.broadcast %cst_11 : f32 to vector<448x2xf32>
    %14 = arith.subf %13, %12 : vector<448x2xf32>
    %15 = math.exp %14 : vector<448x2xf32>
    %cst_12 = arith.constant 1.000000e+00 : f32
    %16 = vector.broadcast %cst_12 : f32 to vector<448x2xf32>
    %17 = arith.addf %16, %15 : vector<448x2xf32>
    %18 = arith.divf %12, %17 : vector<448x2xf32>
    %19 = vector.shape_cast %18 : vector<448x2xf32> to vector<28x16x2xf32>
    %20 = tpu.iota {dimensions = array<i32: 0>} : vector<28x1x1xi32>
    %c6_i32 = arith.constant 6 : i32
    %21 = arith.subi %0, %c6_i32 : i32
    %22 = vector.broadcast %21 : i32 to vector<28x1x1xi32>
    %23 = arith.addi %20, %22 : vector<28x1x1xi32>
    %c0_i32 = arith.constant 0 : i32
    %24 = vector.broadcast %c0_i32 : i32 to vector<28x1x1xi32>
    %25 = arith.cmpi sge, %23, %24 : vector<28x1x1xi32>
    %c16_i32_13 = arith.constant 16 : i32
    %26 = vector.broadcast %c16_i32_13 : i32 to vector<28x1x1xi32>
    %27 = arith.cmpi slt, %23, %26 : vector<28x1x1xi32>
    %28 = arith.andi %25, %27 : vector<28x1x1xi1>
    %cst_14 = arith.constant 0xFF800000 : f32
    %29 = vector.shape_cast %28 : vector<28x1x1xi1> to vector<28x1x1xi1>
    %30 = vector.broadcast %29 : vector<28x1x1xi1> to vector<28x16x2xi1>
    %31 = vector.broadcast %cst_14 : f32 to vector<28x16x2xf32>
    %32 = arith.select %30, %19, %31 : vector<28x16x2xi1>, vector<28x16x2xf32>
    %33 = vector.extract_strided_slice %32 {offsets = [6, 0, 0], sizes = [16, 16, 2], strides = [1, 1, 1]} : vector<28x16x2xf32> to vector<16x16x2xf32>
    %34 = vector.shape_cast %33 : vector<16x16x2xf32> to vector<256x2xf32>
    %c0_15 = arith.constant 0 : index
    %c0_16 = arith.constant 0 : index
    %35 = vector.load %arg5[%c0_15, %c0_16] : memref<8x32xf32, #tpu.memory_space<vmem>>, vector<2x32xf32>
    %cst_17 = arith.constant dense<0.000000e+00> : vector<256x32xf32>
    %36 = tpu.matmul %34, %35, %cst_17 {dimension_numbers = #tpu.dot_dimension_numbers<[1], [0], [0], [1], [0, 0, 1, 1], [], []>} : vector<256x2xf32>, vector<2x32xf32>, vector<256x32xf32> -> vector<256x32xf32>
    %c0_18 = arith.constant 0 : index
    %c8 = arith.constant 8 : index
    %c0_19 = arith.constant 0 : index
    %37 = vector.load %arg8[%c0_18, %c8, %c0_19] : memref<28x26x2xf32, #tpu.memory_space<vmem>>, vector<28x16x2xf32>
    tpu.vector_store %arg8[%c0_18, %c8, %c0_19], %32 {strides = array<i32>} : memref<28x26x2xf32, #tpu.memory_space<vmem>>, vector<28x16x2xf32>,
    %c0_20 = arith.constant 0 : index
    %c6_21 = arith.constant 6 : index
    %c0_22 = arith.constant 0 : index
    %38 = vector.load %arg8[%c0_20, %c6_21, %c0_22] : memref<28x26x2xf32, #tpu.memory_space<vmem>>, vector<28x16x2xf32>
    %c0_23 = arith.constant 0 : index
    %c7 = arith.constant 7 : index
    %c0_24 = arith.constant 0 : index
    %39 = vector.load %arg8[%c0_23, %c7, %c0_24] : memref<28x26x2xf32, #tpu.memory_space<vmem>>, vector<28x16x2xf32>
    %40 = arith.maximumf %38, %39 : vector<28x16x2xf32>
    %c0_25 = arith.constant 0 : index
    %c8_26 = arith.constant 8 : index
    %c0_27 = arith.constant 0 : index
    %41 = vector.load %arg8[%c0_25, %c8_26, %c0_27] : memref<28x26x2xf32, #tpu.memory_space<vmem>>, vector<28x16x2xf32>
    %42 = arith.maximumf %40, %41 : vector<28x16x2xf32>
    %c0_28 = arith.constant 0 : index
    %c9 = arith.constant 9 : index
    %c0_29 = arith.constant 0 : index
    %43 = vector.load %arg8[%c0_28, %c9, %c0_29] : memref<28x26x2xf32, #tpu.memory_space<vmem>>, vector<28x16x2xf32>
    %44 = arith.maximumf %42, %43 : vector<28x16x2xf32>
    %c0_30 = arith.constant 0 : index
    %c10 = arith.constant 10 : index
    %c0_31 = arith.constant 0 : index
    %45 = vector.load %arg8[%c0_30, %c10, %c0_31] : memref<28x26x2xf32, #tpu.memory_space<vmem>>, vector<28x16x2xf32>
    %46 = arith.maximumf %44, %45 : vector<28x16x2xf32>
    %47 = vector.extract_strided_slice %46 {offsets = [0, 0, 0], sizes = [24, 16, 2], strides = [1, 1, 1]} : vector<28x16x2xf32> to vector<24x16x2xf32>
    %48 = vector.extract_strided_slice %46 {offsets = [1, 0, 0], sizes = [24, 16, 2], strides = [1, 1, 1]} : vector<28x16x2xf32> to vector<24x16x2xf32>
    %49 = arith.maximumf %47, %48 : vector<24x16x2xf32>
    %50 = vector.extract_strided_slice %46 {offsets = [2, 0, 0], sizes = [24, 16, 2], strides = [1, 1, 1]} : vector<28x16x2xf32> to vector<24x16x2xf32>
    %51 = arith.maximumf %49, %50 : vector<24x16x2xf32>
    %52 = vector.extract_strided_slice %46 {offsets = [3, 0, 0], sizes = [24, 16, 2], strides = [1, 1, 1]} : vector<28x16x2xf32> to vector<24x16x2xf32>
    %53 = arith.maximumf %51, %52 : vector<24x16x2xf32>
    %54 = vector.extract_strided_slice %46 {offsets = [4, 0, 0], sizes = [24, 16, 2], strides = [1, 1, 1]} : vector<28x16x2xf32> to vector<24x16x2xf32>
    %55 = arith.maximumf %53, %54 : vector<24x16x2xf32>
    %56 = vector.extract_strided_slice %55 {offsets = [4, 0, 0], sizes = [16, 16, 2], strides = [1, 1, 1]} : vector<24x16x2xf32> to vector<16x16x2xf32>
    %57 = vector.shape_cast %56 : vector<16x16x2xf32> to vector<256x2xf32>
    %c2 = arith.constant 2 : index
    %c0_32 = arith.constant 0 : index
    %58 = vector.load %arg5[%c2, %c0_32] : memref<8x32xf32, #tpu.memory_space<vmem>>, vector<2x32xf32>
    %cst_33 = arith.constant dense<0.000000e+00> : vector<256x32xf32>
    %59 = tpu.matmul %57, %58, %cst_33 {dimension_numbers = #tpu.dot_dimension_numbers<[1], [0], [0], [1], [0, 0, 1, 1], [], []>} : vector<256x2xf32>, vector<2x32xf32>, vector<256x32xf32> -> vector<256x32xf32>
    %60 = arith.addf %36, %59 : vector<256x32xf32>
    %c0_34 = arith.constant 0 : index
    %c8_35 = arith.constant 8 : index
    %c0_36 = arith.constant 0 : index
    %61 = vector.load %arg8[%c0_34, %c8_35, %c0_36] : memref<28x26x2xf32, #tpu.memory_space<vmem>>, vector<24x16x2xf32>
    tpu.vector_store %arg8[%c0_34, %c8_35, %c0_36], %55 {strides = array<i32>} : memref<28x26x2xf32, #tpu.memory_space<vmem>>, vector<24x16x2xf32>,
    %c0_37 = arith.constant 0 : index
    %c6_38 = arith.constant 6 : index
    %c0_39 = arith.constant 0 : index
    %62 = vector.load %arg8[%c0_37, %c6_38, %c0_39] : memref<28x26x2xf32, #tpu.memory_space<vmem>>, vector<24x16x2xf32>
    %c0_40 = arith.constant 0 : index
    %c7_41 = arith.constant 7 : index
    %c0_42 = arith.constant 0 : index
    %63 = vector.load %arg8[%c0_40, %c7_41, %c0_42] : memref<28x26x2xf32, #tpu.memory_space<vmem>>, vector<24x16x2xf32>
    %64 = arith.maximumf %62, %63 : vector<24x16x2xf32>
    %c0_43 = arith.constant 0 : index
    %c8_44 = arith.constant 8 : index
    %c0_45 = arith.constant 0 : index
    %65 = vector.load %arg8[%c0_43, %c8_44, %c0_45] : memref<28x26x2xf32, #tpu.memory_space<vmem>>, vector<24x16x2xf32>
    %66 = arith.maximumf %64, %65 : vector<24x16x2xf32>
    %c0_46 = arith.constant 0 : index
    %c9_47 = arith.constant 9 : index
    %c0_48 = arith.constant 0 : index
    %67 = vector.load %arg8[%c0_46, %c9_47, %c0_48] : memref<28x26x2xf32, #tpu.memory_space<vmem>>, vector<24x16x2xf32>
    %68 = arith.maximumf %66, %67 : vector<24x16x2xf32>
    %c0_49 = arith.constant 0 : index
    %c10_50 = arith.constant 10 : index
    %c0_51 = arith.constant 0 : index
    %69 = vector.load %arg8[%c0_49, %c10_50, %c0_51] : memref<28x26x2xf32, #tpu.memory_space<vmem>>, vector<24x16x2xf32>
    %70 = arith.maximumf %68, %69 : vector<24x16x2xf32>
    %71 = vector.extract_strided_slice %70 {offsets = [0, 0, 0], sizes = [20, 16, 2], strides = [1, 1, 1]} : vector<24x16x2xf32> to vector<20x16x2xf32>
    %72 = vector.extract_strided_slice %70 {offsets = [1, 0, 0], sizes = [20, 16, 2], strides = [1, 1, 1]} : vector<24x16x2xf32> to vector<20x16x2xf32>
    %73 = arith.maximumf %71, %72 : vector<20x16x2xf32>
    %74 = vector.extract_strided_slice %70 {offsets = [2, 0, 0], sizes = [20, 16, 2], strides = [1, 1, 1]} : vector<24x16x2xf32> to vector<20x16x2xf32>
    %75 = arith.maximumf %73, %74 : vector<20x16x2xf32>
    %76 = vector.extract_strided_slice %70 {offsets = [3, 0, 0], sizes = [20, 16, 2], strides = [1, 1, 1]} : vector<24x16x2xf32> to vector<20x16x2xf32>
    %77 = arith.maximumf %75, %76 : vector<20x16x2xf32>
    %78 = vector.extract_strided_slice %70 {offsets = [4, 0, 0], sizes = [20, 16, 2], strides = [1, 1, 1]} : vector<24x16x2xf32> to vector<20x16x2xf32>
    %79 = arith.maximumf %77, %78 : vector<20x16x2xf32>
    %80 = vector.extract_strided_slice %79 {offsets = [2, 0, 0], sizes = [16, 16, 2], strides = [1, 1, 1]} : vector<20x16x2xf32> to vector<16x16x2xf32>
    %81 = vector.shape_cast %80 : vector<16x16x2xf32> to vector<256x2xf32>
    %c4 = arith.constant 4 : index
    %c0_52 = arith.constant 0 : index
    %82 = vector.load %arg5[%c4, %c0_52] : memref<8x32xf32, #tpu.memory_space<vmem>>, vector<2x32xf32>
    %cst_53 = arith.constant dense<0.000000e+00> : vector<256x32xf32>
    %83 = tpu.matmul %81, %82, %cst_53 {dimension_numbers = #tpu.dot_dimension_numbers<[1], [0], [0], [1], [0, 0, 1, 1], [], []>} : vector<256x2xf32>, vector<2x32xf32>, vector<256x32xf32> -> vector<256x32xf32>
    %84 = arith.addf %60, %83 : vector<256x32xf32>
    %c0_54 = arith.constant 0 : index
    %c8_55 = arith.constant 8 : index
    %c0_56 = arith.constant 0 : index
    %85 = vector.load %arg8[%c0_54, %c8_55, %c0_56] : memref<28x26x2xf32, #tpu.memory_space<vmem>>, vector<20x16x2xf32>
    tpu.vector_store %arg8[%c0_54, %c8_55, %c0_56], %79 {strides = array<i32>} : memref<28x26x2xf32, #tpu.memory_space<vmem>>, vector<20x16x2xf32>,
    %c0_57 = arith.constant 0 : index
    %c6_58 = arith.constant 6 : index
    %c0_59 = arith.constant 0 : index
    %86 = vector.load %arg8[%c0_57, %c6_58, %c0_59] : memref<28x26x2xf32, #tpu.memory_space<vmem>>, vector<20x16x2xf32>
    %c0_60 = arith.constant 0 : index
    %c7_61 = arith.constant 7 : index
    %c0_62 = arith.constant 0 : index
    %87 = vector.load %arg8[%c0_60, %c7_61, %c0_62] : memref<28x26x2xf32, #tpu.memory_space<vmem>>, vector<20x16x2xf32>
    %88 = arith.maximumf %86, %87 : vector<20x16x2xf32>
    %c0_63 = arith.constant 0 : index
    %c8_64 = arith.constant 8 : index
    %c0_65 = arith.constant 0 : index
    %89 = vector.load %arg8[%c0_63, %c8_64, %c0_65] : memref<28x26x2xf32, #tpu.memory_space<vmem>>, vector<20x16x2xf32>
    %90 = arith.maximumf %88, %89 : vector<20x16x2xf32>
    %c0_66 = arith.constant 0 : index
    %c9_67 = arith.constant 9 : index
    %c0_68 = arith.constant 0 : index
    %91 = vector.load %arg8[%c0_66, %c9_67, %c0_68] : memref<28x26x2xf32, #tpu.memory_space<vmem>>, vector<20x16x2xf32>
    %92 = arith.maximumf %90, %91 : vector<20x16x2xf32>
    %c0_69 = arith.constant 0 : index
    %c10_70 = arith.constant 10 : index
    %c0_71 = arith.constant 0 : index
    %93 = vector.load %arg8[%c0_69, %c10_70, %c0_71] : memref<28x26x2xf32, #tpu.memory_space<vmem>>, vector<20x16x2xf32>
    %94 = arith.maximumf %92, %93 : vector<20x16x2xf32>
    %95 = vector.extract_strided_slice %94 {offsets = [0, 0, 0], sizes = [16, 16, 2], strides = [1, 1, 1]} : vector<20x16x2xf32> to vector<16x16x2xf32>
    %96 = vector.extract_strided_slice %94 {offsets = [1, 0, 0], sizes = [16, 16, 2], strides = [1, 1, 1]} : vector<20x16x2xf32> to vector<16x16x2xf32>
    %97 = arith.maximumf %95, %96 : vector<16x16x2xf32>
    %98 = vector.extract_strided_slice %94 {offsets = [2, 0, 0], sizes = [16, 16, 2], strides = [1, 1, 1]} : vector<20x16x2xf32> to vector<16x16x2xf32>
    %99 = arith.maximumf %97, %98 : vector<16x16x2xf32>
    %100 = vector.extract_strided_slice %94 {offsets = [3, 0, 0], sizes = [16, 16, 2], strides = [1, 1, 1]} : vector<20x16x2xf32> to vector<16x16x2xf32>
    %101 = arith.maximumf %99, %100 : vector<16x16x2xf32>
    %102 = vector.extract_strided_slice %94 {offsets = [4, 0, 0], sizes = [16, 16, 2], strides = [1, 1, 1]} : vector<20x16x2xf32> to vector<16x16x2xf32>
    %103 = arith.maximumf %101, %102 : vector<16x16x2xf32>
    %104 = vector.shape_cast %103 : vector<16x16x2xf32> to vector<256x2xf32>
    %c6_72 = arith.constant 6 : index
    %c0_73 = arith.constant 0 : index
    %105 = vector.load %arg5[%c6_72, %c0_73] : memref<8x32xf32, #tpu.memory_space<vmem>>, vector<2x32xf32>
    %cst_74 = arith.constant dense<0.000000e+00> : vector<256x32xf32>
    %106 = tpu.matmul %104, %105, %cst_74 {dimension_numbers = #tpu.dot_dimension_numbers<[1], [0], [0], [1], [0, 0, 1, 1], [], []>} : vector<256x2xf32>, vector<2x32xf32>, vector<256x32xf32> -> vector<256x32xf32>
    %107 = arith.addf %84, %106 : vector<256x32xf32>
    %c0_75 = arith.constant 0 : index
    %c0_76 = arith.constant 0 : index
    %108 = vector.load %arg6[%c0_75, %c0_76] : memref<1x32xf32, #tpu.memory_space<vmem>>, vector<1x32xf32>
    %109 = vector.broadcast %108 : vector<1x32xf32> to vector<256x32xf32>
    %110 = arith.addf %107, %109 : vector<256x32xf32>
    %cst_77 = arith.constant 0.000000e+00 : f32
    %111 = vector.broadcast %cst_77 : f32 to vector<256x32xf32>
    %112 = arith.subf %111, %110 : vector<256x32xf32>
    %113 = math.exp %112 : vector<256x32xf32>
    %cst_78 = arith.constant 1.000000e+00 : f32
    %114 = vector.broadcast %cst_78 : f32 to vector<256x32xf32>
    %115 = arith.addf %114, %113 : vector<256x32xf32>
    %116 = arith.divf %110, %115 : vector<256x32xf32>
    %117 = vector.shape_cast %116 : vector<256x32xf32> to vector<16x16x32xf32>
    %c0_79 = arith.constant 0 : index
    %c0_80 = arith.constant 0 : index
    %c0_81 = arith.constant 0 : index
    %c0_82 = arith.constant 0 : index
    %118 = vector.load %arg7[%c0_79, %c0_80, %c0_81, %c0_82] : memref<1x16x16x32xf32, #tpu.memory_space<vmem>>, vector<1x16x16x32xf32>
    %119 = vector.shape_cast %118 : vector<1x16x16x32xf32> to vector<16x16x32xf32>
    %120 = vector.shape_cast %117 : vector<16x16x32xf32> to vector<1x16x16x32xf32>
    tpu.vector_store %arg7[%c0_79, %c0_80, %c0_81, %c0_82], %120 {strides = array<i32>} : memref<1x16x16x32xf32, #tpu.memory_space<vmem>>, vector<1x16x16x32xf32>,
    return
  }
  func.func @transform_0(%arg0: i32, %arg1: i32) -> (i32, i32, i32, i32) {
    %c0_i32 = arith.constant 0 : i32
    %c0_i32_0 = arith.constant 0 : i32
    %c0_i32_1 = arith.constant 0 : i32
    %c0_i32_2 = arith.constant 0 : i32
    return %arg0, %c0_i32, %c0_i32_0, %c0_i32_1 : i32, i32, i32, i32
  }
  func.func @transform_1(%arg0: i32, %arg1: i32) -> (i32, i32) {
    %c0_i32 = arith.constant 0 : i32
    %c0_i32_0 = arith.constant 0 : i32
    %c0_i32_1 = arith.constant 0 : i32
    return %c0_i32, %c0_i32_0 : i32, i32
  }
  func.func @transform_2(%arg0: i32, %arg1: i32) -> (i32, i32) {
    %c0_i32 = arith.constant 0 : i32
    %c0_i32_0 = arith.constant 0 : i32
    %c0_i32_1 = arith.constant 0 : i32
    return %c0_i32, %c0_i32_0 : i32, i32
  }
  func.func @transform_3(%arg0: i32, %arg1: i32) -> (i32, i32) {
    %c0_i32 = arith.constant 0 : i32
    %c0_i32_0 = arith.constant 0 : i32
    %c0_i32_1 = arith.constant 0 : i32
    return %c0_i32, %c0_i32_0 : i32, i32
  }
  func.func @transform_4(%arg0: i32, %arg1: i32) -> (i32, i32) {
    %c0_i32 = arith.constant 0 : i32
    %c0_i32_0 = arith.constant 0 : i32
    %c0_i32_1 = arith.constant 0 : i32
    return %c0_i32, %c0_i32_0 : i32, i32
  }
  func.func @transform_5(%arg0: i32, %arg1: i32) -> (i32, i32, i32, i32) {
    %c0_i32 = arith.constant 0 : i32
    %c0_i32_0 = arith.constant 0 : i32
    %c0_i32_1 = arith.constant 0 : i32
    return %arg0, %arg1, %c0_i32, %c0_i32_0 : i32, i32, i32, i32
  }
}

</mosaic_0001>

<llo_original>
// kernel: tpu_custom_call.1
$region0: #{tpu_custom_call.1}
  #allocation0 [shape = 'u32[]', space=smem, size = 0x4, offset = 0x4, fixed_abs, tag = 'smem constant byte address 0x4 - core index']
  #allocation1 [shape = 'u32[144,128]{1,0:T(1,128)}', space=vmem, size = 0x12000, scoped, tag = 'internal scratch']
  #allocation2 [shape = 'f32[28,26,2]{2,1,0:T(8,128)}', space=vmem, size = 0x70000, scoped, tag = 'scratch operand']
  %s0 = inlined_call_operand.vmem [shape: f32[2,28,16,4], index: 0, kind: input, shape index: {}]
  %s1 = inlined_call_operand.vmem [shape: f32[4,2], index: 1, kind: input, shape index: {}]
  %s2 = inlined_call_operand.vmem [shape: f32[1,2], index: 2, kind: input, shape index: {}]
  %s3 = inlined_call_operand.vmem [shape: f32[8,32], index: 3, kind: input, shape index: {}]
  %s4 = inlined_call_operand.vmem [shape: f32[1,32], index: 4, kind: input, shape index: {}]
  %s5 = inlined_call_operand.hbm [shape: f32[2,16,16,32], index: 5, kind: output, shape index: {}]
  %s6 = sld [smem:[#allocation0]]
  $region53: #{tpu_custom_call.1} parent=0
    _
  %s8 = ssub.s32 1, %s6
  %s9 = scalar_select 0, %s8, %s6
  $region1: #{tpu_custom_call.1} parent=0
    #allocation3 [shape = 'u8[262144]{0}', space=vmem, size = 0x40000, scoped, tag = 'output window, operand 0']
    #allocation4 [shape = 's32[2]{0}', space=sflag, size = 0x8, scoped, tag = 'scoped memory for tpu_custom_call.1']
    %10 = vsyncpa [#allocation4], 0
    %s11 = scalar_lea.sflag [#allocation4], 1
    %12 = vsyncpa %s11, 0
    loop: start=0, step=1, limit=4
    $region2: #{tpu_custom_call.1} parent=1 // loop_pre_header
      _
    $region3: #{tpu_custom_call.1} parent=1 // loop_header
      %s14 = sphi 0, %s18
      %p15 = scmp.ge.s32.totalorder %s14, 4
      %s21 = sphi 0, %s33
      %s22 = sphi 0, %s29
      %s23 = sphi 0, %s21
      %s24 = sphi 0, %s22
      %s25 = sphi 0, %s23
      %s26 = sphi 0, %s24
      %s36 = sphi 0, %s38
      %s39 = sphi 0, %s36
      %s40 = sphi 0, %s39
      %s56 = sphi 0, %s40
      %s60 = sphi 0, %s60
      %s62 = sphi 0, %s60
      %s63 = sphi 0, %s62
      %s77 = sphi 0, %s63
      %s81 = sphi 0, %s81
      %s83 = sphi 0, %s81
      %s84 = sphi 0, %s83
      %s98 = sphi 0, %s84
      %s102 = sphi 0, %s102
      %s104 = sphi 0, %s102
      %s105 = sphi 0, %s104
      %s119 = sphi 0, %s105
      %s123 = sphi 0, %s123
      %s125 = sphi 0, %s123
      %s126 = sphi 0, %s125
      %s140 = sphi 0, %s126
      %s148 = sphi 0, %s150
      %s151 = sphi 0, %s148
      %s152 = sphi 0, %s151
      %s168 = sphi 0, %s152
    $region4: #{tpu_custom_call.1} parent=1 // loop_header_branch
      %17 = sbr.rel (%p15) target = $region8
    $region5: #{tpu_custom_call.1} parent=1 // loop_body
      %s19 = ssub.s32 %s14, 1
      %s20 = ssub.s32 %s14, 2
      %s27 = sadd.s32 1, %s22
      %p28 = scmp.ge.s32.totalorder %s27, 1
      %s29 = scalar_select %p28, 0, %s27
      %s30 = sadd.s32 1, %s21
      %s31 = scalar_select %p28, %s30, %s21
      %p32 = scmp.ge.s32.totalorder %s31, 2
      %s33 = scalar_select %p32, 0, %s31
      %s34 = ssub.s32 %s21, %s33
      %p35 = scmp.eq.s32.totalorder %s34, 0
      %s37 = sadd.s32 %s36, 1
      %s38 = scalar_select %p35, %s36, %s37
      %p41 = pneg %p35
      %p42 = scmp.eq.s32.totalorder %s14, 1
      %p43 = por %p41, %p42
      %p44 = scmp.ne.s32.totalorder %s36, %s39
      %p45 = scmp.eq.s32.totalorder %s14, 0
      %p46 = por %p44, %p45
      %p47 = scmp.ne.s32.totalorder %s36, %s39
      %p48 = scmp.eq.s32.totalorder %s19, 1
      %p49 = por %p47, %p48
      %p50 = scmp.ne.s32.totalorder %s39, %s40
      %p51 = scmp.eq.s32.totalorder %s19, 0
      %p52 = por %p50, %p51
      %p53 = scmp.ne.s32.totalorder %s39, %s40
      %p54 = scmp.eq.s32.totalorder %s20, 1
      %p55 = por %p53, %p54
      %p57 = scmp.ne.s32.totalorder %s40, %s56
      %p58 = scmp.eq.s32.totalorder %s20, 0
      %p59 = por %p57, %p58
      %s61 = sadd.s32 %s60, 1
      %p64 = scmp.eq.s32.totalorder %s14, 1
      %p65 = scmp.ne.s32.totalorder %s60, %s62
      %p66 = scmp.eq.s32.totalorder %s14, 0
      %p67 = por %p65, %p66
      %p68 = scmp.ne.s32.totalorder %s60, %s62
      %p69 = scmp.eq.s32.totalorder %s19, 1
      %p70 = por %p68, %p69
      %p71 = scmp.ne.s32.totalorder %s62, %s63
      %p72 = scmp.eq.s32.totalorder %s19, 0
      %p73 = por %p71, %p72
      %p74 = scmp.ne.s32.totalorder %s62, %s63
      %p75 = scmp.eq.s32.totalorder %s20, 1
      %p76 = por %p74, %p75
      %p78 = scmp.ne.s32.totalorder %s63, %s77
      %p79 = scmp.eq.s32.totalorder %s20, 0
      %p80 = por %p78, %p79
      %s82 = sadd.s32 %s81, 1
      %p85 = scmp.eq.s32.totalorder %s14, 1
      %p86 = scmp.ne.s32.totalorder %s81, %s83
      %p87 = scmp.eq.s32.totalorder %s14, 0
      %p88 = por %p86, %p87
      %p89 = scmp.ne.s32.totalorder %s81, %s83
      %p90 = scmp.eq.s32.totalorder %s19, 1
      %p91 = por %p89, %p90
      %p92 = scmp.ne.s32.totalorder %s83, %s84
      %p93 = scmp.eq.s32.totalorder %s19, 0
      %p94 = por %p92, %p93
      %p95 = scmp.ne.s32.totalorder %s83, %s84
      %p96 = scmp.eq.s32.totalorder %s20, 1
      %p97 = por %p95, %p96
      %p99 = scmp.ne.s32.totalorder %s84, %s98
      %p100 = scmp.eq.s32.totalorder %s20, 0
      %p101 = por %p99, %p100
      %s103 = sadd.s32 %s102, 1
      %p106 = scmp.eq.s32.totalorder %s14, 1
      %p107 = scmp.ne.s32.totalorder %s102, %s104
      %p108 = scmp.eq.s32.totalorder %s14, 0
      %p109 = por %p107, %p108
      %p110 = scmp.ne.s32.totalorder %s102, %s104
      %p111 = scmp.eq.s32.totalorder %s19, 1
      %p112 = por %p110, %p111
      %p113 = scmp.ne.s32.totalorder %s104, %s105
      %p114 = scmp.eq.s32.totalorder %s19, 0
      %p115 = por %p113, %p114
      %p116 = scmp.ne.s32.totalorder %s104, %s105
      %p117 = scmp.eq.s32.totalorder %s20, 1
      %p118 = por %p116, %p117
      %p120 = scmp.ne.s32.totalorder %s105, %s119
      %p121 = scmp.eq.s32.totalorder %s20, 0
      %p122 = por %p120, %p121
      %s124 = sadd.s32 %s123, 1
      %p127 = scmp.eq.s32.totalorder %s14, 1
      %p128 = scmp.ne.s32.totalorder %s123, %s125
      %p129 = scmp.eq.s32.totalorder %s14, 0
      %p130 = por %p128, %p129
      %p131 = scmp.ne.s32.totalorder %s123, %s125
      %p132 = scmp.eq.s32.totalorder %s19, 1
      %p133 = por %p131, %p132
      %p134 = scmp.ne.s32.totalorder %s125, %s126
      %p135 = scmp.eq.s32.totalorder %s19, 0
      %p136 = por %p134, %p135
      %p137 = scmp.ne.s32.totalorder %s125, %s126
      %p138 = scmp.eq.s32.totalorder %s20, 1
      %p139 = por %p137, %p138
      %p141 = scmp.ne.s32.totalorder %s126, %s140
      %p142 = scmp.eq.s32.totalorder %s20, 0
      %p143 = por %p141, %p142
      %s144 = ssub.s32 %s21, %s33
      %s145 = ssub.s32 %s22, %s29
      %s146 = sor.u32 %s144, %s145
      %p147 = scmp.eq.s32.totalorder %s146, 0
      %s149 = sadd.s32 %s148, 1
      %s150 = scalar_select %p147, %s148, %s149
      %p153 = pneg %p147
      %p154 = scmp.eq.s32.totalorder %s14, 1
      %p155 = por %p153, %p154
      %p156 = scmp.ne.s32.totalorder %s148, %s151
      %p157 = scmp.eq.s32.totalorder %s14, 0
      %p158 = por %p156, %p157
      %p159 = scmp.ne.s32.totalorder %s148, %s151
      %p160 = scmp.eq.s32.totalorder %s19, 1
      %p161 = por %p159, %p160
      %p162 = scmp.ne.s32.totalorder %s151, %s152
      %p163 = scmp.eq.s32.totalorder %s19, 0
      %p164 = por %p162, %p163
      %p165 = scmp.ne.s32.totalorder %s151, %s152
      %p166 = scmp.eq.s32.totalorder %s20, 1
      %p167 = por %p165, %p166
      %p169 = scmp.ne.s32.totalorder %s152, %s168
      %p170 = scmp.eq.s32.totalorder %s20, 0
      %p171 = por %p169, %p170
      %p172 = scmp.le.s32.totalorder 1, %s14
      %p173 = scmp.lt.s32.totalorder %s14, 3
      %p174 = pnand %p172, %p173
      %p175 = pneg %p174
      // Predicated region
      $region9: #{tpu_custom_call.1} parent=5 // pred_check
        _
      $region10: #{tpu_custom_call.1} parent=5 // pred_check_branch
        %177 = sbr.rel (%p174) target = $region12
      $region11: #{tpu_custom_call.1} parent=5 // pred_region
        %s178 = ssub.s32 %s14, 1
        // Predicated region
        $region13: #{tpu_custom_call.1} parent=11 // pred_check
          %p179 = pneg %p73
        $region14: #{tpu_custom_call.1} parent=11 // pred_check_branch
          %181 = sbr.rel (%p179) target = $region16
        $region15: #{tpu_custom_call.1} parent=11 // pred_region
          _
        $region16: #{tpu_custom_call.1} parent=11 // pred_fallthru
          _
        // Predicated region
        $region17: #{tpu_custom_call.1} parent=11 // pred_check
          %p182 = pneg %p94
        $region18: #{tpu_custom_call.1} parent=11 // pred_check_branch
          %184 = sbr.rel (%p182) target = $region20
        $region19: #{tpu_custom_call.1} parent=11 // pred_region
          _
        $region20: #{tpu_custom_call.1} parent=11 // pred_fallthru
          _
        // Predicated region
        $region21: #{tpu_custom_call.1} parent=11 // pred_check
          %p185 = pneg %p115
        $region22: #{tpu_custom_call.1} parent=11 // pred_check_branch
          %187 = sbr.rel (%p185) target = $region24
        $region23: #{tpu_custom_call.1} parent=11 // pred_region
          _
        $region24: #{tpu_custom_call.1} parent=11 // pred_fallthru
          _
        // Predicated region
        $region25: #{tpu_custom_call.1} parent=11 // pred_check
          %p188 = pneg %p136
        $region26: #{tpu_custom_call.1} parent=11 // pred_check_branch
          %190 = sbr.rel (%p188) target = $region28
        $region27: #{tpu_custom_call.1} parent=11 // pred_region
          _
        $region28: #{tpu_custom_call.1} parent=11 // pred_fallthru
          _
      $region12: #{tpu_custom_call.1} parent=5 // pred_fallthru
        _
      %p191 = scmp.lt.s32.totalorder %s14, 2
      // Predicated region
      $region29: #{tpu_custom_call.1} parent=5 // pred_check
        %p192 = pneg %p191
      $region30: #{tpu_custom_call.1} parent=5 // pred_check_branch
        %194 = sbr.rel (%p192) target = $region32
      $region31: #{tpu_custom_call.1} parent=5 // pred_region
        // Predicated region
        $region33: #{tpu_custom_call.1} parent=31 // pred_check
          %p195 = pneg %p46
        $region34: #{tpu_custom_call.1} parent=31 // pred_check_branch
          %197 = sbr.rel (%p195) target = $region36
        $region35: #{tpu_custom_call.1} parent=31 // pred_region
          %p198 = scmp.lt.s32.totalorder %s21, 1
          %s199 = scalar_select %p198, %s21, 1
          %s200 = smul.addr %s199, 56
          %s201 = smul.addr %s200, 8
          %s202 = scalar_lea.vmem %s0, %s201
        $region36: #{tpu_custom_call.1} parent=31 // pred_fallthru
          _
      $region32: #{tpu_custom_call.1} parent=5 // pred_fallthru
        _
      %p203 = scmp.le.s32.totalorder 1, %s14
      %p204 = scmp.lt.s32.totalorder %s14, 3
      %p205 = pnand %p203, %p204
      %p206 = pneg %p205
      // Predicated region
      $region37: #{tpu_custom_call.1} parent=5 // pred_check
        _
      $region38: #{tpu_custom_call.1} parent=5 // pred_check_branch
        %208 = sbr.rel (%p205) target = $region40
      $region39: #{tpu_custom_call.1} parent=5 // pred_region
        %s209 = ssub.s32 %s14, 1
        %p210 = scmp.lt.s32.totalorder %s23, 1
        %s211 = scalar_select %p210, %s23, 1
        %s212 = smul.addr %s211, 56
        %s213 = smul.addr %s212, 8
        %s214 = scalar_lea.vmem %s0, %s213
        %p215 = pneg %p52
        %p216 = pneg %p49
        %p217 = pneg %p73
        %p218 = pneg %p70
        %p219 = pneg %p94
        %p220 = pneg %p91
        %p221 = pneg %p115
        %p222 = pneg %p112
        %p223 = pneg %p136
        %p224 = pneg %p133
        %p225 = pneg %p164
        %p226 = pneg %p161
        %s227 = sand.u32 %s151, 1
        %s228 = scalar_lea.sflag [#allocation4], %s227
        %s229 = sand.u32 %s151, 1
        %s230 = smul.addr %s229, 256
        %s231 = scalar_lea.vmem [#allocation3], %s230
        %p232 = scmp.lt.s32.totalorder %s23, 1
        %s233 = scalar_select %p232, %s23, 1
        %s234 = smul.addr %s233, 56
        %s235 = smul.addr %s234, 8
        %s236 = scalar_lea.vmem %s0, %s235
        %s237 = smul.u32 16, %s24
        %s238 = smul.u32 %s24, 16
        %vm239 = vcmask 9216
        %240 = vst.msk [vmem:[#allocation2 + $0x6] sm:$0x3] %vm239, -inf
        %241 = vst.msk [vmem:[#allocation2 + $0x26] sm:$0x3] %vm239, -inf
        %242 = vst.msk [vmem:[#allocation2 + $0x46] sm:$0x3] %vm239, -inf
        %243 = vst.msk [vmem:[#allocation2 + $0x66] sm:$0x3] %vm239, -inf
        %244 = vst.msk [vmem:[#allocation2 + $0x86] sm:$0x3] %vm239, -inf
        %245 = vst.msk [vmem:[#allocation2 + $0xa6] sm:$0x3] %vm239, -inf
        %246 = vst.msk [vmem:[#allocation2 + $0xc6] sm:$0x3] %vm239, -inf
        %247 = vst.msk [vmem:[#allocation2 + $0xe6] sm:$0x3] %vm239, -inf
        %248 = vst.msk [vmem:[#allocation2 + $0x106] sm:$0x3] %vm239, -inf
        %249 = vst.msk [vmem:[#allocation2 + $0x126] sm:$0x3] %vm239, -inf
        %250 = vst.msk [vmem:[#allocation2 + $0x146] sm:$0x3] %vm239, -inf
        %251 = vst.msk [vmem:[#allocation2 + $0x166] sm:$0x3] %vm239, -inf
        %252 = vst.msk [vmem:[#allocation2 + $0x186] sm:$0x3] %vm239, -inf
        %253 = vst.msk [vmem:[#allocation2 + $0x1a6] sm:$0x3] %vm239, -inf
        %254 = vst.msk [vmem:[#allocation2 + $0x1c6] sm:$0x3] %vm239, -inf
        %255 = vst.msk [vmem:[#allocation2 + $0x1e6] sm:$0x3] %vm239, -inf
        %256 = vst.msk [vmem:[#allocation2 + $0x206] sm:$0x3] %vm239, -inf
        %257 = vst.msk [vmem:[#allocation2 + $0x226] sm:$0x3] %vm239, -inf
        %258 = vst.msk [vmem:[#allocation2 + $0x246] sm:$0x3] %vm239, -inf
        %259 = vst.msk [vmem:[#allocation2 + $0x266] sm:$0x3] %vm239, -inf
        %260 = vst.msk [vmem:[#allocation2 + $0x286] sm:$0x3] %vm239, -inf
        %261 = vst.msk [vmem:[#allocation2 + $0x2a6] sm:$0x3] %vm239, -inf
        %262 = vst.msk [vmem:[#allocation2 + $0x2c6] sm:$0x3] %vm239, -inf
        %263 = vst.msk [vmem:[#allocation2 + $0x2e6] sm:$0x3] %vm239, -inf
        %264 = vst.msk [vmem:[#allocation2 + $0x306] sm:$0x3] %vm239, -inf
        %265 = vst.msk [vmem:[#allocation2 + $0x326] sm:$0x3] %vm239, -inf
        %266 = vst.msk [vmem:[#allocation2 + $0x346] sm:$0x3] %vm239, -inf
        %267 = vst.msk [vmem:[#allocation2 + $0x366] sm:$0x3] %vm239, -inf
        %268 = vst.msk [vmem:[#allocation2 + $0x18] sm:$0x3] %vm239, -inf
        %269 = vst.msk [vmem:[#allocation2 + $0x38] sm:$0x3] %vm239, -inf
        %270 = vst.msk [vmem:[#allocation2 + $0x58] sm:$0x3] %vm239, -inf
        %271 = vst.msk [vmem:[#allocation2 + $0x78] sm:$0x3] %vm239, -inf
        %272 = vst.msk [vmem:[#allocation2 + $0x98] sm:$0x3] %vm239, -inf
        %273 = vst.msk [vmem:[#allocation2 + $0xb8] sm:$0x3] %vm239, -inf
        %274 = vst.msk [vmem:[#allocation2 + $0xd8] sm:$0x3] %vm239, -inf
        %275 = vst.msk [vmem:[#allocation2 + $0xf8] sm:$0x3] %vm239, -inf
        %276 = vst.msk [vmem:[#allocation2 + $0x118] sm:$0x3] %vm239, -inf
        %277 = vst.msk [vmem:[#allocation2 + $0x138] sm:$0x3] %vm239, -inf
        %278 = vst.msk [vmem:[#allocation2 + $0x158] sm:$0x3] %vm239, -inf
        %279 = vst.msk [vmem:[#allocation2 + $0x178] sm:$0x3] %vm239, -inf
        %280 = vst.msk [vmem:[#allocation2 + $0x198] sm:$0x3] %vm239, -inf
        %281 = vst.msk [vmem:[#allocation2 + $0x1b8] sm:$0x3] %vm239, -inf
        %282 = vst.msk [vmem:[#allocation2 + $0x1d8] sm:$0x3] %vm239, -inf
        %283 = vst.msk [vmem:[#allocation2 + $0x1f8] sm:$0x3] %vm239, -inf
        %284 = vst.msk [vmem:[#allocation2 + $0x218] sm:$0x3] %vm239, -inf
        %285 = vst.msk [vmem:[#allocation2 + $0x238] sm:$0x3] %vm239, -inf
        %286 = vst.msk [vmem:[#allocation2 + $0x258] sm:$0x3] %vm239, -inf
        %287 = vst.msk [vmem:[#allocation2 + $0x278] sm:$0x3] %vm239, -inf
        %288 = vst.msk [vmem:[#allocation2 + $0x298] sm:$0x3] %vm239, -inf
        %289 = vst.msk [vmem:[#allocation2 + $0x2b8] sm:$0x3] %vm239, -inf
        %290 = vst.msk [vmem:[#allocation2 + $0x2d8] sm:$0x3] %vm239, -inf
        %291 = vst.msk [vmem:[#allocation2 + $0x2f8] sm:$0x3] %vm239, -inf
        %292 = vst.msk [vmem:[#allocation2 + $0x318] sm:$0x3] %vm239, -inf
        %293 = vst.msk [vmem:[#allocation2 + $0x338] sm:$0x3] %vm239, -inf
        %294 = vst.msk [vmem:[#allocation2 + $0x358] sm:$0x3] %vm239, -inf
        %295 = vst.msk [vmem:[#allocation2 + $0x378] sm:$0x3] %vm239, -inf
        %s296 = smul.u32 %s238, 16
        %s297 = scalar_lea.vmem %s236, %s296
        %v298 = vld [vmem:[%s297] sm:$0xff]
        %v299 = vld [vmem:[%s297 + $0x8] sm:$0xff]
        %v300 = vld [vmem:[%s297 + $0x10] sm:$0xff]
        %v301 = vld [vmem:[%s297 + $0x18] sm:$0xff]
        %v302 = vld [vmem:[%s297 + $0x20] sm:$0xff]
        %v303 = vld [vmem:[%s297 + $0x28] sm:$0xff]
        %v304 = vld [vmem:[%s297 + $0x30] sm:$0xff]
        %v305 = vld [vmem:[%s297 + $0x38] sm:$0xff]
        %v306 = vld [vmem:[%s297 + $0x40] sm:$0xff]
        %v307 = vld [vmem:[%s297 + $0x48] sm:$0xff]
        %v308 = vld [vmem:[%s297 + $0x50] sm:$0xff]
        %v309 = vld [vmem:[%s297 + $0x58] sm:$0xff]
        %v310 = vld [vmem:[%s297 + $0x60] sm:$0xff]
        %v311 = vld [vmem:[%s297 + $0x68] sm:$0xff]
        %v312 = vld [vmem:[%s297 + $0x70] sm:$0xff]
        %v313 = vld [vmem:[%s297 + $0x78] sm:$0xff]
        %v314 = vld [vmem:[%s297 + $0x80] sm:$0xff]
        %v315 = vld [vmem:[%s297 + $0x88] sm:$0xff]
        %v316 = vld [vmem:[%s297 + $0x90] sm:$0xff]
        %v317 = vld [vmem:[%s297 + $0x98] sm:$0xff]
        %v318 = vld [vmem:[%s297 + $0xa0] sm:$0xff]
        %v319 = vld [vmem:[%s297 + $0xa8] sm:$0xff]
        %v320 = vld [vmem:[%s297 + $0xb0] sm:$0xff]
        %v321 = vld [vmem:[%s297 + $0xb8] sm:$0xff]
        %v322 = vld [vmem:[%s297 + $0xc0] sm:$0xff]
        %v323 = vld [vmem:[%s297 + $0xc8] sm:$0xff]
        %v324 = vld [vmem:[%s297 + $0xd0] sm:$0xff]
        %v325 = vld [vmem:[%s297 + $0xd8] sm:$0xff]
        %v326 = vld [vmem:[%s297 + $0xe0] sm:$0xff]
        %v327 = vld [vmem:[%s297 + $0xe8] sm:$0xff]
        %v328 = vld [vmem:[%s297 + $0xf0] sm:$0xff]
        %v329 = vld [vmem:[%s297 + $0xf8] sm:$0xff]
        %v330 = vld [vmem:[%s297 + $0x100] sm:$0xff]
        %v331 = vld [vmem:[%s297 + $0x108] sm:$0xff]
        %v332 = vld [vmem:[%s297 + $0x110] sm:$0xff]
        %v333 = vld [vmem:[%s297 + $0x118] sm:$0xff]
        %v334 = vld [vmem:[%s297 + $0x120] sm:$0xff]
        %v335 = vld [vmem:[%s297 + $0x128] sm:$0xff]
        %v336 = vld [vmem:[%s297 + $0x130] sm:$0xff]
        %v337 = vld [vmem:[%s297 + $0x138] sm:$0xff]
        %v338 = vld [vmem:[%s297 + $0x140] sm:$0xff]
        %v339 = vld [vmem:[%s297 + $0x148] sm:$0xff]
        %v340 = vld [vmem:[%s297 + $0x150] sm:$0xff]
        %v341 = vld [vmem:[%s297 + $0x158] sm:$0xff]
        %v342 = vld [vmem:[%s297 + $0x160] sm:$0xff]
        %v343 = vld [vmem:[%s297 + $0x168] sm:$0xff]
        %v344 = vld [vmem:[%s297 + $0x170] sm:$0xff]
        %v345 = vld [vmem:[%s297 + $0x178] sm:$0xff]
        %v346 = vld [vmem:[%s297 + $0x180] sm:$0xff]
        %v347 = vld [vmem:[%s297 + $0x188] sm:$0xff]
        %v348 = vld [vmem:[%s297 + $0x190] sm:$0xff]
        %v349 = vld [vmem:[%s297 + $0x198] sm:$0xff]
        %v350 = vld [vmem:[%s297 + $0x1a0] sm:$0xff]
        %v351 = vld [vmem:[%s297 + $0x1a8] sm:$0xff]
        %v352 = vld [vmem:[%s297 + $0x1b0] sm:$0xff]
        %v353 = vld [vmem:[%s297 + $0x1b8] sm:$0xff]
        %v354 = vld [vmem:[%s1] sm:$0xf]
        %v355 = vld [vmem:[%s2] sm:$0x1]
        %v357 = vlaneseq
        %v358 = vshrl.u32 %v357, 7
        %v359 = vsub.s32 0, %v358
        %v360 = vrot.slane %v355, %v359
        %vm362 = vcmask 31744
        %v364 = vsel %vm362, %v298, 0
        %v367 = vsel %vm362, %v299, 0
        %v370 = vsel %vm362, %v300, 0
        %v373 = vsel %vm362, %v301, 0
        %v376 = vsel %vm362, %v302, 0
        %v379 = vsel %vm362, %v303, 0
        %v382 = vsel %vm362, %v304, 0
        %v385 = vsel %vm362, %v305, 0
        %v388 = vsel %vm362, %v306, 0
        %v391 = vsel %vm362, %v307, 0
        %v394 = vsel %vm362, %v308, 0
        %v397 = vsel %vm362, %v309, 0
        %v400 = vsel %vm362, %v310, 0
        %v403 = vsel %vm362, %v311, 0
        %v406 = vsel %vm362, %v312, 0
        %v409 = vsel %vm362, %v313, 0
        %v412 = vsel %vm362, %v314, 0
        %v415 = vsel %vm362, %v315, 0
        %v418 = vsel %vm362, %v316, 0
        %v421 = vsel %vm362, %v317, 0
        %v424 = vsel %vm362, %v318, 0
        %v427 = vsel %vm362, %v319, 0
        %v430 = vsel %vm362, %v320, 0
        %v433 = vsel %vm362, %v321, 0
        %v436 = vsel %vm362, %v322, 0
        %v439 = vsel %vm362, %v323, 0
        %v442 = vsel %vm362, %v324, 0
        %v445 = vsel %vm362, %v325, 0
        %v448 = vsel %vm362, %v326, 0
        %v451 = vsel %vm362, %v327, 0
        %v454 = vsel %vm362, %v328, 0
        %v457 = vsel %vm362, %v329, 0
        %v460 = vsel %vm362, %v330, 0
        %v463 = vsel %vm362, %v331, 0
        %v466 = vsel %vm362, %v332, 0
        %v469 = vsel %vm362, %v333, 0
        %v472 = vsel %vm362, %v334, 0
        %v475 = vsel %vm362, %v335, 0
        %v478 = vsel %vm362, %v336, 0
        %v481 = vsel %vm362, %v337, 0
        %v484 = vsel %vm362, %v338, 0
        %v487 = vsel %vm362, %v339, 0
        %v490 = vsel %vm362, %v340, 0
        %v493 = vsel %vm362, %v341, 0
        %v496 = vsel %vm362, %v342, 0
        %v499 = vsel %vm362, %v343, 0
        %v502 = vsel %vm362, %v344, 0
        %v505 = vsel %vm362, %v345, 0
        %v508 = vsel %vm362, %v346, 0
        %v511 = vsel %vm362, %v347, 0
        %v514 = vsel %vm362, %v348, 0
        %v517 = vsel %vm362, %v349, 0
        %v520 = vsel %vm362, %v350, 0
        %v523 = vsel %vm362, %v351, 0
        %v526 = vsel %vm362, %v352, 0
        %v529 = vsel %vm362, %v353, 0
        %vm531 = vcmask 1043456
        %v533 = vsel %vm531, %v354, 0
        %535 = vmatprep.subr.mxu0 0.0
        %536 = vmatpush1.msra.mxu0 0.0
        %537 = vmatprep.subr.mxu0 0.0
        %538 = vmatpush1.msra.mxu0 0.0
        %539 = vmatprep.subr.mxu0 0.0
        %540 = vmatpush1.msra.mxu0 0.0
        %541 = vmatprep.subr.mxu0 0.0
        %542 = vmatpush1.msra.mxu0 0.0
        %543 = vmatprep.subr.mxu0 0.0
        %544 = vmatpush1.msra.mxu0 0.0
        %545 = vmatprep.subr.mxu0 0.0
        %546 = vmatpush1.msra.mxu0 0.0
        %547 = vmatprep.subr.mxu0 0.0
        %548 = vmatpush1.msra.mxu0 0.0
        %549 = vmatprep.subr.mxu0 0.0
        %550 = vmatpush1.msra.mxu0 0.0
        %551 = vmatprep.subr.mxu0 0.0
        %552 = vmatpush1.msra.mxu0 0.0
        %553 = vmatprep.subr.mxu0 0.0
        %554 = vmatpush1.msra.mxu0 0.0
        %555 = vmatprep.subr.mxu0 0.0
        %556 = vmatpush1.msra.mxu0 0.0
        %557 = vmatprep.subr.mxu0 0.0
        %558 = vmatpush1.msra.mxu0 0.0
        %559 = vmatprep.subr.mxu0 0.0
        %560 = vmatpush1.msra.mxu0 0.0
        %561 = vmatprep.subr.mxu0 0.0
        %562 = vmatpush1.msra.mxu0 0.0
        %563 = vmatprep.subr.mxu0 0.0
        %564 = vmatpush1.msra.mxu0 0.0
        %565 = vmatprep.subr.mxu0 0.0
        %566 = vmatpush1.msra.mxu0 %v533
        %567 = vmatprep.subr.mxu0 0.0
        %568 = vmatpush2.msra.mxu0 0.0
        %569 = vmatprep.subr.mxu0 0.0
        %570 = vmatpush2.msra.mxu0 0.0
        %571 = vmatprep.subr.mxu0 0.0
        %572 = vmatpush2.msra.mxu0 0.0
        %573 = vmatprep.subr.mxu0 0.0
        %574 = vmatpush2.msra.mxu0 0.0
        %575 = vmatprep.subr.mxu0 0.0
        %576 = vmatpush2.msra.mxu0 0.0
        %577 = vmatprep.subr.mxu0 0.0
        %578 = vmatpush2.msra.mxu0 0.0
        %579 = vmatprep.subr.mxu0 0.0
        %580 = vmatpush2.msra.mxu0 0.0
        %581 = vmatprep.subr.mxu0 0.0
        %582 = vmatpush2.msra.mxu0 0.0
        %583 = vmatprep.subr.mxu0 0.0
        %584 = vmatpush2.msra.mxu0 0.0
        %585 = vmatprep.subr.mxu0 0.0
        %586 = vmatpush2.msra.mxu0 0.0
        %587 = vmatprep.subr.mxu0 0.0
        %588 = vmatpush2.msra.mxu0 0.0
        %589 = vmatprep.subr.mxu0 0.0
        %590 = vmatpush2.msra.mxu0 0.0
        %591 = vmatprep.subr.mxu0 0.0
        %592 = vmatpush2.msra.mxu0 0.0
        %593 = vmatprep.subr.mxu0 0.0
        %594 = vmatpush2.msra.mxu0 0.0
        %595 = vmatprep.subr.mxu0 0.0
        %596 = vmatpush2.msra.mxu0 0.0
        %597 = vmatprep.subr.mxu0 0.0
        %598 = vmatpush2.msra.mxu0 0.0
        %599 = vmatprep.mubr.f32.mxu0 0.0
        %600 = vmatmul.mubr.f32.gmra.mxu0 %v364
        %v601 = vpop.f32.mrf.mxu0
        %v602 = vadd.f32 %v360, %v601
        %v603 = vpop.f32.mrf.mxu0
        %604 = vmatprep.mubr.f32.mxu0 0.0
        %605 = vmatmul.mubr.f32.gmra.mxu0 %v367
        %v606 = vpop.f32.mrf.mxu0
        %v607 = vadd.f32 %v360, %v606
        %v608 = vpop.f32.mrf.mxu0
        %609 = vmatprep.mubr.f32.mxu0 0.0
        %610 = vmatmul.mubr.f32.gmra.mxu0 %v370
        %v611 = vpop.f32.mrf.mxu0
        %v612 = vadd.f32 %v360, %v611
        %v613 = vpop.f32.mrf.mxu0
        %614 = vmatprep.mubr.f32.mxu0 0.0
        %615 = vmatmul.mubr.f32.gmra.mxu0 %v373
        %v616 = vpop.f32.mrf.mxu0
        %v617 = vadd.f32 %v360, %v616
        %v618 = vpop.f32.mrf.mxu0
        %619 = vmatprep.mubr.f32.mxu0 0.0
        %620 = vmatmul.mubr.f32.gmra.mxu0 %v376
        %v621 = vpop.f32.mrf.mxu0
        %v622 = vadd.f32 %v360, %v621
        %v623 = vpop.f32.mrf.mxu0
        %624 = vmatprep.mubr.f32.mxu0 0.0
        %625 = vmatmul.mubr.f32.gmra.mxu0 %v379
        %v626 = vpop.f32.mrf.mxu0
        %v627 = vadd.f32 %v360, %v626
        %v628 = vpop.f32.mrf.mxu0
        %629 = vmatprep.mubr.f32.mxu0 0.0
        %630 = vmatmul.mubr.f32.gmra.mxu0 %v382
        %v631 = vpop.f32.mrf.mxu0
        %v632 = vadd.f32 %v360, %v631
        %v633 = vpop.f32.mrf.mxu0
        %634 = vmatprep.mubr.f32.mxu0 0.0
        %635 = vmatmul.mubr.f32.gmra.mxu0 %v385
        %v636 = vpop.f32.mrf.mxu0
        %v637 = vadd.f32 %v360, %v636
        %v638 = vpop.f32.mrf.mxu0
        %639 = vmatprep.mubr.f32.mxu0 0.0
        %640 = vmatmul.mubr.f32.gmra.mxu0 %v388
        %v641 = vpop.f32.mrf.mxu0
        %v642 = vadd.f32 %v360, %v641
        %v643 = vpop.f32.mrf.mxu0
        %644 = vmatprep.mubr.f32.mxu0 0.0
        %645 = vmatmul.mubr.f32.gmra.mxu0 %v391
        %v646 = vpop.f32.mrf.mxu0
        %v647 = vadd.f32 %v360, %v646
        %v648 = vpop.f32.mrf.mxu0
        %649 = vmatprep.mubr.f32.mxu0 0.0
        %650 = vmatmul.mubr.f32.gmra.mxu0 %v394
        %v651 = vpop.f32.mrf.mxu0
        %v652 = vadd.f32 %v360, %v651
        %v653 = vpop.f32.mrf.mxu0
        %654 = vmatprep.mubr.f32.mxu0 0.0
        %655 = vmatmul.mubr.f32.gmra.mxu0 %v397
        %v656 = vpop.f32.mrf.mxu0
        %v657 = vadd.f32 %v360, %v656
        %v658 = vpop.f32.mrf.mxu0
        %659 = vmatprep.mubr.f32.mxu0 0.0
        %660 = vmatmul.mubr.f32.gmra.mxu0 %v400
        %v661 = vpop.f32.mrf.mxu0
        %v662 = vadd.f32 %v360, %v661
        %v663 = vpop.f32.mrf.mxu0
        %664 = vmatprep.mubr.f32.mxu0 0.0
        %665 = vmatmul.mubr.f32.gmra.mxu0 %v403
        %v666 = vpop.f32.mrf.mxu0
        %v667 = vadd.f32 %v360, %v666
        %v668 = vpop.f32.mrf.mxu0
        %669 = vmatprep.mubr.f32.mxu0 0.0
        %670 = vmatmul.mubr.f32.gmra.mxu0 %v406
        %v671 = vpop.f32.mrf.mxu0
        %v672 = vadd.f32 %v360, %v671
        %v673 = vpop.f32.mrf.mxu0
        %674 = vmatprep.mubr.f32.mxu0 0.0
        %675 = vmatmul.mubr.f32.gmra.mxu0 %v409
        %v676 = vpop.f32.mrf.mxu0
        %v677 = vadd.f32 %v360, %v676
        %v678 = vpop.f32.mrf.mxu0
        %679 = vmatprep.mubr.f32.mxu0 0.0
        %680 = vmatmul.mubr.f32.gmra.mxu0 %v412
        %v681 = vpop.f32.mrf.mxu0
        %v682 = vadd.f32 %v360, %v681
        %v683 = vpop.f32.mrf.mxu0
        %684 = vmatprep.mubr.f32.mxu0 0.0
        %685 = vmatmul.mubr.f32.gmra.mxu0 %v415
        %v686 = vpop.f32.mrf.mxu0
        %v687 = vadd.f32 %v360, %v686
        %v688 = vpop.f32.mrf.mxu0
        %689 = vmatprep.mubr.f32.mxu0 0.0
        %690 = vmatmul.mubr.f32.gmra.mxu0 %v418
        %v691 = vpop.f32.mrf.mxu0
        %v692 = vadd.f32 %v360, %v691
        %v693 = vpop.f32.mrf.mxu0
        %694 = vmatprep.mubr.f32.mxu0 0.0
        %695 = vmatmul.mubr.f32.gmra.mxu0 %v421
        %v696 = vpop.f32.mrf.mxu0
        %v697 = vadd.f32 %v360, %v696
        %v698 = vpop.f32.mrf.mxu0
        %699 = vmatprep.mubr.f32.mxu0 0.0
        %700 = vmatmul.mubr.f32.gmra.mxu0 %v424
        %v701 = vpop.f32.mrf.mxu0
        %v702 = vadd.f32 %v360, %v701
        %v703 = vpop.f32.mrf.mxu0
        %704 = vmatprep.mubr.f32.mxu0 0.0
        %705 = vmatmul.mubr.f32.gmra.mxu0 %v427
        %v706 = vpop.f32.mrf.mxu0
        %v707 = vadd.f32 %v360, %v706
        %v708 = vpop.f32.mrf.mxu0
        %709 = vmatprep.mubr.f32.mxu0 0.0
        %710 = vmatmul.mubr.f32.gmra.mxu0 %v430
        %v711 = vpop.f32.mrf.mxu0
        %v712 = vadd.f32 %v360, %v711
        %v713 = vpop.f32.mrf.mxu0
        %714 = vmatprep.mubr.f32.mxu0 0.0
        %715 = vmatmul.mubr.f32.gmra.mxu0 %v433
        %v716 = vpop.f32.mrf.mxu0
        %v717 = vadd.f32 %v360, %v716
        %v718 = vpop.f32.mrf.mxu0
        %719 = vmatprep.mubr.f32.mxu0 0.0
        %720 = vmatmul.mubr.f32.gmra.mxu0 %v436
        %v721 = vpop.f32.mrf.mxu0
        %v722 = vadd.f32 %v360, %v721
        %v723 = vpop.f32.mrf.mxu0
        %724 = vmatprep.mubr.f32.mxu0 0.0
        %725 = vmatmul.mubr.f32.gmra.mxu0 %v439
        %v726 = vpop.f32.mrf.mxu0
        %v727 = vadd.f32 %v360, %v726
        %v728 = vpop.f32.mrf.mxu0
        %729 = vmatprep.mubr.f32.mxu0 0.0
        %730 = vmatmul.mubr.f32.gmra.mxu0 %v442
        %v731 = vpop.f32.mrf.mxu0
        %v732 = vadd.f32 %v360, %v731
        %v733 = vpop.f32.mrf.mxu0
        %734 = vmatprep.mubr.f32.mxu0 0.0
        %735 = vmatmul.mubr.f32.gmra.mxu0 %v445
        %v736 = vpop.f32.mrf.mxu0
        %v737 = vadd.f32 %v360, %v736
        %v738 = vpop.f32.mrf.mxu0
        %739 = vmatprep.mubr.f32.mxu0 0.0
        %740 = vmatmul.mubr.f32.gmra.mxu0 %v448
        %v741 = vpop.f32.mrf.mxu0
        %v742 = vadd.f32 %v360, %v741
        %v743 = vpop.f32.mrf.mxu0
        %744 = vmatprep.mubr.f32.mxu0 0.0
        %745 = vmatmul.mubr.f32.gmra.mxu0 %v451
        %v746 = vpop.f32.mrf.mxu0
        %v747 = vadd.f32 %v360, %v746
        %v748 = vpop.f32.mrf.mxu0
        %749 = vmatprep.mubr.f32.mxu0 0.0
        %750 = vmatmul.mubr.f32.gmra.mxu0 %v454
        %v751 = vpop.f32.mrf.mxu0
        %v752 = vadd.f32 %v360, %v751
        %v753 = vpop.f32.mrf.mxu0
        %754 = vmatprep.mubr.f32.mxu0 0.0
        %755 = vmatmul.mubr.f32.gmra.mxu0 %v457
        %v756 = vpop.f32.mrf.mxu0
        %v757 = vadd.f32 %v360, %v756
        %v758 = vpop.f32.mrf.mxu0
        %759 = vmatprep.mubr.f32.mxu0 0.0
        %760 = vmatmul.mubr.f32.gmra.mxu0 %v460
        %v761 = vpop.f32.mrf.mxu0
        %v762 = vadd.f32 %v360, %v761
        %v763 = vpop.f32.mrf.mxu0
        %764 = vmatprep.mubr.f32.mxu0 0.0
        %765 = vmatmul.mubr.f32.gmra.mxu0 %v463
        %v766 = vpop.f32.mrf.mxu0
        %v767 = vadd.f32 %v360, %v766
        %v768 = vpop.f32.mrf.mxu0
        %769 = vmatprep.mubr.f32.mxu0 0.0
        %770 = vmatmul.mubr.f32.gmra.mxu0 %v466
        %v771 = vpop.f32.mrf.mxu0
        %v772 = vadd.f32 %v360, %v771
        %v773 = vpop.f32.mrf.mxu0
        %774 = vmatprep.mubr.f32.mxu0 0.0
        %775 = vmatmul.mubr.f32.gmra.mxu0 %v469
        %v776 = vpop.f32.mrf.mxu0
        %v777 = vadd.f32 %v360, %v776
        %v778 = vpop.f32.mrf.mxu0
        %779 = vmatprep.mubr.f32.mxu0 0.0
        %780 = vmatmul.mubr.f32.gmra.mxu0 %v472
        %v781 = vpop.f32.mrf.mxu0
        %v782 = vadd.f32 %v360, %v781
        %v783 = vpop.f32.mrf.mxu0
        %784 = vmatprep.mubr.f32.mxu0 0.0
        %785 = vmatmul.mubr.f32.gmra.mxu0 %v475
        %v786 = vpop.f32.mrf.mxu0
        %v787 = vadd.f32 %v360, %v786
        %v788 = vpop.f32.mrf.mxu0
        %789 = vmatprep.mubr.f32.mxu0 0.0
        %790 = vmatmul.mubr.f32.gmra.mxu0 %v478
        %v791 = vpop.f32.mrf.mxu0
        %v792 = vadd.f32 %v360, %v791
        %v793 = vpop.f32.mrf.mxu0
        %794 = vmatprep.mubr.f32.mxu0 0.0
        %795 = vmatmul.mubr.f32.gmra.mxu0 %v481
        %v796 = vpop.f32.mrf.mxu0
        %v797 = vadd.f32 %v360, %v796
        %v798 = vpop.f32.mrf.mxu0
        %799 = vmatprep.mubr.f32.mxu0 0.0
        %800 = vmatmul.mubr.f32.gmra.mxu0 %v484
        %v801 = vpop.f32.mrf.mxu0
        %v802 = vadd.f32 %v360, %v801
        %v803 = vpop.f32.mrf.mxu0
        %804 = vmatprep.mubr.f32.mxu0 0.0
        %805 = vmatmul.mubr.f32.gmra.mxu0 %v487
        %v806 = vpop.f32.mrf.mxu0
        %v807 = vadd.f32 %v360, %v806
        %v808 = vpop.f32.mrf.mxu0
        %809 = vmatprep.mubr.f32.mxu0 0.0
        %810 = vmatmul.mubr.f32.gmra.mxu0 %v490
        %v811 = vpop.f32.mrf.mxu0
        %v812 = vadd.f32 %v360, %v811
        %v813 = vpop.f32.mrf.mxu0
        %814 = vmatprep.mubr.f32.mxu0 0.0
        %815 = vmatmul.mubr.f32.gmra.mxu0 %v493
        %v816 = vpop.f32.mrf.mxu0
        %v817 = vadd.f32 %v360, %v816
        %v818 = vpop.f32.mrf.mxu0
        %819 = vmatprep.mubr.f32.mxu0 0.0
        %820 = vmatmul.mubr.f32.gmra.mxu0 %v496
        %v821 = vpop.f32.mrf.mxu0
        %v822 = vadd.f32 %v360, %v821
        %v823 = vpop.f32.mrf.mxu0
        %824 = vmatprep.mubr.f32.mxu0 0.0
        %825 = vmatmul.mubr.f32.gmra.mxu0 %v499
        %v826 = vpop.f32.mrf.mxu0
        %v827 = vadd.f32 %v360, %v826
        %v828 = vpop.f32.mrf.mxu0
        %829 = vmatprep.mubr.f32.mxu0 0.0
        %830 = vmatmul.mubr.f32.gmra.mxu0 %v502
        %v831 = vpop.f32.mrf.mxu0
        %v832 = vadd.f32 %v360, %v831
        %v833 = vpop.f32.mrf.mxu0
        %834 = vmatprep.mubr.f32.mxu0 0.0
        %835 = vmatmul.mubr.f32.gmra.mxu0 %v505
        %v836 = vpop.f32.mrf.mxu0
        %v837 = vadd.f32 %v360, %v836
        %v838 = vpop.f32.mrf.mxu0
        %839 = vmatprep.mubr.f32.mxu0 0.0
        %840 = vmatmul.mubr.f32.gmra.mxu0 %v508
        %v841 = vpop.f32.mrf.mxu0
        %v842 = vadd.f32 %v360, %v841
        %v843 = vpop.f32.mrf.mxu0
        %844 = vmatprep.mubr.f32.mxu0 0.0
        %845 = vmatmul.mubr.f32.gmra.mxu0 %v511
        %v846 = vpop.f32.mrf.mxu0
        %v847 = vadd.f32 %v360, %v846
        %v848 = vpop.f32.mrf.mxu0
        %849 = vmatprep.mubr.f32.mxu0 0.0
        %850 = vmatmul.mubr.f32.gmra.mxu0 %v514
        %v851 = vpop.f32.mrf.mxu0
        %v852 = vadd.f32 %v360, %v851
        %v853 = vpop.f32.mrf.mxu0
        %854 = vmatprep.mubr.f32.mxu0 0.0
        %855 = vmatmul.mubr.f32.gmra.mxu0 %v517
        %v856 = vpop.f32.mrf.mxu0
        %v857 = vadd.f32 %v360, %v856
        %v858 = vpop.f32.mrf.mxu0
        %859 = vmatprep.mubr.f32.mxu0 0.0
        %860 = vmatmul.mubr.f32.gmra.mxu0 %v520
        %v861 = vpop.f32.mrf.mxu0
        %v862 = vadd.f32 %v360, %v861
        %v863 = vpop.f32.mrf.mxu0
        %864 = vmatprep.mubr.f32.mxu0 0.0
        %865 = vmatmul.mubr.f32.gmra.mxu0 %v523
        %v866 = vpop.f32.mrf.mxu0
        %v867 = vadd.f32 %v360, %v866
        %v868 = vpop.f32.mrf.mxu0
        %869 = vmatprep.mubr.f32.mxu0 0.0
        %870 = vmatmul.mubr.f32.gmra.mxu0 %v526
        %v871 = vpop.f32.mrf.mxu0
        %v872 = vadd.f32 %v360, %v871
        %v873 = vpop.f32.mrf.mxu0
        %874 = vmatprep.mubr.f32.mxu0 0.0
        %875 = vmatmul.mubr.f32.gmra.mxu0 %v529
        %v876 = vpop.f32.mrf.mxu0
        %v877 = vadd.f32 %v360, %v876
        %v878 = vpop.f32.mrf.mxu0
        %879 = vdwg.mxu0
        %v880 = vsub.f32 0.0, %v602
        %v881 = vsub.f32 0.0, %v607
        %v882 = vsub.f32 0.0, %v612
        %v883 = vsub.f32 0.0, %v617
        %v884 = vsub.f32 0.0, %v622
        %v885 = vsub.f32 0.0, %v627
        %v886 = vsub.f32 0.0, %v632
        %v887 = vsub.f32 0.0, %v637
        %v888 = vsub.f32 0.0, %v642
        %v889 = vsub.f32 0.0, %v647
        %v890 = vsub.f32 0.0, %v652
        %v891 = vsub.f32 0.0, %v657
        %v892 = vsub.f32 0.0, %v662
        %v893 = vsub.f32 0.0, %v667
        %v894 = vsub.f32 0.0, %v672
        %v895 = vsub.f32 0.0, %v677
        %v896 = vsub.f32 0.0, %v682
        %v897 = vsub.f32 0.0, %v687
        %v898 = vsub.f32 0.0, %v692
        %v899 = vsub.f32 0.0, %v697
        %v900 = vsub.f32 0.0, %v702
        %v901 = vsub.f32 0.0, %v707
        %v902 = vsub.f32 0.0, %v712
        %v903 = vsub.f32 0.0, %v717
        %v904 = vsub.f32 0.0, %v722
        %v905 = vsub.f32 0.0, %v727
        %v906 = vsub.f32 0.0, %v732
        %v907 = vsub.f32 0.0, %v737
        %v908 = vsub.f32 0.0, %v742
        %v909 = vsub.f32 0.0, %v747
        %v910 = vsub.f32 0.0, %v752
        %v911 = vsub.f32 0.0, %v757
        %v912 = vsub.f32 0.0, %v762
        %v913 = vsub.f32 0.0, %v767
        %v914 = vsub.f32 0.0, %v772
        %v915 = vsub.f32 0.0, %v777
        %v916 = vsub.f32 0.0, %v782
        %v917 = vsub.f32 0.0, %v787
        %v918 = vsub.f32 0.0, %v792
        %v919 = vsub.f32 0.0, %v797
        %v920 = vsub.f32 0.0, %v802
        %v921 = vsub.f32 0.0, %v807
        %v922 = vsub.f32 0.0, %v812
        %v923 = vsub.f32 0.0, %v817
        %v924 = vsub.f32 0.0, %v822
        %v925 = vsub.f32 0.0, %v827
        %v926 = vsub.f32 0.0, %v832
        %v927 = vsub.f32 0.0, %v837
        %v928 = vsub.f32 0.0, %v842
        %v929 = vsub.f32 0.0, %v847
        %v930 = vsub.f32 0.0, %v852
        %v931 = vsub.f32 0.0, %v857
        %v932 = vsub.f32 0.0, %v862
        %v933 = vsub.f32 0.0, %v867
        %v934 = vsub.f32 0.0, %v872
        %v935 = vsub.f32 0.0, %v877
        %v936 = vmul.f32 %v880, 1.442695
        %v937 = vpow.pop %v936
        %v938 = vmul.f32 %v881, 1.442695
        %v939 = vpow.pop %v938
        %v940 = vmul.f32 %v882, 1.442695
        %v941 = vpow.pop %v940
        %v942 = vmul.f32 %v883, 1.442695
        %v943 = vpow.pop %v942
        %v944 = vmul.f32 %v884, 1.442695
        %v945 = vpow.pop %v944
        %v946 = vmul.f32 %v885, 1.442695
        %v947 = vpow.pop %v946
        %v948 = vmul.f32 %v886, 1.442695
        %v949 = vpow.pop %v948
        %v950 = vmul.f32 %v887, 1.442695
        %v951 = vpow.pop %v950
        %v952 = vmul.f32 %v888, 1.442695
        %v953 = vpow.pop %v952
        %v954 = vmul.f32 %v889, 1.442695
        %v955 = vpow.pop %v954
        %v956 = vmul.f32 %v890, 1.442695
        %v957 = vpow.pop %v956
        %v958 = vmul.f32 %v891, 1.442695
        %v959 = vpow.pop %v958
        %v960 = vmul.f32 %v892, 1.442695
        %v961 = vpow.pop %v960
        %v962 = vmul.f32 %v893, 1.442695
        %v963 = vpow.pop %v962
        %v964 = vmul.f32 %v894, 1.442695
        %v965 = vpow.pop %v964
        %v966 = vmul.f32 %v895, 1.442695
        %v967 = vpow.pop %v966
        %v968 = vmul.f32 %v896, 1.442695
        %v969 = vpow.pop %v968
        %v970 = vmul.f32 %v897, 1.442695
        %v971 = vpow.pop %v970
        %v972 = vmul.f32 %v898, 1.442695
        %v973 = vpow.pop %v972
        %v974 = vmul.f32 %v899, 1.442695
        %v975 = vpow.pop %v974
        %v976 = vmul.f32 %v900, 1.442695
        %v977 = vpow.pop %v976
        %v978 = vmul.f32 %v901, 1.442695
        %v979 = vpow.pop %v978
        %v980 = vmul.f32 %v902, 1.442695
        %v981 = vpow.pop %v980
        %v982 = vmul.f32 %v903, 1.442695
        %v983 = vpow.pop %v982
        %v984 = vmul.f32 %v904, 1.442695
        %v985 = vpow.pop %v984
        %v986 = vmul.f32 %v905, 1.442695
        %v987 = vpow.pop %v986
        %v988 = vmul.f32 %v906, 1.442695
        %v989 = vpow.pop %v988
        %v990 = vmul.f32 %v907, 1.442695
        %v991 = vpow.pop %v990
        %v992 = vmul.f32 %v908, 1.442695
        %v993 = vpow.pop %v992
        %v994 = vmul.f32 %v909, 1.442695
        %v995 = vpow.pop %v994
        %v996 = vmul.f32 %v910, 1.442695
        %v997 = vpow.pop %v996
        %v998 = vmul.f32 %v911, 1.442695
        %v999 = vpow.pop %v998
        %v1000 = vmul.f32 %v912, 1.442695
        %v1001 = vpow.pop %v1000
        %v1002 = vmul.f32 %v913, 1.442695
        %v1003 = vpow.pop %v1002
        %v1004 = vmul.f32 %v914, 1.442695
        %v1005 = vpow.pop %v1004
        %v1006 = vmul.f32 %v915, 1.442695
        %v1007 = vpow.pop %v1006
        %v1008 = vmul.f32 %v916, 1.442695
        %v1009 = vpow.pop %v1008
        %v1010 = vmul.f32 %v917, 1.442695
        %v1011 = vpow.pop %v1010
        %v1012 = vmul.f32 %v918, 1.442695
        %v1013 = vpow.pop %v1012
        %v1014 = vmul.f32 %v919, 1.442695
        %v1015 = vpow.pop %v1014
        %v1016 = vmul.f32 %v920, 1.442695
        %v1017 = vpow.pop %v1016
        %v1018 = vmul.f32 %v921, 1.442695
        %v1019 = vpow.pop %v1018
        %v1020 = vmul.f32 %v922, 1.442695
        %v1021 = vpow.pop %v1020
        %v1022 = vmul.f32 %v923, 1.442695
        %v1023 = vpow.pop %v1022
        %v1024 = vmul.f32 %v924, 1.442695
        %v1025 = vpow.pop %v1024
        %v1026 = vmul.f32 %v925, 1.442695
        %v1027 = vpow.pop %v1026
        %v1028 = vmul.f32 %v926, 1.442695
        %v1029 = vpow.pop %v1028
        %v1030 = vmul.f32 %v927, 1.442695
        %v1031 = vpow.pop %v1030
        %v1032 = vmul.f32 %v928, 1.442695
        %v1033 = vpow.pop %v1032
        %v1034 = vmul.f32 %v929, 1.442695
        %v1035 = vpow.pop %v1034
        %v1036 = vmul.f32 %v930, 1.442695
        %v1037 = vpow.pop %v1036
        %v1038 = vmul.f32 %v931, 1.442695
        %v1039 = vpow.pop %v1038
        %v1040 = vmul.f32 %v932, 1.442695
        %v1041 = vpow.pop %v1040
        %v1042 = vmul.f32 %v933, 1.442695
        %v1043 = vpow.pop %v1042
        %v1044 = vmul.f32 %v934, 1.442695
        %v1045 = vpow.pop %v1044
        %v1046 = vmul.f32 %v935, 1.442695
        %v1047 = vpow.pop %v1046
        %v1048 = vadd.f32 %v937, 1.0
        %v1049 = vadd.f32 %v939, 1.0
        %v1050 = vadd.f32 %v941, 1.0
        %v1051 = vadd.f32 %v943, 1.0
        %v1052 = vadd.f32 %v945, 1.0
        %v1053 = vadd.f32 %v947, 1.0
        %v1054 = vadd.f32 %v949, 1.0
        %v1055 = vadd.f32 %v951, 1.0
        %v1056 = vadd.f32 %v953, 1.0
        %v1057 = vadd.f32 %v955, 1.0
        %v1058 = vadd.f32 %v957, 1.0
        %v1059 = vadd.f32 %v959, 1.0
        %v1060 = vadd.f32 %v961, 1.0
        %v1061 = vadd.f32 %v963, 1.0
        %v1062 = vadd.f32 %v965, 1.0
        %v1063 = vadd.f32 %v967, 1.0
        %v1064 = vadd.f32 %v969, 1.0
        %v1065 = vadd.f32 %v971, 1.0
        %v1066 = vadd.f32 %v973, 1.0
        %v1067 = vadd.f32 %v975, 1.0
        %v1068 = vadd.f32 %v977, 1.0
        %v1069 = vadd.f32 %v979, 1.0
        %v1070 = vadd.f32 %v981, 1.0
        %v1071 = vadd.f32 %v983, 1.0
        %v1072 = vadd.f32 %v985, 1.0
        %v1073 = vadd.f32 %v987, 1.0
        %v1074 = vadd.f32 %v989, 1.0
        %v1075 = vadd.f32 %v991, 1.0
        %v1076 = vadd.f32 %v993, 1.0
        %v1077 = vadd.f32 %v995, 1.0
        %v1078 = vadd.f32 %v997, 1.0
        %v1079 = vadd.f32 %v999, 1.0
        %v1080 = vadd.f32 %v1001, 1.0
        %v1081 = vadd.f32 %v1003, 1.0
        %v1082 = vadd.f32 %v1005, 1.0
        %v1083 = vadd.f32 %v1007, 1.0
        %v1084 = vadd.f32 %v1009, 1.0
        %v1085 = vadd.f32 %v1011, 1.0
        %v1086 = vadd.f32 %v1013, 1.0
        %v1087 = vadd.f32 %v1015, 1.0
        %v1088 = vadd.f32 %v1017, 1.0
        %v1089 = vadd.f32 %v1019, 1.0
        %v1090 = vadd.f32 %v1021, 1.0
        %v1091 = vadd.f32 %v1023, 1.0
        %v1092 = vadd.f32 %v1025, 1.0
        %v1093 = vadd.f32 %v1027, 1.0
        %v1094 = vadd.f32 %v1029, 1.0
        %v1095 = vadd.f32 %v1031, 1.0
        %v1096 = vadd.f32 %v1033, 1.0
        %v1097 = vadd.f32 %v1035, 1.0
        %v1098 = vadd.f32 %v1037, 1.0
        %v1099 = vadd.f32 %v1039, 1.0
        %v1100 = vadd.f32 %v1041, 1.0
        %v1101 = vadd.f32 %v1043, 1.0
        %v1102 = vadd.f32 %v1045, 1.0
        %v1103 = vadd.f32 %v1047, 1.0
        %v1104 = vrcp.pop %v1048
        %v1105 = vmul.f32 %v602, %v1104
        %v1106 = vrcp.pop %v1049
        %v1107 = vmul.f32 %v607, %v1106
        %v1108 = vrcp.pop %v1050
        %v1109 = vmul.f32 %v612, %v1108
        %v1110 = vrcp.pop %v1051
        %v1111 = vmul.f32 %v617, %v1110
        %v1112 = vrcp.pop %v1052
        %v1113 = vmul.f32 %v622, %v1112
        %v1114 = vrcp.pop %v1053
        %v1115 = vmul.f32 %v627, %v1114
        %v1116 = vrcp.pop %v1054
        %v1117 = vmul.f32 %v632, %v1116
        %v1118 = vrcp.pop %v1055
        %v1119 = vmul.f32 %v637, %v1118
        %v1120 = vrcp.pop %v1056
        %v1121 = vmul.f32 %v642, %v1120
        %v1122 = vrcp.pop %v1057
        %v1123 = vmul.f32 %v647, %v1122
        %v1124 = vrcp.pop %v1058
        %v1125 = vmul.f32 %v652, %v1124
        %v1126 = vrcp.pop %v1059
        %v1127 = vmul.f32 %v657, %v1126
        %v1128 = vrcp.pop %v1060
        %v1129 = vmul.f32 %v662, %v1128
        %v1130 = vrcp.pop %v1061
        %v1131 = vmul.f32 %v667, %v1130
        %v1132 = vrcp.pop %v1062
        %v1133 = vmul.f32 %v672, %v1132
        %v1134 = vrcp.pop %v1063
        %v1135 = vmul.f32 %v677, %v1134
        %v1136 = vrcp.pop %v1064
        %v1137 = vmul.f32 %v682, %v1136
        %v1138 = vrcp.pop %v1065
        %v1139 = vmul.f32 %v687, %v1138
        %v1140 = vrcp.pop %v1066
        %v1141 = vmul.f32 %v692, %v1140
        %v1142 = vrcp.pop %v1067
        %v1143 = vmul.f32 %v697, %v1142
        %v1144 = vrcp.pop %v1068
        %v1145 = vmul.f32 %v702, %v1144
        %v1146 = vrcp.pop %v1069
        %v1147 = vmul.f32 %v707, %v1146
        %v1148 = vrcp.pop %v1070
        %v1149 = vmul.f32 %v712, %v1148
        %v1150 = vrcp.pop %v1071
        %v1151 = vmul.f32 %v717, %v1150
        %v1152 = vrcp.pop %v1072
        %v1153 = vmul.f32 %v722, %v1152
        %v1154 = vrcp.pop %v1073
        %v1155 = vmul.f32 %v727, %v1154
        %v1156 = vrcp.pop %v1074
        %v1157 = vmul.f32 %v732, %v1156
        %v1158 = vrcp.pop %v1075
        %v1159 = vmul.f32 %v737, %v1158
        %v1160 = vrcp.pop %v1076
        %v1161 = vmul.f32 %v742, %v1160
        %v1162 = vrcp.pop %v1077
        %v1163 = vmul.f32 %v747, %v1162
        %v1164 = vrcp.pop %v1078
        %v1165 = vmul.f32 %v752, %v1164
        %v1166 = vrcp.pop %v1079
        %v1167 = vmul.f32 %v757, %v1166
        %v1168 = vrcp.pop %v1080
        %v1169 = vmul.f32 %v762, %v1168
        %v1170 = vrcp.pop %v1081
        %v1171 = vmul.f32 %v767, %v1170
        %v1172 = vrcp.pop %v1082
        %v1173 = vmul.f32 %v772, %v1172
        %v1174 = vrcp.pop %v1083
        %v1175 = vmul.f32 %v777, %v1174
        %v1176 = vrcp.pop %v1084
        %v1177 = vmul.f32 %v782, %v1176
        %v1178 = vrcp.pop %v1085
        %v1179 = vmul.f32 %v787, %v1178
        %v1180 = vrcp.pop %v1086
        %v1181 = vmul.f32 %v792, %v1180
        %v1182 = vrcp.pop %v1087
        %v1183 = vmul.f32 %v797, %v1182
        %v1184 = vrcp.pop %v1088
        %v1185 = vmul.f32 %v802, %v1184
        %v1186 = vrcp.pop %v1089
        %v1187 = vmul.f32 %v807, %v1186
        %v1188 = vrcp.pop %v1090
        %v1189 = vmul.f32 %v812, %v1188
        %v1190 = vrcp.pop %v1091
        %v1191 = vmul.f32 %v817, %v1190
        %v1192 = vrcp.pop %v1092
        %v1193 = vmul.f32 %v822, %v1192
        %v1194 = vrcp.pop %v1093
        %v1195 = vmul.f32 %v827, %v1194
        %v1196 = vrcp.pop %v1094
        %v1197 = vmul.f32 %v832, %v1196
        %v1198 = vrcp.pop %v1095
        %v1199 = vmul.f32 %v837, %v1198
        %v1200 = vrcp.pop %v1096
        %v1201 = vmul.f32 %v842, %v1200
        %v1202 = vrcp.pop %v1097
        %v1203 = vmul.f32 %v847, %v1202
        %v1204 = vrcp.pop %v1098
        %v1205 = vmul.f32 %v852, %v1204
        %v1206 = vrcp.pop %v1099
        %v1207 = vmul.f32 %v857, %v1206
        %v1208 = vrcp.pop %v1100
        %v1209 = vmul.f32 %v862, %v1208
        %v1210 = vrcp.pop %v1101
        %v1211 = vmul.f32 %v867, %v1210
        %v1212 = vrcp.pop %v1102
        %v1213 = vmul.f32 %v872, %v1212
        %v1214 = vrcp.pop %v1103
        %v1215 = vmul.f32 %v877, %v1214
        %s1216 = ssub.s32 %s238, 6
        %v1217 = vstv %s1216
        %v1218 = vadd.s32 %v1217, 1
        %v1219 = vadd.s32 %v1217, 2
        %v1220 = vadd.s32 %v1217, 3
        %v1221 = vadd.s32 %v1217, 4
        %v1222 = vadd.s32 %v1217, 5
        %v1223 = vadd.s32 %v1217, 6
        %v1224 = vadd.s32 %v1217, 7
        %v1225 = vadd.s32 %v1217, 8
        %v1226 = vadd.s32 %v1217, 9
        %v1227 = vadd.s32 %v1217, 10
        %v1228 = vadd.s32 %v1217, 11
        %v1229 = vadd.s32 %v1217, 12
        %v1230 = vadd.s32 %v1217, 13
        %v1231 = vadd.s32 %v1217, 14
        %v1232 = vadd.s32 %v1217, 15
        %v1233 = vadd.s32 %v1217, 16
        %v1234 = vadd.s32 %v1217, 17
        %v1235 = vadd.s32 %v1217, 18
        %v1236 = vadd.s32 %v1217, 19
        %v1237 = vadd.s32 %v1217, 20
        %v1238 = vadd.s32 %v1217, 21
        %v1239 = vadd.s32 %v1217, 22
        %v1240 = vadd.s32 %v1217, 23
        %v1241 = vadd.s32 %v1217, 24
        %v1242 = vadd.s32 %v1217, 25
        %v1243 = vadd.s32 %v1217, 26
        %v1244 = vadd.s32 %v1217, 27
        %vm1245 = vcmp.ge.s32.totalorder %v1217, 0
        %vm1246 = vcmp.ge.s32.totalorder %v1218, 0
        %vm1247 = vcmp.ge.s32.totalorder %v1219, 0
        %vm1248 = vcmp.ge.s32.totalorder %v1220, 0
        %vm1249 = vcmp.ge.s32.totalorder %v1221, 0
        %vm1250 = vcmp.ge.s32.totalorder %v1222, 0
        %vm1251 = vcmp.ge.s32.totalorder %v1223, 0
        %vm1252 = vcmp.ge.s32.totalorder %v1224, 0
        %vm1253 = vcmp.ge.s32.totalorder %v1225, 0
        %vm1254 = vcmp.ge.s32.totalorder %v1226, 0
        %vm1255 = vcmp.ge.s32.totalorder %v1227, 0
        %vm1256 = vcmp.ge.s32.totalorder %v1228, 0
        %vm1257 = vcmp.ge.s32.totalorder %v1229, 0
        %vm1258 = vcmp.ge.s32.totalorder %v1230, 0
        %vm1259 = vcmp.ge.s32.totalorder %v1231, 0
        %vm1260 = vcmp.ge.s32.totalorder %v1232, 0
        %vm1261 = vcmp.ge.s32.totalorder %v1233, 0
        %vm1262 = vcmp.ge.s32.totalorder %v1234, 0
        %vm1263 = vcmp.ge.s32.totalorder %v1235, 0
        %vm1264 = vcmp.ge.s32.totalorder %v1236, 0
        %vm1265 = vcmp.ge.s32.totalorder %v1237, 0
        %vm1266 = vcmp.ge.s32.totalorder %v1238, 0
        %vm1267 = vcmp.ge.s32.totalorder %v1239, 0
        %vm1268 = vcmp.ge.s32.totalorder %v1240, 0
        %vm1269 = vcmp.ge.s32.totalorder %v1241, 0
        %vm1270 = vcmp.ge.s32.totalorder %v1242, 0
        %vm1271 = vcmp.ge.s32.totalorder %v1243, 0
        %vm1272 = vcmp.ge.s32.totalorder %v1244, 0
        %vm1273 = vcmp.lt.s32.totalorder %v1217, 16
        %vm1274 = vcmp.lt.s32.totalorder %v1218, 16
        %vm1275 = vcmp.lt.s32.totalorder %v1219, 16
        %vm1276 = vcmp.lt.s32.totalorder %v1220, 16
        %vm1277 = vcmp.lt.s32.totalorder %v1221, 16
        %vm1278 = vcmp.lt.s32.totalorder %v1222, 16
        %vm1279 = vcmp.lt.s32.totalorder %v1223, 16
        %vm1280 = vcmp.lt.s32.totalorder %v1224, 16
        %vm1281 = vcmp.lt.s32.totalorder %v1225, 16
        %vm1282 = vcmp.lt.s32.totalorder %v1226, 16
        %vm1283 = vcmp.lt.s32.totalorder %v1227, 16
        %vm1284 = vcmp.lt.s32.totalorder %v1228, 16
        %vm1285 = vcmp.lt.s32.totalorder %v1229, 16
        %vm1286 = vcmp.lt.s32.totalorder %v1230, 16
        %vm1287 = vcmp.lt.s32.totalorder %v1231, 16
        %vm1288 = vcmp.lt.s32.totalorder %v1232, 16
        %vm1289 = vcmp.lt.s32.totalorder %v1233, 16
        %vm1290 = vcmp.lt.s32.totalorder %v1234, 16
        %vm1291 = vcmp.lt.s32.totalorder %v1235, 16
        %vm1292 = vcmp.lt.s32.totalorder %v1236, 16
        %vm1293 = vcmp.lt.s32.totalorder %v1237, 16
        %vm1294 = vcmp.lt.s32.totalorder %v1238, 16
        %vm1295 = vcmp.lt.s32.totalorder %v1239, 16
        %vm1296 = vcmp.lt.s32.totalorder %v1240, 16
        %vm1297 = vcmp.lt.s32.totalorder %v1241, 16
        %vm1298 = vcmp.lt.s32.totalorder %v1242, 16
        %vm1299 = vcmp.lt.s32.totalorder %v1243, 16
        %vm1300 = vcmp.lt.s32.totalorder %v1244, 16
        %vm1301 = vmand %vm1245, %vm1273
        %vm1302 = vmand %vm1246, %vm1274
        %vm1303 = vmand %vm1247, %vm1275
        %vm1304 = vmand %vm1248, %vm1276
        %vm1305 = vmand %vm1249, %vm1277
        %vm1306 = vmand %vm1250, %vm1278
        %vm1307 = vmand %vm1251, %vm1279
        %vm1308 = vmand %vm1252, %vm1280
        %vm1309 = vmand %vm1253, %vm1281
        %vm1310 = vmand %vm1254, %vm1282
        %vm1311 = vmand %vm1255, %vm1283
        %vm1312 = vmand %vm1256, %vm1284
        %vm1313 = vmand %vm1257, %vm1285
        %vm1314 = vmand %vm1258, %vm1286
        %vm1315 = vmand %vm1259, %vm1287
        %vm1316 = vmand %vm1260, %vm1288
        %vm1317 = vmand %vm1261, %vm1289
        %vm1318 = vmand %vm1262, %vm1290
        %vm1319 = vmand %vm1263, %vm1291
        %vm1320 = vmand %vm1264, %vm1292
        %vm1321 = vmand %vm1265, %vm1293
        %vm1322 = vmand %vm1266, %vm1294
        %vm1323 = vmand %vm1267, %vm1295
        %vm1324 = vmand %vm1268, %vm1296
        %vm1325 = vmand %vm1269, %vm1297
        %vm1326 = vmand %vm1270, %vm1298
        %vm1327 = vmand %vm1271, %vm1299
        %vm1328 = vmand %vm1272, %vm1300
        %v1329 = vsel %vm1301, 1, 0
        %v1330 = vsel %vm1302, 1, 0
        %v1331 = vsel %vm1303, 1, 0
        %v1332 = vsel %vm1304, 1, 0
        %v1333 = vsel %vm1305, 1, 0
        %v1334 = vsel %vm1306, 1, 0
        %v1335 = vsel %vm1307, 1, 0
        %v1336 = vsel %vm1308, 1, 0
        %v1337 = vsel %vm1309, 1, 0
        %v1338 = vsel %vm1310, 1, 0
        %v1339 = vsel %vm1311, 1, 0
        %v1340 = vsel %vm1312, 1, 0
        %v1341 = vsel %vm1313, 1, 0
        %v1342 = vsel %vm1314, 1, 0
        %v1343 = vsel %vm1315, 1, 0
        %v1344 = vsel %vm1316, 1, 0
        %v1345 = vsel %vm1317, 1, 0
        %v1346 = vsel %vm1318, 1, 0
        %v1347 = vsel %vm1319, 1, 0
        %v1348 = vsel %vm1320, 1, 0
        %v1349 = vsel %vm1321, 1, 0
        %v1350 = vsel %vm1322, 1, 0
        %v1351 = vsel %vm1323, 1, 0
        %v1352 = vsel %vm1324, 1, 0
        %v1353 = vsel %vm1325, 1, 0
        %v1354 = vsel %vm1326, 1, 0
        %v1355 = vsel %vm1327, 1, 0
        %v1356 = vsel %vm1328, 1, 0
        %vm1357 = vcmp.eq.s32.totalorder %v1329, 1
        %vm1358 = vcmp.eq.s32.totalorder %v1330, 1
        %vm1359 = vcmp.eq.s32.totalorder %v1331, 1
        %vm1360 = vcmp.eq.s32.totalorder %v1332, 1
        %vm1361 = vcmp.eq.s32.totalorder %v1333, 1
        %vm1362 = vcmp.eq.s32.totalorder %v1334, 1
        %vm1363 = vcmp.eq.s32.totalorder %v1335, 1
        %vm1364 = vcmp.eq.s32.totalorder %v1336, 1
        %vm1365 = vcmp.eq.s32.totalorder %v1337, 1
        %vm1366 = vcmp.eq.s32.totalorder %v1338, 1
        %vm1367 = vcmp.eq.s32.totalorder %v1339, 1
        %vm1368 = vcmp.eq.s32.totalorder %v1340, 1
        %vm1369 = vcmp.eq.s32.totalorder %v1341, 1
        %vm1370 = vcmp.eq.s32.totalorder %v1342, 1
        %vm1371 = vcmp.eq.s32.totalorder %v1343, 1
        %vm1372 = vcmp.eq.s32.totalorder %v1344, 1
        %vm1373 = vcmp.eq.s32.totalorder %v1345, 1
        %vm1374 = vcmp.eq.s32.totalorder %v1346, 1
        %vm1375 = vcmp.eq.s32.totalorder %v1347, 1
        %vm1376 = vcmp.eq.s32.totalorder %v1348, 1
        %vm1377 = vcmp.eq.s32.totalorder %v1349, 1
        %vm1378 = vcmp.eq.s32.totalorder %v1350, 1
        %vm1379 = vcmp.eq.s32.totalorder %v1351, 1
        %vm1380 = vcmp.eq.s32.totalorder %v1352, 1
        %vm1381 = vcmp.eq.s32.totalorder %v1353, 1
        %vm1382 = vcmp.eq.s32.totalorder %v1354, 1
        %vm1383 = vcmp.eq.s32.totalorder %v1355, 1
        %vm1384 = vcmp.eq.s32.totalorder %v1356, 1
        %v1385 = vsel %vm1357, %v1105, -inf
        %v1386 = vsel %vm1357, %v1107, -inf
        %v1387 = vsel %vm1358, %v1109, -inf
        %v1388 = vsel %vm1358, %v1111, -inf
        %v1389 = vsel %vm1359, %v1113, -inf
        %v1390 = vsel %vm1359, %v1115, -inf
        %v1391 = vsel %vm1360, %v1117, -inf
        %v1392 = vsel %vm1360, %v1119, -inf
        %v1393 = vsel %vm1361, %v1121, -inf
        %v1394 = vsel %vm1361, %v1123, -inf
        %v1395 = vsel %vm1362, %v1125, -inf
        %v1396 = vsel %vm1362, %v1127, -inf
        %v1397 = vsel %vm1363, %v1129, -inf
        %v1398 = vsel %vm1363, %v1131, -inf
        %v1399 = vsel %vm1364, %v1133, -inf
        %v1400 = vsel %vm1364, %v1135, -inf
        %v1401 = vsel %vm1365, %v1137, -inf
        %v1402 = vsel %vm1365, %v1139, -inf
        %v1403 = vsel %vm1366, %v1141, -inf
        %v1404 = vsel %vm1366, %v1143, -inf
        %v1405 = vsel %vm1367, %v1145, -inf
        %v1406 = vsel %vm1367, %v1147, -inf
        %v1407 = vsel %vm1368, %v1149, -inf
        %v1408 = vsel %vm1368, %v1151, -inf
        %v1409 = vsel %vm1369, %v1153, -inf
        %v1410 = vsel %vm1369, %v1155, -inf
        %v1411 = vsel %vm1370, %v1157, -inf
        %v1412 = vsel %vm1370, %v1159, -inf
        %v1413 = vsel %vm1371, %v1161, -inf
        %v1414 = vsel %vm1371, %v1163, -inf
        %v1415 = vsel %vm1372, %v1165, -inf
        %v1416 = vsel %vm1372, %v1167, -inf
        %v1417 = vsel %vm1373, %v1169, -inf
        %v1418 = vsel %vm1373, %v1171, -inf
        %v1419 = vsel %vm1374, %v1173, -inf
        %v1420 = vsel %vm1374, %v1175, -inf
        %v1421 = vsel %vm1375, %v1177, -inf
        %v1422 = vsel %vm1375, %v1179, -inf
        %v1423 = vsel %vm1376, %v1181, -inf
        %v1424 = vsel %vm1376, %v1183, -inf
        %v1425 = vsel %vm1377, %v1185, -inf
        %v1426 = vsel %vm1377, %v1187, -inf
        %v1427 = vsel %vm1378, %v1189, -inf
        %v1428 = vsel %vm1378, %v1191, -inf
        %v1429 = vsel %vm1379, %v1193, -inf
        %v1430 = vsel %vm1379, %v1195, -inf
        %v1431 = vsel %vm1380, %v1197, -inf
        %v1432 = vsel %vm1380, %v1199, -inf
        %v1433 = vsel %vm1381, %v1201, -inf
        %v1434 = vsel %vm1381, %v1203, -inf
        %v1435 = vsel %vm1382, %v1205, -inf
        %v1436 = vsel %vm1382, %v1207, -inf
        %v1437 = vsel %vm1383, %v1209, -inf
        %v1438 = vsel %vm1383, %v1211, -inf
        %v1439 = vsel %vm1384, %v1213, -inf
        %v1440 = vsel %vm1384, %v1215, -inf
        %v1441 = vld [vmem:[%s3] sm:$0x3]
        %vm1442 = vcmask 15360
        %1443 = vst.msk [vmem:[#allocation2 + $0x8] sm:$0xff] %vm1442, %v1385
        %1444 = vst.msk [vmem:[#allocation2 + $0x10] sm:$0xff] %vm1442, %v1386
        %1445 = vst.msk [vmem:[#allocation2 + $0x28] sm:$0xff] %vm1442, %v1387
        %1446 = vst.msk [vmem:[#allocation2 + $0x30] sm:$0xff] %vm1442, %v1388
        %1447 = vst.msk [vmem:[#allocation2 + $0x48] sm:$0xff] %vm1442, %v1389
        %1448 = vst.msk [vmem:[#allocation2 + $0x50] sm:$0xff] %vm1442, %v1390
        %1449 = vst.msk [vmem:[#allocation2 + $0x68] sm:$0xff] %vm1442, %v1391
        %1450 = vst.msk [vmem:[#allocation2 + $0x70] sm:$0xff] %vm1442, %v1392
        %1451 = vst.msk [vmem:[#allocation2 + $0x88] sm:$0xff] %vm1442, %v1393
        %1452 = vst.msk [vmem:[#allocation2 + $0x90] sm:$0xff] %vm1442, %v1394
        %1453 = vst.msk [vmem:[#allocation2 + $0xa8] sm:$0xff] %vm1442, %v1395
        %1454 = vst.msk [vmem:[#allocation2 + $0xb0] sm:$0xff] %vm1442, %v1396
        %1455 = vst.msk [vmem:[#allocation2 + $0xc8] sm:$0xff] %vm1442, %v1397
        %1456 = vst.msk [vmem:[#allocation2 + $0xd0] sm:$0xff] %vm1442, %v1398
        %1457 = vst.msk [vmem:[#allocation2 + $0xe8] sm:$0xff] %vm1442, %v1399
        %1458 = vst.msk [vmem:[#allocation2 + $0xf0] sm:$0xff] %vm1442, %v1400
        %1459 = vst.msk [vmem:[#allocation2 + $0x108] sm:$0xff] %vm1442, %v1401
        %1460 = vst.msk [vmem:[#allocation2 + $0x110] sm:$0xff] %vm1442, %v1402
        %1461 = vst.msk [vmem:[#allocation2 + $0x128] sm:$0xff] %vm1442, %v1403
        %1462 = vst.msk [vmem:[#allocation2 + $0x130] sm:$0xff] %vm1442, %v1404
        %1463 = vst.msk [vmem:[#allocation2 + $0x148] sm:$0xff] %vm1442, %v1405
        %1464 = vst.msk [vmem:[#allocation2 + $0x150] sm:$0xff] %vm1442, %v1406
        %1465 = vst.msk [vmem:[#allocation2 + $0x168] sm:$0xff] %vm1442, %v1407
        %1466 = vst.msk [vmem:[#allocation2 + $0x170] sm:$0xff] %vm1442, %v1408
        %1467 = vst.msk [vmem:[#allocation2 + $0x188] sm:$0xff] %vm1442, %v1409
        %1468 = vst.msk [vmem:[#allocation2 + $0x190] sm:$0xff] %vm1442, %v1410
        %1469 = vst.msk [vmem:[#allocation2 + $0x1a8] sm:$0xff] %vm1442, %v1411
        %1470 = vst.msk [vmem:[#allocation2 + $0x1b0] sm:$0xff] %vm1442, %v1412
        %1471 = vst.msk [vmem:[#allocation2 + $0x1c8] sm:$0xff] %vm1442, %v1413
        %1472 = vst.msk [vmem:[#allocation2 + $0x1d0] sm:$0xff] %vm1442, %v1414
        %1473 = vst.msk [vmem:[#allocation2 + $0x1e8] sm:$0xff] %vm1442, %v1415
        %1474 = vst.msk [vmem:[#allocation2 + $0x1f0] sm:$0xff] %vm1442, %v1416
        %1475 = vst.msk [vmem:[#allocation2 + $0x208] sm:$0xff] %vm1442, %v1417
        %1476 = vst.msk [vmem:[#allocation2 + $0x210] sm:$0xff] %vm1442, %v1418
        %1477 = vst.msk [vmem:[#allocation2 + $0x228] sm:$0xff] %vm1442, %v1419
        %1478 = vst.msk [vmem:[#allocation2 + $0x230] sm:$0xff] %vm1442, %v1420
        %1479 = vst.msk [vmem:[#allocation2 + $0x248] sm:$0xff] %vm1442, %v1421
        %1480 = vst.msk [vmem:[#allocation2 + $0x250] sm:$0xff] %vm1442, %v1422
        %1481 = vst.msk [vmem:[#allocation2 + $0x268] sm:$0xff] %vm1442, %v1423
        %1482 = vst.msk [vmem:[#allocation2 + $0x270] sm:$0xff] %vm1442, %v1424
        %1483 = vst.msk [vmem:[#allocation2 + $0x288] sm:$0xff] %vm1442, %v1425
        %1484 = vst.msk [vmem:[#allocation2 + $0x290] sm:$0xff] %vm1442, %v1426
        %1485 = vst.msk [vmem:[#allocation2 + $0x2a8] sm:$0xff] %vm1442, %v1427
        %1486 = vst.msk [vmem:[#allocation2 + $0x2b0] sm:$0xff] %vm1442, %v1428
        %1487 = vst.msk [vmem:[#allocation2 + $0x2c8] sm:$0xff] %vm1442, %v1429
        %1488 = vst.msk [vmem:[#allocation2 + $0x2d0] sm:$0xff] %vm1442, %v1430
        %1489 = vst.msk [vmem:[#allocation2 + $0x2e8] sm:$0xff] %vm1442, %v1431
        %1490 = vst.msk [vmem:[#allocation2 + $0x2f0] sm:$0xff] %vm1442, %v1432
        %1491 = vst.msk [vmem:[#allocation2 + $0x308] sm:$0xff] %vm1442, %v1433
        %1492 = vst.msk [vmem:[#allocation2 + $0x310] sm:$0xff] %vm1442, %v1434
        %1493 = vst.msk [vmem:[#allocation2 + $0x328] sm:$0xff] %vm1442, %v1435
        %1494 = vst.msk [vmem:[#allocation2 + $0x330] sm:$0xff] %vm1442, %v1436
        %1495 = vst.msk [vmem:[#allocation2 + $0x348] sm:$0xff] %vm1442, %v1437
        %1496 = vst.msk [vmem:[#allocation2 + $0x350] sm:$0xff] %vm1442, %v1438
        %1497 = vst.msk [vmem:[#allocation2 + $0x368] sm:$0xff] %vm1442, %v1439
        %1498 = vst.msk [vmem:[#allocation2 + $0x370] sm:$0xff] %vm1442, %v1440
        %v1499 = vld [vmem:[#allocation2 + $0x6] sm:$0xff]
        %v1500 = vld [vmem:[#allocation2 + $0xe] sm:$0xff]
        %v1501 = vld [vmem:[#allocation2 + $0x26] sm:$0xff]
        %v1502 = vld [vmem:[#allocation2 + $0x2e] sm:$0xff]
        %v1503 = vld [vmem:[#allocation2 + $0x46] sm:$0xff]
        %v1504 = vld [vmem:[#allocation2 + $0x4e] sm:$0xff]
        %v1505 = vld [vmem:[#allocation2 + $0x66] sm:$0xff]
        %v1506 = vld [vmem:[#allocation2 + $0x6e] sm:$0xff]
        %v1507 = vld [vmem:[#allocation2 + $0x86] sm:$0xff]
        %v1508 = vld [vmem:[#allocation2 + $0x8e] sm:$0xff]
        %v1509 = vld [vmem:[#allocation2 + $0xa6] sm:$0xff]
        %v1510 = vld [vmem:[#allocation2 + $0xae] sm:$0xff]
        %v1511 = vld [vmem:[#allocation2 + $0xc6] sm:$0xff]
        %v1512 = vld [vmem:[#allocation2 + $0xce] sm:$0xff]
        %v1513 = vld [vmem:[#allocation2 + $0xe6] sm:$0xff]
        %v1514 = vld [vmem:[#allocation2 + $0xee] sm:$0xff]
        %v1515 = vld [vmem:[#allocation2 + $0x106] sm:$0xff]
        %v1516 = vld [vmem:[#allocation2 + $0x10e] sm:$0xff]
        %v1517 = vld [vmem:[#allocation2 + $0x126] sm:$0xff]
        %v1518 = vld [vmem:[#allocation2 + $0x12e] sm:$0xff]
        %v1519 = vld [vmem:[#allocation2 + $0x146] sm:$0xff]
        %v1520 = vld [vmem:[#allocation2 + $0x14e] sm:$0xff]
        %v1521 = vld [vmem:[#allocation2 + $0x166] sm:$0xff]
        %v1522 = vld [vmem:[#allocation2 + $0x16e] sm:$0xff]
        %v1523 = vld [vmem:[#allocation2 + $0x186] sm:$0xff]
        %v1524 = vld [vmem:[#allocation2 + $0x18e] sm:$0xff]
        %v1525 = vld [vmem:[#allocation2 + $0x1a6] sm:$0xff]
        %v1526 = vld [vmem:[#allocation2 + $0x1ae] sm:$0xff]
        %v1527 = vld [vmem:[#allocation2 + $0x1c6] sm:$0xff]
        %v1528 = vld [vmem:[#allocation2 + $0x1ce] sm:$0xff]
        %v1529 = vld [vmem:[#allocation2 + $0x1e6] sm:$0xff]
        %v1530 = vld [vmem:[#allocation2 + $0x1ee] sm:$0xff]
        %v1531 = vld [vmem:[#allocation2 + $0x206] sm:$0xff]
        %v1532 = vld [vmem:[#allocation2 + $0x20e] sm:$0xff]
        %v1533 = vld [vmem:[#allocation2 + $0x226] sm:$0xff]
        %v1534 = vld [vmem:[#allocation2 + $0x22e] sm:$0xff]
        %v1535 = vld [vmem:[#allocation2 + $0x246] sm:$0xff]
        %v1536 = vld [vmem:[#allocation2 + $0x24e] sm:$0xff]
        %v1537 = vld [vmem:[#allocation2 + $0x266] sm:$0xff]
        %v1538 = vld [vmem:[#allocation2 + $0x26e] sm:$0xff]
        %v1539 = vld [vmem:[#allocation2 + $0x286] sm:$0xff]
        %v1540 = vld [vmem:[#allocation2 + $0x28e] sm:$0xff]
        %v1541 = vld [vmem:[#allocation2 + $0x2a6] sm:$0xff]
        %v1542 = vld [vmem:[#allocation2 + $0x2ae] sm:$0xff]
        %v1543 = vld [vmem:[#allocation2 + $0x2c6] sm:$0xff]
        %v1544 = vld [vmem:[#allocation2 + $0x2ce] sm:$0xff]
        %v1545 = vld [vmem:[#allocation2 + $0x2e6] sm:$0xff]
        %v1546 = vld [vmem:[#allocation2 + $0x2ee] sm:$0xff]
        %v1547 = vld [vmem:[#allocation2 + $0x306] sm:$0xff]
        %v1548 = vld [vmem:[#allocation2 + $0x30e] sm:$0xff]
        %v1549 = vld [vmem:[#allocation2 + $0x326] sm:$0xff]
        %v1550 = vld [vmem:[#allocation2 + $0x32e] sm:$0xff]
        %v1551 = vld [vmem:[#allocation2 + $0x346] sm:$0xff]
        %v1552 = vld [vmem:[#allocation2 + $0x34e] sm:$0xff]
        %v1553 = vld [vmem:[#allocation2 + $0x366] sm:$0xff]
        %v1554 = vld [vmem:[#allocation2 + $0x36e] sm:$0xff]
        %v1555 = vld [vmem:[#allocation2 + $0x7] sm:$0xff]
        %v1556 = vld [vmem:[#allocation2 + $0xf] sm:$0xff]
        %v1557 = vld [vmem:[#allocation2 + $0x27] sm:$0xff]
        %v1558 = vld [vmem:[#allocation2 + $0x2f] sm:$0xff]
        %v1559 = vld [vmem:[#allocation2 + $0x47] sm:$0xff]
        %v1560 = vld [vmem:[#allocation2 + $0x4f] sm:$0xff]
        %v1561 = vld [vmem:[#allocation2 + $0x67] sm:$0xff]
        %v1562 = vld [vmem:[#allocation2 + $0x6f] sm:$0xff]
        %v1563 = vld [vmem:[#allocation2 + $0x87] sm:$0xff]
        %v1564 = vld [vmem:[#allocation2 + $0x8f] sm:$0xff]
        %v1565 = vld [vmem:[#allocation2 + $0xa7] sm:$0xff]
        %v1566 = vld [vmem:[#allocation2 + $0xaf] sm:$0xff]
        %v1567 = vld [vmem:[#allocation2 + $0xc7] sm:$0xff]
        %v1568 = vld [vmem:[#allocation2 + $0xcf] sm:$0xff]
        %v1569 = vld [vmem:[#allocation2 + $0xe7] sm:$0xff]
        %v1570 = vld [vmem:[#allocation2 + $0xef] sm:$0xff]
        %v1571 = vld [vmem:[#allocation2 + $0x107] sm:$0xff]
        %v1572 = vld [vmem:[#allocation2 + $0x10f] sm:$0xff]
        %v1573 = vld [vmem:[#allocation2 + $0x127] sm:$0xff]
        %v1574 = vld [vmem:[#allocation2 + $0x12f] sm:$0xff]
        %v1575 = vld [vmem:[#allocation2 + $0x147] sm:$0xff]
        %v1576 = vld [vmem:[#allocation2 + $0x14f] sm:$0xff]
        %v1577 = vld [vmem:[#allocation2 + $0x167] sm:$0xff]
        %v1578 = vld [vmem:[#allocation2 + $0x16f] sm:$0xff]
        %v1579 = vld [vmem:[#allocation2 + $0x187] sm:$0xff]
        %v1580 = vld [vmem:[#allocation2 + $0x18f] sm:$0xff]
        %v1581 = vld [vmem:[#allocation2 + $0x1a7] sm:$0xff]
        %v1582 = vld [vmem:[#allocation2 + $0x1af] sm:$0xff]
        %v1583 = vld [vmem:[#allocation2 + $0x1c7] sm:$0xff]
        %v1584 = vld [vmem:[#allocation2 + $0x1cf] sm:$0xff]
        %v1585 = vld [vmem:[#allocation2 + $0x1e7] sm:$0xff]
        %v1586 = vld [vmem:[#allocation2 + $0x1ef] sm:$0xff]
        %v1587 = vld [vmem:[#allocation2 + $0x207] sm:$0xff]
        %v1588 = vld [vmem:[#allocation2 + $0x20f] sm:$0xff]
        %v1589 = vld [vmem:[#allocation2 + $0x227] sm:$0xff]
        %v1590 = vld [vmem:[#allocation2 + $0x22f] sm:$0xff]
        %v1591 = vld [vmem:[#allocation2 + $0x247] sm:$0xff]
        %v1592 = vld [vmem:[#allocation2 + $0x24f] sm:$0xff]
        %v1593 = vld [vmem:[#allocation2 + $0x267] sm:$0xff]
        %v1594 = vld [vmem:[#allocation2 + $0x26f] sm:$0xff]
        %v1595 = vld [vmem:[#allocation2 + $0x287] sm:$0xff]
        %v1596 = vld [vmem:[#allocation2 + $0x28f] sm:$0xff]
        %v1597 = vld [vmem:[#allocation2 + $0x2a7] sm:$0xff]
        %v1598 = vld [vmem:[#allocation2 + $0x2af] sm:$0xff]
        %v1599 = vld [vmem:[#allocation2 + $0x2c7] sm:$0xff]
        %v1600 = vld [vmem:[#allocation2 + $0x2cf] sm:$0xff]
        %v1601 = vld [vmem:[#allocation2 + $0x2e7] sm:$0xff]
        %v1602 = vld [vmem:[#allocation2 + $0x2ef] sm:$0xff]
        %v1603 = vld [vmem:[#allocation2 + $0x307] sm:$0xff]
        %v1604 = vld [vmem:[#allocation2 + $0x30f] sm:$0xff]
        %v1605 = vld [vmem:[#allocation2 + $0x327] sm:$0xff]
        %v1606 = vld [vmem:[#allocation2 + $0x32f] sm:$0xff]
        %v1607 = vld [vmem:[#allocation2 + $0x347] sm:$0xff]
        %v1608 = vld [vmem:[#allocation2 + $0x34f] sm:$0xff]
        %v1609 = vld [vmem:[#allocation2 + $0x367] sm:$0xff]
        %v1610 = vld [vmem:[#allocation2 + $0x36f] sm:$0xff]
        %v1611 = vmax.f32 %v1499, %v1555
        %v1612 = vmax.f32 %v1500, %v1556
        %v1613 = vmax.f32 %v1501, %v1557
        %v1614 = vmax.f32 %v1502, %v1558
        %v1615 = vmax.f32 %v1503, %v1559
        %v1616 = vmax.f32 %v1504, %v1560
        %v1617 = vmax.f32 %v1505, %v1561
        %v1618 = vmax.f32 %v1506, %v1562
        %v1619 = vmax.f32 %v1507, %v1563
        %v1620 = vmax.f32 %v1508, %v1564
        %v1621 = vmax.f32 %v1509, %v1565
        %v1622 = vmax.f32 %v1510, %v1566
        %v1623 = vmax.f32 %v1511, %v1567
        %v1624 = vmax.f32 %v1512, %v1568
        %v1625 = vmax.f32 %v1513, %v1569
        %v1626 = vmax.f32 %v1514, %v1570
        %v1627 = vmax.f32 %v1515, %v1571
        %v1628 = vmax.f32 %v1516, %v1572
        %v1629 = vmax.f32 %v1517, %v1573
        %v1630 = vmax.f32 %v1518, %v1574
        %v1631 = vmax.f32 %v1519, %v1575
        %v1632 = vmax.f32 %v1520, %v1576
        %v1633 = vmax.f32 %v1521, %v1577
        %v1634 = vmax.f32 %v1522, %v1578
        %v1635 = vmax.f32 %v1523, %v1579
        %v1636 = vmax.f32 %v1524, %v1580
        %v1637 = vmax.f32 %v1525, %v1581
        %v1638 = vmax.f32 %v1526, %v1582
        %v1639 = vmax.f32 %v1527, %v1583
        %v1640 = vmax.f32 %v1528, %v1584
        %v1641 = vmax.f32 %v1529, %v1585
        %v1642 = vmax.f32 %v1530, %v1586
        %v1643 = vmax.f32 %v1531, %v1587
        %v1644 = vmax.f32 %v1532, %v1588
        %v1645 = vmax.f32 %v1533, %v1589
        %v1646 = vmax.f32 %v1534, %v1590
        %v1647 = vmax.f32 %v1535, %v1591
        %v1648 = vmax.f32 %v1536, %v1592
        %v1649 = vmax.f32 %v1537, %v1593
        %v1650 = vmax.f32 %v1538, %v1594
        %v1651 = vmax.f32 %v1539, %v1595
        %v1652 = vmax.f32 %v1540, %v1596
        %v1653 = vmax.f32 %v1541, %v1597
        %v1654 = vmax.f32 %v1542, %v1598
        %v1655 = vmax.f32 %v1543, %v1599
        %v1656 = vmax.f32 %v1544, %v1600
        %v1657 = vmax.f32 %v1545, %v1601
        %v1658 = vmax.f32 %v1546, %v1602
        %v1659 = vmax.f32 %v1547, %v1603
        %v1660 = vmax.f32 %v1548, %v1604
        %v1661 = vmax.f32 %v1549, %v1605
        %v1662 = vmax.f32 %v1550, %v1606
        %v1663 = vmax.f32 %v1551, %v1607
        %v1664 = vmax.f32 %v1552, %v1608
        %v1665 = vmax.f32 %v1553, %v1609
        %v1666 = vmax.f32 %v1554, %v1610
        %v1667 = vld [vmem:[#allocation2 + $0x8] sm:$0xff]
        %v1668 = vld [vmem:[#allocation2 + $0x10] sm:$0xff]
        %v1669 = vld [vmem:[#allocation2 + $0x28] sm:$0xff]
        %v1670 = vld [vmem:[#allocation2 + $0x30] sm:$0xff]
        %v1671 = vld [vmem:[#allocation2 + $0x48] sm:$0xff]
        %v1672 = vld [vmem:[#allocation2 + $0x50] sm:$0xff]
        %v1673 = vld [vmem:[#allocation2 + $0x68] sm:$0xff]
        %v1674 = vld [vmem:[#allocation2 + $0x70] sm:$0xff]
        %v1675 = vld [vmem:[#allocation2 + $0x88] sm:$0xff]
        %v1676 = vld [vmem:[#allocation2 + $0x90] sm:$0xff]
        %v1677 = vld [vmem:[#allocation2 + $0xa8] sm:$0xff]
        %v1678 = vld [vmem:[#allocation2 + $0xb0] sm:$0xff]
        %v1679 = vld [vmem:[#allocation2 + $0xc8] sm:$0xff]
        %v1680 = vld [vmem:[#allocation2 + $0xd0] sm:$0xff]
        %v1681 = vld [vmem:[#allocation2 + $0xe8] sm:$0xff]
        %v1682 = vld [vmem:[#allocation2 + $0xf0] sm:$0xff]
        %v1683 = vld [vmem:[#allocation2 + $0x108] sm:$0xff]
        %v1684 = vld [vmem:[#allocation2 + $0x110] sm:$0xff]
        %v1685 = vld [vmem:[#allocation2 + $0x128] sm:$0xff]
        %v1686 = vld [vmem:[#allocation2 + $0x130] sm:$0xff]
        %v1687 = vld [vmem:[#allocation2 + $0x148] sm:$0xff]
        %v1688 = vld [vmem:[#allocation2 + $0x150] sm:$0xff]
        %v1689 = vld [vmem:[#allocation2 + $0x168] sm:$0xff]
        %v1690 = vld [vmem:[#allocation2 + $0x170] sm:$0xff]
        %v1691 = vld [vmem:[#allocation2 + $0x188] sm:$0xff]
        %v1692 = vld [vmem:[#allocation2 + $0x190] sm:$0xff]
        %v1693 = vld [vmem:[#allocation2 + $0x1a8] sm:$0xff]
        %v1694 = vld [vmem:[#allocation2 + $0x1b0] sm:$0xff]
        %v1695 = vld [vmem:[#allocation2 + $0x1c8] sm:$0xff]
        %v1696 = vld [vmem:[#allocation2 + $0x1d0] sm:$0xff]
        %v1697 = vld [vmem:[#allocation2 + $0x1e8] sm:$0xff]
        %v1698 = vld [vmem:[#allocation2 + $0x1f0] sm:$0xff]
        %v1699 = vld [vmem:[#allocation2 + $0x208] sm:$0xff]
        %v1700 = vld [vmem:[#allocation2 + $0x210] sm:$0xff]
        %v1701 = vld [vmem:[#allocation2 + $0x228] sm:$0xff]
        %v1702 = vld [vmem:[#allocation2 + $0x230] sm:$0xff]
        %v1703 = vld [vmem:[#allocation2 + $0x248] sm:$0xff]
        %v1704 = vld [vmem:[#allocation2 + $0x250] sm:$0xff]
        %v1705 = vld [vmem:[#allocation2 + $0x268] sm:$0xff]
        %v1706 = vld [vmem:[#allocation2 + $0x270] sm:$0xff]
        %v1707 = vld [vmem:[#allocation2 + $0x288] sm:$0xff]
        %v1708 = vld [vmem:[#allocation2 + $0x290] sm:$0xff]
        %v1709 = vld [vmem:[#allocation2 + $0x2a8] sm:$0xff]
        %v1710 = vld [vmem:[#allocation2 + $0x2b0] sm:$0xff]
        %v1711 = vld [vmem:[#allocation2 + $0x2c8] sm:$0xff]
        %v1712 = vld [vmem:[#allocation2 + $0x2d0] sm:$0xff]
        %v1713 = vld [vmem:[#allocation2 + $0x2e8] sm:$0xff]
        %v1714 = vld [vmem:[#allocation2 + $0x2f0] sm:$0xff]
        %v1715 = vld [vmem:[#allocation2 + $0x308] sm:$0xff]
        %v1716 = vld [vmem:[#allocation2 + $0x310] sm:$0xff]
        %v1717 = vld [vmem:[#allocation2 + $0x328] sm:$0xff]
        %v1718 = vld [vmem:[#allocation2 + $0x330] sm:$0xff]
        %v1719 = vld [vmem:[#allocation2 + $0x348] sm:$0xff]
        %v1720 = vld [vmem:[#allocation2 + $0x350] sm:$0xff]
        %v1721 = vld [vmem:[#allocation2 + $0x368] sm:$0xff]
        %v1722 = vld [vmem:[#allocation2 + $0x370] sm:$0xff]
        %v1723 = vmax.f32 %v1611, %v1667
        %v1724 = vmax.f32 %v1612, %v1668
        %v1725 = vmax.f32 %v1613, %v1669
        %v1726 = vmax.f32 %v1614, %v1670
        %v1727 = vmax.f32 %v1615, %v1671
        %v1728 = vmax.f32 %v1616, %v1672
        %v1729 = vmax.f32 %v1617, %v1673
        %v1730 = vmax.f32 %v1618, %v1674
        %v1731 = vmax.f32 %v1619, %v1675
        %v1732 = vmax.f32 %v1620, %v1676
        %v1733 = vmax.f32 %v1621, %v1677
        %v1734 = vmax.f32 %v1622, %v1678
        %v1735 = vmax.f32 %v1623, %v1679
        %v1736 = vmax.f32 %v1624, %v1680
        %v1737 = vmax.f32 %v1625, %v1681
        %v1738 = vmax.f32 %v1626, %v1682
        %v1739 = vmax.f32 %v1627, %v1683
        %v1740 = vmax.f32 %v1628, %v1684
        %v1741 = vmax.f32 %v1629, %v1685
        %v1742 = vmax.f32 %v1630, %v1686
        %v1743 = vmax.f32 %v1631, %v1687
        %v1744 = vmax.f32 %v1632, %v1688
        %v1745 = vmax.f32 %v1633, %v1689
        %v1746 = vmax.f32 %v1634, %v1690
        %v1747 = vmax.f32 %v1635, %v1691
        %v1748 = vmax.f32 %v1636, %v1692
        %v1749 = vmax.f32 %v1637, %v1693
        %v1750 = vmax.f32 %v1638, %v1694
        %v1751 = vmax.f32 %v1639, %v1695
        %v1752 = vmax.f32 %v1640, %v1696
        %v1753 = vmax.f32 %v1641, %v1697
        %v1754 = vmax.f32 %v1642, %v1698
        %v1755 = vmax.f32 %v1643, %v1699
        %v1756 = vmax.f32 %v1644, %v1700
        %v1757 = vmax.f32 %v1645, %v1701
        %v1758 = vmax.f32 %v1646, %v1702
        %v1759 = vmax.f32 %v1647, %v1703
        %v1760 = vmax.f32 %v1648, %v1704
        %v1761 = vmax.f32 %v1649, %v1705
        %v1762 = vmax.f32 %v1650, %v1706
        %v1763 = vmax.f32 %v1651, %v1707
        %v1764 = vmax.f32 %v1652, %v1708
        %v1765 = vmax.f32 %v1653, %v1709
        %v1766 = vmax.f32 %v1654, %v1710
        %v1767 = vmax.f32 %v1655, %v1711
        %v1768 = vmax.f32 %v1656, %v1712
        %v1769 = vmax.f32 %v1657, %v1713
        %v1770 = vmax.f32 %v1658, %v1714
        %v1771 = vmax.f32 %v1659, %v1715
        %v1772 = vmax.f32 %v1660, %v1716
        %v1773 = vmax.f32 %v1661, %v1717
        %v1774 = vmax.f32 %v1662, %v1718
        %v1775 = vmax.f32 %v1663, %v1719
        %v1776 = vmax.f32 %v1664, %v1720
        %v1777 = vmax.f32 %v1665, %v1721
        %v1778 = vmax.f32 %v1666, %v1722
        %v1779 = vld [vmem:[#allocation2 + $0x9] sm:$0xff]
        %v1780 = vld [vmem:[#allocation2 + $0x11] sm:$0xff]
        %v1781 = vld [vmem:[#allocation2 + $0x29] sm:$0xff]
        %v1782 = vld [vmem:[#allocation2 + $0x31] sm:$0xff]
        %v1783 = vld [vmem:[#allocation2 + $0x49] sm:$0xff]
        %v1784 = vld [vmem:[#allocation2 + $0x51] sm:$0xff]
        %v1785 = vld [vmem:[#allocation2 + $0x69] sm:$0xff]
        %v1786 = vld [vmem:[#allocation2 + $0x71] sm:$0xff]
        %v1787 = vld [vmem:[#allocation2 + $0x89] sm:$0xff]
        %v1788 = vld [vmem:[#allocation2 + $0x91] sm:$0xff]
        %v1789 = vld [vmem:[#allocation2 + $0xa9] sm:$0xff]
        %v1790 = vld [vmem:[#allocation2 + $0xb1] sm:$0xff]
        %v1791 = vld [vmem:[#allocation2 + $0xc9] sm:$0xff]
        %v1792 = vld [vmem:[#allocation2 + $0xd1] sm:$0xff]
        %v1793 = vld [vmem:[#allocation2 + $0xe9] sm:$0xff]
        %v1794 = vld [vmem:[#allocation2 + $0xf1] sm:$0xff]
        %v1795 = vld [vmem:[#allocation2 + $0x109] sm:$0xff]
        %v1796 = vld [vmem:[#allocation2 + $0x111] sm:$0xff]
        %v1797 = vld [vmem:[#allocation2 + $0x129] sm:$0xff]
        %v1798 = vld [vmem:[#allocation2 + $0x131] sm:$0xff]
        %v1799 = vld [vmem:[#allocation2 + $0x149] sm:$0xff]
        %v1800 = vld [vmem:[#allocation2 + $0x151] sm:$0xff]
        %v1801 = vld [vmem:[#allocation2 + $0x169] sm:$0xff]
        %v1802 = vld [vmem:[#allocation2 + $0x171] sm:$0xff]
        %v1803 = vld [vmem:[#allocation2 + $0x189] sm:$0xff]
        %v1804 = vld [vmem:[#allocation2 + $0x191] sm:$0xff]
        %v1805 = vld [vmem:[#allocation2 + $0x1a9] sm:$0xff]
        %v1806 = vld [vmem:[#allocation2 + $0x1b1] sm:$0xff]
        %v1807 = vld [vmem:[#allocation2 + $0x1c9] sm:$0xff]
        %v1808 = vld [vmem:[#allocation2 + $0x1d1] sm:$0xff]
        %v1809 = vld [vmem:[#allocation2 + $0x1e9] sm:$0xff]
        %v1810 = vld [vmem:[#allocation2 + $0x1f1] sm:$0xff]
        %v1811 = vld [vmem:[#allocation2 + $0x209] sm:$0xff]
        %v1812 = vld [vmem:[#allocation2 + $0x211] sm:$0xff]
        %v1813 = vld [vmem:[#allocation2 + $0x229] sm:$0xff]
        %v1814 = vld [vmem:[#allocation2 + $0x231] sm:$0xff]
        %v1815 = vld [vmem:[#allocation2 + $0x249] sm:$0xff]
        %v1816 = vld [vmem:[#allocation2 + $0x251] sm:$0xff]
        %v1817 = vld [vmem:[#allocation2 + $0x269] sm:$0xff]
        %v1818 = vld [vmem:[#allocation2 + $0x271] sm:$0xff]
        %v1819 = vld [vmem:[#allocation2 + $0x289] sm:$0xff]
        %v1820 = vld [vmem:[#allocation2 + $0x291] sm:$0xff]
        %v1821 = vld [vmem:[#allocation2 + $0x2a9] sm:$0xff]
        %v1822 = vld [vmem:[#allocation2 + $0x2b1] sm:$0xff]
        %v1823 = vld [vmem:[#allocation2 + $0x2c9] sm:$0xff]
        %v1824 = vld [vmem:[#allocation2 + $0x2d1] sm:$0xff]
        %v1825 = vld [vmem:[#allocation2 + $0x2e9] sm:$0xff]
        %v1826 = vld [vmem:[#allocation2 + $0x2f1] sm:$0xff]
        %v1827 = vld [vmem:[#allocation2 + $0x309] sm:$0xff]
        %v1828 = vld [vmem:[#allocation2 + $0x311] sm:$0xff]
        %v1829 = vld [vmem:[#allocation2 + $0x329] sm:$0xff]
        %v1830 = vld [vmem:[#allocation2 + $0x331] sm:$0xff]
        %v1831 = vld [vmem:[#allocation2 + $0x349] sm:$0xff]
        %v1832 = vld [vmem:[#allocation2 + $0x351] sm:$0xff]
        %v1833 = vld [vmem:[#allocation2 + $0x369] sm:$0xff]
        %v1834 = vld [vmem:[#allocation2 + $0x371] sm:$0xff]
        %v1835 = vmax.f32 %v1723, %v1779
        %v1836 = vmax.f32 %v1724, %v1780
        %v1837 = vmax.f32 %v1725, %v1781
        %v1838 = vmax.f32 %v1726, %v1782
        %v1839 = vmax.f32 %v1727, %v1783
        %v1840 = vmax.f32 %v1728, %v1784
        %v1841 = vmax.f32 %v1729, %v1785
        %v1842 = vmax.f32 %v1730, %v1786
        %v1843 = vmax.f32 %v1731, %v1787
        %v1844 = vmax.f32 %v1732, %v1788
        %v1845 = vmax.f32 %v1733, %v1789
        %v1846 = vmax.f32 %v1734, %v1790
        %v1847 = vmax.f32 %v1735, %v1791
        %v1848 = vmax.f32 %v1736, %v1792
        %v1849 = vmax.f32 %v1737, %v1793
        %v1850 = vmax.f32 %v1738, %v1794
        %v1851 = vmax.f32 %v1739, %v1795
        %v1852 = vmax.f32 %v1740, %v1796
        %v1853 = vmax.f32 %v1741, %v1797
        %v1854 = vmax.f32 %v1742, %v1798
        %v1855 = vmax.f32 %v1743, %v1799
        %v1856 = vmax.f32 %v1744, %v1800
        %v1857 = vmax.f32 %v1745, %v1801
        %v1858 = vmax.f32 %v1746, %v1802
        %v1859 = vmax.f32 %v1747, %v1803
        %v1860 = vmax.f32 %v1748, %v1804
        %v1861 = vmax.f32 %v1749, %v1805
        %v1862 = vmax.f32 %v1750, %v1806
        %v1863 = vmax.f32 %v1751, %v1807
        %v1864 = vmax.f32 %v1752, %v1808
        %v1865 = vmax.f32 %v1753, %v1809
        %v1866 = vmax.f32 %v1754, %v1810
        %v1867 = vmax.f32 %v1755, %v1811
        %v1868 = vmax.f32 %v1756, %v1812
        %v1869 = vmax.f32 %v1757, %v1813
        %v1870 = vmax.f32 %v1758, %v1814
        %v1871 = vmax.f32 %v1759, %v1815
        %v1872 = vmax.f32 %v1760, %v1816
        %v1873 = vmax.f32 %v1761, %v1817
        %v1874 = vmax.f32 %v1762, %v1818
        %v1875 = vmax.f32 %v1763, %v1819
        %v1876 = vmax.f32 %v1764, %v1820
        %v1877 = vmax.f32 %v1765, %v1821
        %v1878 = vmax.f32 %v1766, %v1822
        %v1879 = vmax.f32 %v1767, %v1823
        %v1880 = vmax.f32 %v1768, %v1824
        %v1881 = vmax.f32 %v1769, %v1825
        %v1882 = vmax.f32 %v1770, %v1826
        %v1883 = vmax.f32 %v1771, %v1827
        %v1884 = vmax.f32 %v1772, %v1828
        %v1885 = vmax.f32 %v1773, %v1829
        %v1886 = vmax.f32 %v1774, %v1830
        %v1887 = vmax.f32 %v1775, %v1831
        %v1888 = vmax.f32 %v1776, %v1832
        %v1889 = vmax.f32 %v1777, %v1833
        %v1890 = vmax.f32 %v1778, %v1834
        %v1891 = vld [vmem:[#allocation2 + $0xa] sm:$0xff]
        %v1892 = vld [vmem:[#allocation2 + $0x12] sm:$0xff]
        %v1893 = vld [vmem:[#allocation2 + $0x2a] sm:$0xff]
        %v1894 = vld [vmem:[#allocation2 + $0x32] sm:$0xff]
        %v1895 = vld [vmem:[#allocation2 + $0x4a] sm:$0xff]
        %v1896 = vld [vmem:[#allocation2 + $0x52] sm:$0xff]
        %v1897 = vld [vmem:[#allocation2 + $0x6a] sm:$0xff]
        %v1898 = vld [vmem:[#allocation2 + $0x72] sm:$0xff]
        %v1899 = vld [vmem:[#allocation2 + $0x8a] sm:$0xff]
        %v1900 = vld [vmem:[#allocation2 + $0x92] sm:$0xff]
        %v1901 = vld [vmem:[#allocation2 + $0xaa] sm:$0xff]
        %v1902 = vld [vmem:[#allocation2 + $0xb2] sm:$0xff]
        %v1903 = vld [vmem:[#allocation2 + $0xca] sm:$0xff]
        %v1904 = vld [vmem:[#allocation2 + $0xd2] sm:$0xff]
        %v1905 = vld [vmem:[#allocation2 + $0xea] sm:$0xff]
        %v1906 = vld [vmem:[#allocation2 + $0xf2] sm:$0xff]
        %v1907 = vld [vmem:[#allocation2 + $0x10a] sm:$0xff]
        %v1908 = vld [vmem:[#allocation2 + $0x112] sm:$0xff]
        %v1909 = vld [vmem:[#allocation2 + $0x12a] sm:$0xff]
        %v1910 = vld [vmem:[#allocation2 + $0x132] sm:$0xff]
        %v1911 = vld [vmem:[#allocation2 + $0x14a] sm:$0xff]
        %v1912 = vld [vmem:[#allocation2 + $0x152] sm:$0xff]
        %v1913 = vld [vmem:[#allocation2 + $0x16a] sm:$0xff]
        %v1914 = vld [vmem:[#allocation2 + $0x172] sm:$0xff]
        %v1915 = vld [vmem:[#allocation2 + $0x18a] sm:$0xff]
        %v1916 = vld [vmem:[#allocation2 + $0x192] sm:$0xff]
        %v1917 = vld [vmem:[#allocation2 + $0x1aa] sm:$0xff]
        %v1918 = vld [vmem:[#allocation2 + $0x1b2] sm:$0xff]
        %v1919 = vld [vmem:[#allocation2 + $0x1ca] sm:$0xff]
        %v1920 = vld [vmem:[#allocation2 + $0x1d2] sm:$0xff]
        %v1921 = vld [vmem:[#allocation2 + $0x1ea] sm:$0xff]
        %v1922 = vld [vmem:[#allocation2 + $0x1f2] sm:$0xff]
        %v1923 = vld [vmem:[#allocation2 + $0x20a] sm:$0xff]
        %v1924 = vld [vmem:[#allocation2 + $0x212] sm:$0xff]
        %v1925 = vld [vmem:[#allocation2 + $0x22a] sm:$0xff]
        %v1926 = vld [vmem:[#allocation2 + $0x232] sm:$0xff]
        %v1927 = vld [vmem:[#allocation2 + $0x24a] sm:$0xff]
        %v1928 = vld [vmem:[#allocation2 + $0x252] sm:$0xff]
        %v1929 = vld [vmem:[#allocation2 + $0x26a] sm:$0xff]
        %v1930 = vld [vmem:[#allocation2 + $0x272] sm:$0xff]
        %v1931 = vld [vmem:[#allocation2 + $0x28a] sm:$0xff]
        %v1932 = vld [vmem:[#allocation2 + $0x292] sm:$0xff]
        %v1933 = vld [vmem:[#allocation2 + $0x2aa] sm:$0xff]
        %v1934 = vld [vmem:[#allocation2 + $0x2b2] sm:$0xff]
        %v1935 = vld [vmem:[#allocation2 + $0x2ca] sm:$0xff]
        %v1936 = vld [vmem:[#allocation2 + $0x2d2] sm:$0xff]
        %v1937 = vld [vmem:[#allocation2 + $0x2ea] sm:$0xff]
        %v1938 = vld [vmem:[#allocation2 + $0x2f2] sm:$0xff]
        %v1939 = vld [vmem:[#allocation2 + $0x30a] sm:$0xff]
        %v1940 = vld [vmem:[#allocation2 + $0x312] sm:$0xff]
        %v1941 = vld [vmem:[#allocation2 + $0x32a] sm:$0xff]
        %v1942 = vld [vmem:[#allocation2 + $0x332] sm:$0xff]
        %v1943 = vld [vmem:[#allocation2 + $0x34a] sm:$0xff]
        %v1944 = vld [vmem:[#allocation2 + $0x352] sm:$0xff]
        %v1945 = vld [vmem:[#allocation2 + $0x36a] sm:$0xff]
        %v1946 = vld [vmem:[#allocation2 + $0x372] sm:$0xff]
        %v1947 = vmax.f32 %v1835, %v1891
        %v1948 = vmax.f32 %v1836, %v1892
        %v1949 = vmax.f32 %v1837, %v1893
        %v1950 = vmax.f32 %v1838, %v1894
        %v1951 = vmax.f32 %v1839, %v1895
        %v1952 = vmax.f32 %v1840, %v1896
        %v1953 = vmax.f32 %v1841, %v1897
        %v1954 = vmax.f32 %v1842, %v1898
        %v1955 = vmax.f32 %v1843, %v1899
        %v1956 = vmax.f32 %v1844, %v1900
        %v1957 = vmax.f32 %v1845, %v1901
        %v1958 = vmax.f32 %v1846, %v1902
        %v1959 = vmax.f32 %v1847, %v1903
        %v1960 = vmax.f32 %v1848, %v1904
        %v1961 = vmax.f32 %v1849, %v1905
        %v1962 = vmax.f32 %v1850, %v1906
        %v1963 = vmax.f32 %v1851, %v1907
        %v1964 = vmax.f32 %v1852, %v1908
        %v1965 = vmax.f32 %v1853, %v1909
        %v1966 = vmax.f32 %v1854, %v1910
        %v1967 = vmax.f32 %v1855, %v1911
        %v1968 = vmax.f32 %v1856, %v1912
        %v1969 = vmax.f32 %v1857, %v1913
        %v1970 = vmax.f32 %v1858, %v1914
        %v1971 = vmax.f32 %v1859, %v1915
        %v1972 = vmax.f32 %v1860, %v1916
        %v1973 = vmax.f32 %v1861, %v1917
        %v1974 = vmax.f32 %v1862, %v1918
        %v1975 = vmax.f32 %v1863, %v1919
        %v1976 = vmax.f32 %v1864, %v1920
        %v1977 = vmax.f32 %v1865, %v1921
        %v1978 = vmax.f32 %v1866, %v1922
        %v1979 = vmax.f32 %v1867, %v1923
        %v1980 = vmax.f32 %v1868, %v1924
        %v1981 = vmax.f32 %v1869, %v1925
        %v1982 = vmax.f32 %v1870, %v1926
        %v1983 = vmax.f32 %v1871, %v1927
        %v1984 = vmax.f32 %v1872, %v1928
        %v1985 = vmax.f32 %v1873, %v1929
        %v1986 = vmax.f32 %v1874, %v1930
        %v1987 = vmax.f32 %v1875, %v1931
        %v1988 = vmax.f32 %v1876, %v1932
        %v1989 = vmax.f32 %v1877, %v1933
        %v1990 = vmax.f32 %v1878, %v1934
        %v1991 = vmax.f32 %v1879, %v1935
        %v1992 = vmax.f32 %v1880, %v1936
        %v1993 = vmax.f32 %v1881, %v1937
        %v1994 = vmax.f32 %v1882, %v1938
        %v1995 = vmax.f32 %v1883, %v1939
        %v1996 = vmax.f32 %v1884, %v1940
        %v1997 = vmax.f32 %v1885, %v1941
        %v1998 = vmax.f32 %v1886, %v1942
        %v1999 = vmax.f32 %v1887, %v1943
        %v2000 = vmax.f32 %v1888, %v1944
        %v2001 = vmax.f32 %v1889, %v1945
        %v2002 = vmax.f32 %v1890, %v1946
        %v2003 = vmax.f32 %v1947, %v1949
        %v2004 = vmax.f32 %v1948, %v1950
        %v2005 = vmax.f32 %v1949, %v1951
        %v2006 = vmax.f32 %v1950, %v1952
        %v2007 = vmax.f32 %v1951, %v1953
        %v2008 = vmax.f32 %v1952, %v1954
        %v2009 = vmax.f32 %v1953, %v1955
        %v2010 = vmax.f32 %v1954, %v1956
        %v2011 = vmax.f32 %v1955, %v1957
        %v2012 = vmax.f32 %v1956, %v1958
        %v2013 = vmax.f32 %v1957, %v1959
        %v2014 = vmax.f32 %v1958, %v1960
        %v2015 = vmax.f32 %v1959, %v1961
        %v2016 = vmax.f32 %v1960, %v1962
        %v2017 = vmax.f32 %v1961, %v1963
        %v2018 = vmax.f32 %v1962, %v1964
        %v2019 = vmax.f32 %v1963, %v1965
        %v2020 = vmax.f32 %v1964, %v1966
        %v2021 = vmax.f32 %v1965, %v1967
        %v2022 = vmax.f32 %v1966, %v1968
        %v2023 = vmax.f32 %v1967, %v1969
        %v2024 = vmax.f32 %v1968, %v1970
        %v2025 = vmax.f32 %v1969, %v1971
        %v2026 = vmax.f32 %v1970, %v1972
        %v2027 = vmax.f32 %v1971, %v1973
        %v2028 = vmax.f32 %v1972, %v1974
        %v2029 = vmax.f32 %v1973, %v1975
        %v2030 = vmax.f32 %v1974, %v1976
        %v2031 = vmax.f32 %v1975, %v1977
        %v2032 = vmax.f32 %v1976, %v1978
        %v2033 = vmax.f32 %v1977, %v1979
        %v2034 = vmax.f32 %v1978, %v1980
        %v2035 = vmax.f32 %v1979, %v1981
        %v2036 = vmax.f32 %v1980, %v1982
        %v2037 = vmax.f32 %v1981, %v1983
        %v2038 = vmax.f32 %v1982, %v1984
        %v2039 = vmax.f32 %v1983, %v1985
        %v2040 = vmax.f32 %v1984, %v1986
        %v2041 = vmax.f32 %v1985, %v1987
        %v2042 = vmax.f32 %v1986, %v1988
        %v2043 = vmax.f32 %v1987, %v1989
        %v2044 = vmax.f32 %v1988, %v1990
        %v2045 = vmax.f32 %v1989, %v1991
        %v2046 = vmax.f32 %v1990, %v1992
        %v2047 = vmax.f32 %v1991, %v1993
        %v2048 = vmax.f32 %v1992, %v1994
        %v2049 = vmax.f32 %v1993, %v1995
        %v2050 = vmax.f32 %v1994, %v1996
        %v2051 = vmax.f32 %v2003, %v1951
        %v2052 = vmax.f32 %v2004, %v1952
        %v2053 = vmax.f32 %v2005, %v1953
        %v2054 = vmax.f32 %v2006, %v1954
        %v2055 = vmax.f32 %v2007, %v1955
        %v2056 = vmax.f32 %v2008, %v1956
        %v2057 = vmax.f32 %v2009, %v1957
        %v2058 = vmax.f32 %v2010, %v1958
        %v2059 = vmax.f32 %v2011, %v1959
        %v2060 = vmax.f32 %v2012, %v1960
        %v2061 = vmax.f32 %v2013, %v1961
        %v2062 = vmax.f32 %v2014, %v1962
        %v2063 = vmax.f32 %v2015, %v1963
        %v2064 = vmax.f32 %v2016, %v1964
        %v2065 = vmax.f32 %v2017, %v1965
        %v2066 = vmax.f32 %v2018, %v1966
        %v2067 = vmax.f32 %v2019, %v1967
        %v2068 = vmax.f32 %v2020, %v1968
        %v2069 = vmax.f32 %v2021, %v1969
        %v2070 = vmax.f32 %v2022, %v1970
        %v2071 = vmax.f32 %v2023, %v1971
        %v2072 = vmax.f32 %v2024, %v1972
        %v2073 = vmax.f32 %v2025, %v1973
        %v2074 = vmax.f32 %v2026, %v1974
        %v2075 = vmax.f32 %v2027, %v1975
        %v2076 = vmax.f32 %v2028, %v1976
        %v2077 = vmax.f32 %v2029, %v1977
        %v2078 = vmax.f32 %v2030, %v1978
        %v2079 = vmax.f32 %v2031, %v1979
        %v2080 = vmax.f32 %v2032, %v1980
        %v2081 = vmax.f32 %v2033, %v1981
        %v2082 = vmax.f32 %v2034, %v1982
        %v2083 = vmax.f32 %v2035, %v1983
        %v2084 = vmax.f32 %v2036, %v1984
        %v2085 = vmax.f32 %v2037, %v1985
        %v2086 = vmax.f32 %v2038, %v1986
        %v2087 = vmax.f32 %v2039, %v1987
        %v2088 = vmax.f32 %v2040, %v1988
        %v2089 = vmax.f32 %v2041, %v1989
        %v2090 = vmax.f32 %v2042, %v1990
        %v2091 = vmax.f32 %v2043, %v1991
        %v2092 = vmax.f32 %v2044, %v1992
        %v2093 = vmax.f32 %v2045, %v1993
        %v2094 = vmax.f32 %v2046, %v1994
        %v2095 = vmax.f32 %v2047, %v1995
        %v2096 = vmax.f32 %v2048, %v1996
        %v2097 = vmax.f32 %v2049, %v1997
        %v2098 = vmax.f32 %v2050, %v1998
        %v2099 = vmax.f32 %v2051, %v1953
        %v2100 = vmax.f32 %v2052, %v1954
        %v2101 = vmax.f32 %v2053, %v1955
        %v2102 = vmax.f32 %v2054, %v1956
        %v2103 = vmax.f32 %v2055, %v1957
        %v2104 = vmax.f32 %v2056, %v1958
        %v2105 = vmax.f32 %v2057, %v1959
        %v2106 = vmax.f32 %v2058, %v1960
        %v2107 = vmax.f32 %v2059, %v1961
        %v2108 = vmax.f32 %v2060, %v1962
        %v2109 = vmax.f32 %v2061, %v1963
        %v2110 = vmax.f32 %v2062, %v1964
        %v2111 = vmax.f32 %v2063, %v1965
        %v2112 = vmax.f32 %v2064, %v1966
        %v2113 = vmax.f32 %v2065, %v1967
        %v2114 = vmax.f32 %v2066, %v1968
        %v2115 = vmax.f32 %v2067, %v1969
        %v2116 = vmax.f32 %v2068, %v1970
        %v2117 = vmax.f32 %v2069, %v1971
        %v2118 = vmax.f32 %v2070, %v1972
        %v2119 = vmax.f32 %v2071, %v1973
        %v2120 = vmax.f32 %v2072, %v1974
        %v2121 = vmax.f32 %v2073, %v1975
        %v2122 = vmax.f32 %v2074, %v1976
        %v2123 = vmax.f32 %v2075, %v1977
        %v2124 = vmax.f32 %v2076, %v1978
        %v2125 = vmax.f32 %v2077, %v1979
        %v2126 = vmax.f32 %v2078, %v1980
        %v2127 = vmax.f32 %v2079, %v1981
        %v2128 = vmax.f32 %v2080, %v1982
        %v2129 = vmax.f32 %v2081, %v1983
        %v2130 = vmax.f32 %v2082, %v1984
        %v2131 = vmax.f32 %v2083, %v1985
        %v2132 = vmax.f32 %v2084, %v1986
        %v2133 = vmax.f32 %v2085, %v1987
        %v2134 = vmax.f32 %v2086, %v1988
        %v2135 = vmax.f32 %v2087, %v1989
        %v2136 = vmax.f32 %v2088, %v1990
        %v2137 = vmax.f32 %v2089, %v1991
        %v2138 = vmax.f32 %v2090, %v1992
        %v2139 = vmax.f32 %v2091, %v1993
        %v2140 = vmax.f32 %v2092, %v1994
        %v2141 = vmax.f32 %v2093, %v1995
        %v2142 = vmax.f32 %v2094, %v1996
        %v2143 = vmax.f32 %v2095, %v1997
        %v2144 = vmax.f32 %v2096, %v1998
        %v2145 = vmax.f32 %v2097, %v1999
        %v2146 = vmax.f32 %v2098, %v2000
        %v2147 = vmax.f32 %v2099, %v1955
        %v2148 = vmax.f32 %v2100, %v1956
        %v2149 = vmax.f32 %v2101, %v1957
        %v2150 = vmax.f32 %v2102, %v1958
        %v2151 = vmax.f32 %v2103, %v1959
        %v2152 = vmax.f32 %v2104, %v1960
        %v2153 = vmax.f32 %v2105, %v1961
        %v2154 = vmax.f32 %v2106, %v1962
        %v2155 = vmax.f32 %v2107, %v1963
        %v2156 = vmax.f32 %v2108, %v1964
        %v2157 = vmax.f32 %v2109, %v1965
        %v2158 = vmax.f32 %v2110, %v1966
        %v2159 = vmax.f32 %v2111, %v1967
        %v2160 = vmax.f32 %v2112, %v1968
        %v2161 = vmax.f32 %v2113, %v1969
        %v2162 = vmax.f32 %v2114, %v1970
        %v2163 = vmax.f32 %v2115, %v1971
        %v2164 = vmax.f32 %v2116, %v1972
        %v2165 = vmax.f32 %v2117, %v1973
        %v2166 = vmax.f32 %v2118, %v1974
        %v2167 = vmax.f32 %v2119, %v1975
        %v2168 = vmax.f32 %v2120, %v1976
        %v2169 = vmax.f32 %v2121, %v1977
        %v2170 = vmax.f32 %v2122, %v1978
        %v2171 = vmax.f32 %v2123, %v1979
        %v2172 = vmax.f32 %v2124, %v1980
        %v2173 = vmax.f32 %v2125, %v1981
        %v2174 = vmax.f32 %v2126, %v1982
        %v2175 = vmax.f32 %v2127, %v1983
        %v2176 = vmax.f32 %v2128, %v1984
        %v2177 = vmax.f32 %v2129, %v1985
        %v2178 = vmax.f32 %v2130, %v1986
        %v2179 = vmax.f32 %v2131, %v1987
        %v2180 = vmax.f32 %v2132, %v1988
        %v2181 = vmax.f32 %v2133, %v1989
        %v2182 = vmax.f32 %v2134, %v1990
        %v2183 = vmax.f32 %v2135, %v1991
        %v2184 = vmax.f32 %v2136, %v1992
        %v2185 = vmax.f32 %v2137, %v1993
        %v2186 = vmax.f32 %v2138, %v1994
        %v2187 = vmax.f32 %v2139, %v1995
        %v2188 = vmax.f32 %v2140, %v1996
        %v2189 = vmax.f32 %v2141, %v1997
        %v2190 = vmax.f32 %v2142, %v1998
        %v2191 = vmax.f32 %v2143, %v1999
        %v2192 = vmax.f32 %v2144, %v2000
        %v2193 = vmax.f32 %v2145, %v2001
        %v2194 = vmax.f32 %v2146, %v2002
        %v2195 = vld [vmem:[%s3 + $0x2] sm:$0x3]
        %v2197 = vsel %vm1442, %v2155, 0
        %v2200 = vsel %vm1442, %v2156, 0
        %v2203 = vsel %vm1442, %v2157, 0
        %v2206 = vsel %vm1442, %v2158, 0
        %v2209 = vsel %vm1442, %v2159, 0
        %v2212 = vsel %vm1442, %v2160, 0
        %v2215 = vsel %vm1442, %v2161, 0
        %v2218 = vsel %vm1442, %v2162, 0
        %v2221 = vsel %vm1442, %v2163, 0
        %v2224 = vsel %vm1442, %v2164, 0
        %v2227 = vsel %vm1442, %v2165, 0
        %v2230 = vsel %vm1442, %v2166, 0
        %v2233 = vsel %vm1442, %v2167, 0
        %v2236 = vsel %vm1442, %v2168, 0
        %v2239 = vsel %vm1442, %v2169, 0
        %v2242 = vsel %vm1442, %v2170, 0
        %v2245 = vsel %vm1442, %v2171, 0
        %v2248 = vsel %vm1442, %v2172, 0
        %v2251 = vsel %vm1442, %v2173, 0
        %v2254 = vsel %vm1442, %v2174, 0
        %v2257 = vsel %vm1442, %v2175, 0
        %v2260 = vsel %vm1442, %v2176, 0
        %v2263 = vsel %vm1442, %v2177, 0
        %v2266 = vsel %vm1442, %v2178, 0
        %v2269 = vsel %vm1442, %v2179, 0
        %v2272 = vsel %vm1442, %v2180, 0
        %v2275 = vsel %vm1442, %v2181, 0
        %v2278 = vsel %vm1442, %v2182, 0
        %v2281 = vsel %vm1442, %v2183, 0
        %v2284 = vsel %vm1442, %v2184, 0
        %v2287 = vsel %vm1442, %v2185, 0
        %v2290 = vsel %vm1442, %v2186, 0
        %vm2292 = vcmask 1041408
        %v2294 = vsel %vm2292, %v2195, 0
        %2296 = vmatprep.subr.mxu0 0.0
        %2297 = vmatpush1.msra.mxu0 0.0
        %2298 = vmatprep.subr.mxu0 0.0
        %2299 = vmatpush1.msra.mxu0 0.0
        %2300 = vmatprep.subr.mxu0 0.0
        %2301 = vmatpush1.msra.mxu0 0.0
        %2302 = vmatprep.subr.mxu0 0.0
        %2303 = vmatpush1.msra.mxu0 0.0
        %2304 = vmatprep.subr.mxu0 0.0
        %2305 = vmatpush1.msra.mxu0 0.0
        %2306 = vmatprep.subr.mxu0 0.0
        %2307 = vmatpush1.msra.mxu0 0.0
        %2308 = vmatprep.subr.mxu0 0.0
        %2309 = vmatpush1.msra.mxu0 0.0
        %2310 = vmatprep.subr.mxu0 0.0
        %2311 = vmatpush1.msra.mxu0 0.0
        %2312 = vmatprep.subr.mxu0 0.0
        %2313 = vmatpush1.msra.mxu0 0.0
        %2314 = vmatprep.subr.mxu0 0.0
        %2315 = vmatpush1.msra.mxu0 0.0
        %2316 = vmatprep.subr.mxu0 0.0
        %2317 = vmatpush1.msra.mxu0 0.0
        %2318 = vmatprep.subr.mxu0 0.0
        %2319 = vmatpush1.msra.mxu0 0.0
        %2320 = vmatprep.subr.mxu0 0.0
        %2321 = vmatpush1.msra.mxu0 0.0
        %2322 = vmatprep.subr.mxu0 0.0
        %2323 = vmatpush1.msra.mxu0 0.0
        %2324 = vmatprep.subr.mxu0 0.0
        %2325 = vmatpush1.msra.mxu0 0.0
        %2326 = vmatprep.subr.mxu0 0.0
        %2327 = vmatpush1.msra.mxu0 %v2294
        %2328 = vmatprep.subr.mxu0 0.0
        %2329 = vmatpush2.msra.mxu0 0.0
        %2330 = vmatprep.subr.mxu0 0.0
        %2331 = vmatpush2.msra.mxu0 0.0
        %2332 = vmatprep.subr.mxu0 0.0
        %2333 = vmatpush2.msra.mxu0 0.0
        %2334 = vmatprep.subr.mxu0 0.0
        %2335 = vmatpush2.msra.mxu0 0.0
        %2336 = vmatprep.subr.mxu0 0.0
        %2337 = vmatpush2.msra.mxu0 0.0
        %2338 = vmatprep.subr.mxu0 0.0
        %2339 = vmatpush2.msra.mxu0 0.0
        %2340 = vmatprep.subr.mxu0 0.0
        %2341 = vmatpush2.msra.mxu0 0.0
        %2342 = vmatprep.subr.mxu0 0.0
        %2343 = vmatpush2.msra.mxu0 0.0
        %2344 = vmatprep.subr.mxu0 0.0
        %2345 = vmatpush2.msra.mxu0 0.0
        %2346 = vmatprep.subr.mxu0 0.0
        %2347 = vmatpush2.msra.mxu0 0.0
        %2348 = vmatprep.subr.mxu0 0.0
        %2349 = vmatpush2.msra.mxu0 0.0
        %2350 = vmatprep.subr.mxu0 0.0
        %2351 = vmatpush2.msra.mxu0 0.0
        %2352 = vmatprep.subr.mxu0 0.0
        %2353 = vmatpush2.msra.mxu0 0.0
        %2354 = vmatprep.subr.mxu0 0.0
        %2355 = vmatpush2.msra.mxu0 0.0
        %2356 = vmatprep.subr.mxu0 0.0
        %2357 = vmatpush2.msra.mxu0 0.0
        %2358 = vmatprep.subr.mxu0 0.0
        %2359 = vmatpush2.msra.mxu0 0.0
        %2360 = vmatprep.mubr.f32.mxu0 0.0
        %2361 = vmatmul.mubr.f32.gmra.mxu0 %v2197
        %v2362 = vpop.f32.mrf.mxu0
        %v2363 = vadd.f32 0.0, %v2362
        %v2364 = vpop.f32.mrf.mxu0
        %2365 = vmatprep.mubr.f32.mxu0 0.0
        %2366 = vmatmul.mubr.f32.gmra.mxu0 %v2200
        %v2367 = vpop.f32.mrf.mxu0
        %v2368 = vadd.f32 0.0, %v2367
        %v2369 = vpop.f32.mrf.mxu0
        %2370 = vmatprep.mubr.f32.mxu0 0.0
        %2371 = vmatmul.mubr.f32.gmra.mxu0 %v2203
        %v2372 = vpop.f32.mrf.mxu0
        %v2373 = vadd.f32 0.0, %v2372
        %v2374 = vpop.f32.mrf.mxu0
        %2375 = vmatprep.mubr.f32.mxu0 0.0
        %2376 = vmatmul.mubr.f32.gmra.mxu0 %v2206
        %v2377 = vpop.f32.mrf.mxu0
        %v2378 = vadd.f32 0.0, %v2377
        %v2379 = vpop.f32.mrf.mxu0
        %2380 = vmatprep.mubr.f32.mxu0 0.0
        %2381 = vmatmul.mubr.f32.gmra.mxu0 %v2209
        %v2382 = vpop.f32.mrf.mxu0
        %v2383 = vadd.f32 0.0, %v2382
        %v2384 = vpop.f32.mrf.mxu0
        %2385 = vmatprep.mubr.f32.mxu0 0.0
        %2386 = vmatmul.mubr.f32.gmra.mxu0 %v2212
        %v2387 = vpop.f32.mrf.mxu0
        %v2388 = vadd.f32 0.0, %v2387
        %v2389 = vpop.f32.mrf.mxu0
        %2390 = vmatprep.mubr.f32.mxu0 0.0
        %2391 = vmatmul.mubr.f32.gmra.mxu0 %v2215
        %v2392 = vpop.f32.mrf.mxu0
        %v2393 = vadd.f32 0.0, %v2392
        %v2394 = vpop.f32.mrf.mxu0
        %2395 = vmatprep.mubr.f32.mxu0 0.0
        %2396 = vmatmul.mubr.f32.gmra.mxu0 %v2218
        %v2397 = vpop.f32.mrf.mxu0
        %v2398 = vadd.f32 0.0, %v2397
        %v2399 = vpop.f32.mrf.mxu0
        %2400 = vmatprep.mubr.f32.mxu0 0.0
        %2401 = vmatmul.mubr.f32.gmra.mxu0 %v2221
        %v2402 = vpop.f32.mrf.mxu0
        %v2403 = vadd.f32 0.0, %v2402
        %v2404 = vpop.f32.mrf.mxu0
        %2405 = vmatprep.mubr.f32.mxu0 0.0
        %2406 = vmatmul.mubr.f32.gmra.mxu0 %v2224
        %v2407 = vpop.f32.mrf.mxu0
        %v2408 = vadd.f32 0.0, %v2407
        %v2409 = vpop.f32.mrf.mxu0
        %2410 = vmatprep.mubr.f32.mxu0 0.0
        %2411 = vmatmul.mubr.f32.gmra.mxu0 %v2227
        %v2412 = vpop.f32.mrf.mxu0
        %v2413 = vadd.f32 0.0, %v2412
        %v2414 = vpop.f32.mrf.mxu0
        %2415 = vmatprep.mubr.f32.mxu0 0.0
        %2416 = vmatmul.mubr.f32.gmra.mxu0 %v2230
        %v2417 = vpop.f32.mrf.mxu0
        %v2418 = vadd.f32 0.0, %v2417
        %v2419 = vpop.f32.mrf.mxu0
        %2420 = vmatprep.mubr.f32.mxu0 0.0
        %2421 = vmatmul.mubr.f32.gmra.mxu0 %v2233
        %v2422 = vpop.f32.mrf.mxu0
        %v2423 = vadd.f32 0.0, %v2422
        %v2424 = vpop.f32.mrf.mxu0
        %2425 = vmatprep.mubr.f32.mxu0 0.0
        %2426 = vmatmul.mubr.f32.gmra.mxu0 %v2236
        %v2427 = vpop.f32.mrf.mxu0
        %v2428 = vadd.f32 0.0, %v2427
        %v2429 = vpop.f32.mrf.mxu0
        %2430 = vmatprep.mubr.f32.mxu0 0.0
        %2431 = vmatmul.mubr.f32.gmra.mxu0 %v2239
        %v2432 = vpop.f32.mrf.mxu0
        %v2433 = vadd.f32 0.0, %v2432
        %v2434 = vpop.f32.mrf.mxu0
        %2435 = vmatprep.mubr.f32.mxu0 0.0
        %2436 = vmatmul.mubr.f32.gmra.mxu0 %v2242
        %v2437 = vpop.f32.mrf.mxu0
        %v2438 = vadd.f32 0.0, %v2437
        %v2439 = vpop.f32.mrf.mxu0
        %2440 = vmatprep.mubr.f32.mxu0 0.0
        %2441 = vmatmul.mubr.f32.gmra.mxu0 %v2245
        %v2442 = vpop.f32.mrf.mxu0
        %v2443 = vadd.f32 0.0, %v2442
        %v2444 = vpop.f32.mrf.mxu0
        %2445 = vmatprep.mubr.f32.mxu0 0.0
        %2446 = vmatmul.mubr.f32.gmra.mxu0 %v2248
        %v2447 = vpop.f32.mrf.mxu0
        %v2448 = vadd.f32 0.0, %v2447
        %v2449 = vpop.f32.mrf.mxu0
        %2450 = vmatprep.mubr.f32.mxu0 0.0
        %2451 = vmatmul.mubr.f32.gmra.mxu0 %v2251
        %v2452 = vpop.f32.mrf.mxu0
        %v2453 = vadd.f32 0.0, %v2452
        %v2454 = vpop.f32.mrf.mxu0
        %2455 = vmatprep.mubr.f32.mxu0 0.0
        %2456 = vmatmul.mubr.f32.gmra.mxu0 %v2254
        %v2457 = vpop.f32.mrf.mxu0
        %v2458 = vadd.f32 0.0, %v2457
        %v2459 = vpop.f32.mrf.mxu0
        %2460 = vmatprep.mubr.f32.mxu0 0.0
        %2461 = vmatmul.mubr.f32.gmra.mxu0 %v2257
        %v2462 = vpop.f32.mrf.mxu0
        %v2463 = vadd.f32 0.0, %v2462
        %v2464 = vpop.f32.mrf.mxu0
        %2465 = vmatprep.mubr.f32.mxu0 0.0
        %2466 = vmatmul.mubr.f32.gmra.mxu0 %v2260
        %v2467 = vpop.f32.mrf.mxu0
        %v2468 = vadd.f32 0.0, %v2467
        %v2469 = vpop.f32.mrf.mxu0
        %2470 = vmatprep.mubr.f32.mxu0 0.0
        %2471 = vmatmul.mubr.f32.gmra.mxu0 %v2263
        %v2472 = vpop.f32.mrf.mxu0
        %v2473 = vadd.f32 0.0, %v2472
        %v2474 = vpop.f32.mrf.mxu0
        %2475 = vmatprep.mubr.f32.mxu0 0.0
        %2476 = vmatmul.mubr.f32.gmra.mxu0 %v2266
        %v2477 = vpop.f32.mrf.mxu0
        %v2478 = vadd.f32 0.0, %v2477
        %v2479 = vpop.f32.mrf.mxu0
        %2480 = vmatprep.mubr.f32.mxu0 0.0
        %2481 = vmatmul.mubr.f32.gmra.mxu0 %v2269
        %v2482 = vpop.f32.mrf.mxu0
        %v2483 = vadd.f32 0.0, %v2482
        %v2484 = vpop.f32.mrf.mxu0
        %2485 = vmatprep.mubr.f32.mxu0 0.0
        %2486 = vmatmul.mubr.f32.gmra.mxu0 %v2272
        %v2487 = vpop.f32.mrf.mxu0
        %v2488 = vadd.f32 0.0, %v2487
        %v2489 = vpop.f32.mrf.mxu0
        %2490 = vmatprep.mubr.f32.mxu0 0.0
        %2491 = vmatmul.mubr.f32.gmra.mxu0 %v2275
        %v2492 = vpop.f32.mrf.mxu0
        %v2493 = vadd.f32 0.0, %v2492
        %v2494 = vpop.f32.mrf.mxu0
        %2495 = vmatprep.mubr.f32.mxu0 0.0
        %2496 = vmatmul.mubr.f32.gmra.mxu0 %v2278
        %v2497 = vpop.f32.mrf.mxu0
        %v2498 = vadd.f32 0.0, %v2497
        %v2499 = vpop.f32.mrf.mxu0
        %2500 = vmatprep.mubr.f32.mxu0 0.0
        %2501 = vmatmul.mubr.f32.gmra.mxu0 %v2281
        %v2502 = vpop.f32.mrf.mxu0
        %v2503 = vadd.f32 0.0, %v2502
        %v2504 = vpop.f32.mrf.mxu0
        %2505 = vmatprep.mubr.f32.mxu0 0.0
        %2506 = vmatmul.mubr.f32.gmra.mxu0 %v2284
        %v2507 = vpop.f32.mrf.mxu0
        %v2508 = vadd.f32 0.0, %v2507
        %v2509 = vpop.f32.mrf.mxu0
        %2510 = vmatprep.mubr.f32.mxu0 0.0
        %2511 = vmatmul.mubr.f32.gmra.mxu0 %v2287
        %v2512 = vpop.f32.mrf.mxu0
        %v2513 = vadd.f32 0.0, %v2512
        %v2514 = vpop.f32.mrf.mxu0
        %2515 = vmatprep.mubr.f32.mxu0 0.0
        %2516 = vmatmul.mubr.f32.gmra.mxu0 %v2290
        %v2517 = vpop.f32.mrf.mxu0
        %v2518 = vadd.f32 0.0, %v2517
        %v2519 = vpop.f32.mrf.mxu0
        %2520 = vdwg.mxu0
        %v2522 = vsel %vm1442, %v1397, 0
        %v2525 = vsel %vm1442, %v1398, 0
        %v2528 = vsel %vm1442, %v1399, 0
        %v2531 = vsel %vm1442, %v1400, 0
        %v2534 = vsel %vm1442, %v1401, 0
        %v2537 = vsel %vm1442, %v1402, 0
        %v2540 = vsel %vm1442, %v1403, 0
        %v2543 = vsel %vm1442, %v1404, 0
        %v2546 = vsel %vm1442, %v1405, 0
        %v2549 = vsel %vm1442, %v1406, 0
        %v2552 = vsel %vm1442, %v1407, 0
        %v2555 = vsel %vm1442, %v1408, 0
        %v2558 = vsel %vm1442, %v1409, 0
        %v2561 = vsel %vm1442, %v1410, 0
        %v2564 = vsel %vm1442, %v1411, 0
        %v2567 = vsel %vm1442, %v1412, 0
        %v2570 = vsel %vm1442, %v1413, 0
        %v2573 = vsel %vm1442, %v1414, 0
        %v2576 = vsel %vm1442, %v1415, 0
        %v2579 = vsel %vm1442, %v1416, 0
        %v2582 = vsel %vm1442, %v1417, 0
        %v2585 = vsel %vm1442, %v1418, 0
        %v2588 = vsel %vm1442, %v1419, 0
        %v2591 = vsel %vm1442, %v1420, 0
        %v2594 = vsel %vm1442, %v1421, 0
        %v2597 = vsel %vm1442, %v1422, 0
        %v2600 = vsel %vm1442, %v1423, 0
        %v2603 = vsel %vm1442, %v1424, 0
        %v2606 = vsel %vm1442, %v1425, 0
        %v2609 = vsel %vm1442, %v1426, 0
        %v2612 = vsel %vm1442, %v1427, 0
        %v2615 = vsel %vm1442, %v1428, 0
        %v2618 = vsel %vm2292, %v1441, 0
        %2620 = vmatprep.subr.mxu0 0.0
        %2621 = vmatpush1.msra.mxu0 0.0
        %2622 = vmatprep.subr.mxu0 0.0
        %2623 = vmatpush1.msra.mxu0 0.0
        %2624 = vmatprep.subr.mxu0 0.0
        %2625 = vmatpush1.msra.mxu0 0.0
        %2626 = vmatprep.subr.mxu0 0.0
        %2627 = vmatpush1.msra.mxu0 0.0
        %2628 = vmatprep.subr.mxu0 0.0
        %2629 = vmatpush1.msra.mxu0 0.0
        %2630 = vmatprep.subr.mxu0 0.0
        %2631 = vmatpush1.msra.mxu0 0.0
        %2632 = vmatprep.subr.mxu0 0.0
        %2633 = vmatpush1.msra.mxu0 0.0
        %2634 = vmatprep.subr.mxu0 0.0
        %2635 = vmatpush1.msra.mxu0 0.0
        %2636 = vmatprep.subr.mxu0 0.0
        %2637 = vmatpush1.msra.mxu0 0.0
        %2638 = vmatprep.subr.mxu0 0.0
        %2639 = vmatpush1.msra.mxu0 0.0
        %2640 = vmatprep.subr.mxu0 0.0
        %2641 = vmatpush1.msra.mxu0 0.0
        %2642 = vmatprep.subr.mxu0 0.0
        %2643 = vmatpush1.msra.mxu0 0.0
        %2644 = vmatprep.subr.mxu0 0.0
        %2645 = vmatpush1.msra.mxu0 0.0
        %2646 = vmatprep.subr.mxu0 0.0
        %2647 = vmatpush1.msra.mxu0 0.0
        %2648 = vmatprep.subr.mxu0 0.0
        %2649 = vmatpush1.msra.mxu0 0.0
        %2650 = vmatprep.subr.mxu0 0.0
        %2651 = vmatpush1.msra.mxu0 %v2618
        %2652 = vmatprep.subr.mxu0 0.0
        %2653 = vmatpush2.msra.mxu0 0.0
        %2654 = vmatprep.subr.mxu0 0.0
        %2655 = vmatpush2.msra.mxu0 0.0
        %2656 = vmatprep.subr.mxu0 0.0
        %2657 = vmatpush2.msra.mxu0 0.0
        %2658 = vmatprep.subr.mxu0 0.0
        %2659 = vmatpush2.msra.mxu0 0.0
        %2660 = vmatprep.subr.mxu0 0.0
        %2661 = vmatpush2.msra.mxu0 0.0
        %2662 = vmatprep.subr.mxu0 0.0
        %2663 = vmatpush2.msra.mxu0 0.0
        %2664 = vmatprep.subr.mxu0 0.0
        %2665 = vmatpush2.msra.mxu0 0.0
        %2666 = vmatprep.subr.mxu0 0.0
        %2667 = vmatpush2.msra.mxu0 0.0
        %2668 = vmatprep.subr.mxu0 0.0
        %2669 = vmatpush2.msra.mxu0 0.0
        %2670 = vmatprep.subr.mxu0 0.0
        %2671 = vmatpush2.msra.mxu0 0.0
        %2672 = vmatprep.subr.mxu0 0.0
        %2673 = vmatpush2.msra.mxu0 0.0
        %2674 = vmatprep.subr.mxu0 0.0
        %2675 = vmatpush2.msra.mxu0 0.0
        %2676 = vmatprep.subr.mxu0 0.0
        %2677 = vmatpush2.msra.mxu0 0.0
        %2678 = vmatprep.subr.mxu0 0.0
        %2679 = vmatpush2.msra.mxu0 0.0
        %2680 = vmatprep.subr.mxu0 0.0
        %2681 = vmatpush2.msra.mxu0 0.0
        %2682 = vmatprep.subr.mxu0 0.0
        %2683 = vmatpush2.msra.mxu0 0.0
        %2684 = vmatprep.mubr.f32.mxu0 0.0
        %2685 = vmatmul.mubr.f32.gmra.mxu0 %v2522
        %v2686 = vpop.f32.mrf.mxu0
        %v2687 = vadd.f32 %v2363, %v2686
        %v2688 = vpop.f32.mrf.mxu0
        %2689 = vmatprep.mubr.f32.mxu0 0.0
        %2690 = vmatmul.mubr.f32.gmra.mxu0 %v2525
        %v2691 = vpop.f32.mrf.mxu0
        %v2692 = vadd.f32 %v2368, %v2691
        %v2693 = vpop.f32.mrf.mxu0
        %2694 = vmatprep.mubr.f32.mxu0 0.0
        %2695 = vmatmul.mubr.f32.gmra.mxu0 %v2528
        %v2696 = vpop.f32.mrf.mxu0
        %v2697 = vadd.f32 %v2373, %v2696
        %v2698 = vpop.f32.mrf.mxu0
        %2699 = vmatprep.mubr.f32.mxu0 0.0
        %2700 = vmatmul.mubr.f32.gmra.mxu0 %v2531
        %v2701 = vpop.f32.mrf.mxu0
        %v2702 = vadd.f32 %v2378, %v2701
        %v2703 = vpop.f32.mrf.mxu0
        %2704 = vmatprep.mubr.f32.mxu0 0.0
        %2705 = vmatmul.mubr.f32.gmra.mxu0 %v2534
        %v2706 = vpop.f32.mrf.mxu0
        %v2707 = vadd.f32 %v2383, %v2706
        %v2708 = vpop.f32.mrf.mxu0
        %2709 = vmatprep.mubr.f32.mxu0 0.0
        %2710 = vmatmul.mubr.f32.gmra.mxu0 %v2537
        %v2711 = vpop.f32.mrf.mxu0
        %v2712 = vadd.f32 %v2388, %v2711
        %v2713 = vpop.f32.mrf.mxu0
        %2714 = vmatprep.mubr.f32.mxu0 0.0
        %2715 = vmatmul.mubr.f32.gmra.mxu0 %v2540
        %v2716 = vpop.f32.mrf.mxu0
        %v2717 = vadd.f32 %v2393, %v2716
        %v2718 = vpop.f32.mrf.mxu0
        %2719 = vmatprep.mubr.f32.mxu0 0.0
        %2720 = vmatmul.mubr.f32.gmra.mxu0 %v2543
        %v2721 = vpop.f32.mrf.mxu0
        %v2722 = vadd.f32 %v2398, %v2721
        %v2723 = vpop.f32.mrf.mxu0
        %2724 = vmatprep.mubr.f32.mxu0 0.0
        %2725 = vmatmul.mubr.f32.gmra.mxu0 %v2546
        %v2726 = vpop.f32.mrf.mxu0
        %v2727 = vadd.f32 %v2403, %v2726
        %v2728 = vpop.f32.mrf.mxu0
        %2729 = vmatprep.mubr.f32.mxu0 0.0
        %2730 = vmatmul.mubr.f32.gmra.mxu0 %v2549
        %v2731 = vpop.f32.mrf.mxu0
        %v2732 = vadd.f32 %v2408, %v2731
        %v2733 = vpop.f32.mrf.mxu0
        %2734 = vmatprep.mubr.f32.mxu0 0.0
        %2735 = vmatmul.mubr.f32.gmra.mxu0 %v2552
        %v2736 = vpop.f32.mrf.mxu0
        %v2737 = vadd.f32 %v2413, %v2736
        %v2738 = vpop.f32.mrf.mxu0
        %2739 = vmatprep.mubr.f32.mxu0 0.0
        %2740 = vmatmul.mubr.f32.gmra.mxu0 %v2555
        %v2741 = vpop.f32.mrf.mxu0
        %v2742 = vadd.f32 %v2418, %v2741
        %v2743 = vpop.f32.mrf.mxu0
        %2744 = vmatprep.mubr.f32.mxu0 0.0
        %2745 = vmatmul.mubr.f32.gmra.mxu0 %v2558
        %v2746 = vpop.f32.mrf.mxu0
        %v2747 = vadd.f32 %v2423, %v2746
        %v2748 = vpop.f32.mrf.mxu0
        %2749 = vmatprep.mubr.f32.mxu0 0.0
        %2750 = vmatmul.mubr.f32.gmra.mxu0 %v2561
        %v2751 = vpop.f32.mrf.mxu0
        %v2752 = vadd.f32 %v2428, %v2751
        %v2753 = vpop.f32.mrf.mxu0
        %2754 = vmatprep.mubr.f32.mxu0 0.0
        %2755 = vmatmul.mubr.f32.gmra.mxu0 %v2564
        %v2756 = vpop.f32.mrf.mxu0
        %v2757 = vadd.f32 %v2433, %v2756
        %v2758 = vpop.f32.mrf.mxu0
        %2759 = vmatprep.mubr.f32.mxu0 0.0
        %2760 = vmatmul.mubr.f32.gmra.mxu0 %v2567
        %v2761 = vpop.f32.mrf.mxu0
        %v2762 = vadd.f32 %v2438, %v2761
        %v2763 = vpop.f32.mrf.mxu0
        %2764 = vmatprep.mubr.f32.mxu0 0.0
        %2765 = vmatmul.mubr.f32.gmra.mxu0 %v2570
        %v2766 = vpop.f32.mrf.mxu0
        %v2767 = vadd.f32 %v2443, %v2766
        %v2768 = vpop.f32.mrf.mxu0
        %2769 = vmatprep.mubr.f32.mxu0 0.0
        %2770 = vmatmul.mubr.f32.gmra.mxu0 %v2573
        %v2771 = vpop.f32.mrf.mxu0
        %v2772 = vadd.f32 %v2448, %v2771
        %v2773 = vpop.f32.mrf.mxu0
        %2774 = vmatprep.mubr.f32.mxu0 0.0
        %2775 = vmatmul.mubr.f32.gmra.mxu0 %v2576
        %v2776 = vpop.f32.mrf.mxu0
        %v2777 = vadd.f32 %v2453, %v2776
        %v2778 = vpop.f32.mrf.mxu0
        %2779 = vmatprep.mubr.f32.mxu0 0.0
        %2780 = vmatmul.mubr.f32.gmra.mxu0 %v2579
        %v2781 = vpop.f32.mrf.mxu0
        %v2782 = vadd.f32 %v2458, %v2781
        %v2783 = vpop.f32.mrf.mxu0
        %2784 = vmatprep.mubr.f32.mxu0 0.0
        %2785 = vmatmul.mubr.f32.gmra.mxu0 %v2582
        %v2786 = vpop.f32.mrf.mxu0
        %v2787 = vadd.f32 %v2463, %v2786
        %v2788 = vpop.f32.mrf.mxu0
        %2789 = vmatprep.mubr.f32.mxu0 0.0
        %2790 = vmatmul.mubr.f32.gmra.mxu0 %v2585
        %v2791 = vpop.f32.mrf.mxu0
        %v2792 = vadd.f32 %v2468, %v2791
        %v2793 = vpop.f32.mrf.mxu0
        %2794 = vmatprep.mubr.f32.mxu0 0.0
        %2795 = vmatmul.mubr.f32.gmra.mxu0 %v2588
        %v2796 = vpop.f32.mrf.mxu0
        %v2797 = vadd.f32 %v2473, %v2796
        %v2798 = vpop.f32.mrf.mxu0
        %2799 = vmatprep.mubr.f32.mxu0 0.0
        %2800 = vmatmul.mubr.f32.gmra.mxu0 %v2591
        %v2801 = vpop.f32.mrf.mxu0
        %v2802 = vadd.f32 %v2478, %v2801
        %v2803 = vpop.f32.mrf.mxu0
        %2804 = vmatprep.mubr.f32.mxu0 0.0
        %2805 = vmatmul.mubr.f32.gmra.mxu0 %v2594
        %v2806 = vpop.f32.mrf.mxu0
        %v2807 = vadd.f32 %v2483, %v2806
        %v2808 = vpop.f32.mrf.mxu0
        %2809 = vmatprep.mubr.f32.mxu0 0.0
        %2810 = vmatmul.mubr.f32.gmra.mxu0 %v2597
        %v2811 = vpop.f32.mrf.mxu0
        %v2812 = vadd.f32 %v2488, %v2811
        %v2813 = vpop.f32.mrf.mxu0
        %2814 = vmatprep.mubr.f32.mxu0 0.0
        %2815 = vmatmul.mubr.f32.gmra.mxu0 %v2600
        %v2816 = vpop.f32.mrf.mxu0
        %v2817 = vadd.f32 %v2493, %v2816
        %v2818 = vpop.f32.mrf.mxu0
        %2819 = vmatprep.mubr.f32.mxu0 0.0
        %2820 = vmatmul.mubr.f32.gmra.mxu0 %v2603
        %v2821 = vpop.f32.mrf.mxu0
        %v2822 = vadd.f32 %v2498, %v2821
        %v2823 = vpop.f32.mrf.mxu0
        %2824 = vmatprep.mubr.f32.mxu0 0.0
        %2825 = vmatmul.mubr.f32.gmra.mxu0 %v2606
        %v2826 = vpop.f32.mrf.mxu0
        %v2827 = vadd.f32 %v2503, %v2826
        %v2828 = vpop.f32.mrf.mxu0
        %2829 = vmatprep.mubr.f32.mxu0 0.0
        %2830 = vmatmul.mubr.f32.gmra.mxu0 %v2609
        %v2831 = vpop.f32.mrf.mxu0
        %v2832 = vadd.f32 %v2508, %v2831
        %v2833 = vpop.f32.mrf.mxu0
        %2834 = vmatprep.mubr.f32.mxu0 0.0
        %2835 = vmatmul.mubr.f32.gmra.mxu0 %v2612
        %v2836 = vpop.f32.mrf.mxu0
        %v2837 = vadd.f32 %v2513, %v2836
        %v2838 = vpop.f32.mrf.mxu0
        %2839 = vmatprep.mubr.f32.mxu0 0.0
        %2840 = vmatmul.mubr.f32.gmra.mxu0 %v2615
        %v2841 = vpop.f32.mrf.mxu0
        %v2842 = vadd.f32 %v2518, %v2841
        %v2843 = vpop.f32.mrf.mxu0
        %2844 = vdwg.mxu0
        %2845 = vst.msk [vmem:[#allocation2 + $0x8] sm:$0xff] %vm1442, %v2147
        %2846 = vst.msk [vmem:[#allocation2 + $0x10] sm:$0xff] %vm1442, %v2148
        %2847 = vst.msk [vmem:[#allocation2 + $0x28] sm:$0xff] %vm1442, %v2149
        %2848 = vst.msk [vmem:[#allocation2 + $0x30] sm:$0xff] %vm1442, %v2150
        %2849 = vst.msk [vmem:[#allocation2 + $0x48] sm:$0xff] %vm1442, %v2151
        %2850 = vst.msk [vmem:[#allocation2 + $0x50] sm:$0xff] %vm1442, %v2152
        %2851 = vst.msk [vmem:[#allocation2 + $0x68] sm:$0xff] %vm1442, %v2153
        %2852 = vst.msk [vmem:[#allocation2 + $0x70] sm:$0xff] %vm1442, %v2154
        %2853 = vst.msk [vmem:[#allocation2 + $0x88] sm:$0xff] %vm1442, %v2155
        %2854 = vst.msk [vmem:[#allocation2 + $0x90] sm:$0xff] %vm1442, %v2156
        %2855 = vst.msk [vmem:[#allocation2 + $0xa8] sm:$0xff] %vm1442, %v2157
        %2856 = vst.msk [vmem:[#allocation2 + $0xb0] sm:$0xff] %vm1442, %v2158
        %2857 = vst.msk [vmem:[#allocation2 + $0xc8] sm:$0xff] %vm1442, %v2159
        %2858 = vst.msk [vmem:[#allocation2 + $0xd0] sm:$0xff] %vm1442, %v2160
        %2859 = vst.msk [vmem:[#allocation2 + $0xe8] sm:$0xff] %vm1442, %v2161
        %2860 = vst.msk [vmem:[#allocation2 + $0xf0] sm:$0xff] %vm1442, %v2162
        %2861 = vst.msk [vmem:[#allocation2 + $0x108] sm:$0xff] %vm1442, %v2163
        %2862 = vst.msk [vmem:[#allocation2 + $0x110] sm:$0xff] %vm1442, %v2164
        %2863 = vst.msk [vmem:[#allocation2 + $0x128] sm:$0xff] %vm1442, %v2165
        %2864 = vst.msk [vmem:[#allocation2 + $0x130] sm:$0xff] %vm1442, %v2166
        %2865 = vst.msk [vmem:[#allocation2 + $0x148] sm:$0xff] %vm1442, %v2167
        %2866 = vst.msk [vmem:[#allocation2 + $0x150] sm:$0xff] %vm1442, %v2168
        %2867 = vst.msk [vmem:[#allocation2 + $0x168] sm:$0xff] %vm1442, %v2169
        %2868 = vst.msk [vmem:[#allocation2 + $0x170] sm:$0xff] %vm1442, %v2170
        %2869 = vst.msk [vmem:[#allocation2 + $0x188] sm:$0xff] %vm1442, %v2171
        %2870 = vst.msk [vmem:[#allocation2 + $0x190] sm:$0xff] %vm1442, %v2172
        %2871 = vst.msk [vmem:[#allocation2 + $0x1a8] sm:$0xff] %vm1442, %v2173
        %2872 = vst.msk [vmem:[#allocation2 + $0x1b0] sm:$0xff] %vm1442, %v2174
        %2873 = vst.msk [vmem:[#allocation2 + $0x1c8] sm:$0xff] %vm1442, %v2175
        %2874 = vst.msk [vmem:[#allocation2 + $0x1d0] sm:$0xff] %vm1442, %v2176
        %2875 = vst.msk [vmem:[#allocation2 + $0x1e8] sm:$0xff] %vm1442, %v2177
        %2876 = vst.msk [vmem:[#allocation2 + $0x1f0] sm:$0xff] %vm1442, %v2178
        %2877 = vst.msk [vmem:[#allocation2 + $0x208] sm:$0xff] %vm1442, %v2179
        %2878 = vst.msk [vmem:[#allocation2 + $0x210] sm:$0xff] %vm1442, %v2180
        %2879 = vst.msk [vmem:[#allocation2 + $0x228] sm:$0xff] %vm1442, %v2181
        %2880 = vst.msk [vmem:[#allocation2 + $0x230] sm:$0xff] %vm1442, %v2182
        %2881 = vst.msk [vmem:[#allocation2 + $0x248] sm:$0xff] %vm1442, %v2183
        %2882 = vst.msk [vmem:[#allocation2 + $0x250] sm:$0xff] %vm1442, %v2184
        %2883 = vst.msk [vmem:[#allocation2 + $0x268] sm:$0xff] %vm1442, %v2185
        %2884 = vst.msk [vmem:[#allocation2 + $0x270] sm:$0xff] %vm1442, %v2186
        %2885 = vst.msk [vmem:[#allocation2 + $0x288] sm:$0xff] %vm1442, %v2187
        %2886 = vst.msk [vmem:[#allocation2 + $0x290] sm:$0xff] %vm1442, %v2188
        %2887 = vst.msk [vmem:[#allocation2 + $0x2a8] sm:$0xff] %vm1442, %v2189
        %2888 = vst.msk [vmem:[#allocation2 + $0x2b0] sm:$0xff] %vm1442, %v2190
        %2889 = vst.msk [vmem:[#allocation2 + $0x2c8] sm:$0xff] %vm1442, %v2191
        %2890 = vst.msk [vmem:[#allocation2 + $0x2d0] sm:$0xff] %vm1442, %v2192
        %2891 = vst.msk [vmem:[#allocation2 + $0x2e8] sm:$0xff] %vm1442, %v2193
        %2892 = vst.msk [vmem:[#allocation2 + $0x2f0] sm:$0xff] %vm1442, %v2194
        %v2893 = vld [vmem:[#allocation2 + $0x6] sm:$0xff]
        %v2894 = vld [vmem:[#allocation2 + $0xe] sm:$0xff]
        %v2895 = vld [vmem:[#allocation2 + $0x26] sm:$0xff]
        %v2896 = vld [vmem:[#allocation2 + $0x2e] sm:$0xff]
        %v2897 = vld [vmem:[#allocation2 + $0x46] sm:$0xff]
        %v2898 = vld [vmem:[#allocation2 + $0x4e] sm:$0xff]
        %v2899 = vld [vmem:[#allocation2 + $0x66] sm:$0xff]
        %v2900 = vld [vmem:[#allocation2 + $0x6e] sm:$0xff]
        %v2901 = vld [vmem:[#allocation2 + $0x86] sm:$0xff]
        %v2902 = vld [vmem:[#allocation2 + $0x8e] sm:$0xff]
        %v2903 = vld [vmem:[#allocation2 + $0xa6] sm:$0xff]
        %v2904 = vld [vmem:[#allocation2 + $0xae] sm:$0xff]
        %v2905 = vld [vmem:[#allocation2 + $0xc6] sm:$0xff]
        %v2906 = vld [vmem:[#allocation2 + $0xce] sm:$0xff]
        %v2907 = vld [vmem:[#allocation2 + $0xe6] sm:$0xff]
        %v2908 = vld [vmem:[#allocation2 + $0xee] sm:$0xff]
        %v2909 = vld [vmem:[#allocation2 + $0x106] sm:$0xff]
        %v2910 = vld [vmem:[#allocation2 + $0x10e] sm:$0xff]
        %v2911 = vld [vmem:[#allocation2 + $0x126] sm:$0xff]
        %v2912 = vld [vmem:[#allocation2 + $0x12e] sm:$0xff]
        %v2913 = vld [vmem:[#allocation2 + $0x146] sm:$0xff]
        %v2914 = vld [vmem:[#allocation2 + $0x14e] sm:$0xff]
        %v2915 = vld [vmem:[#allocation2 + $0x166] sm:$0xff]
        %v2916 = vld [vmem:[#allocation2 + $0x16e] sm:$0xff]
        %v2917 = vld [vmem:[#allocation2 + $0x186] sm:$0xff]
        %v2918 = vld [vmem:[#allocation2 + $0x18e] sm:$0xff]
        %v2919 = vld [vmem:[#allocation2 + $0x1a6] sm:$0xff]
        %v2920 = vld [vmem:[#allocation2 + $0x1ae] sm:$0xff]
        %v2921 = vld [vmem:[#allocation2 + $0x1c6] sm:$0xff]
        %v2922 = vld [vmem:[#allocation2 + $0x1ce] sm:$0xff]
        %v2923 = vld [vmem:[#allocation2 + $0x1e6] sm:$0xff]
        %v2924 = vld [vmem:[#allocation2 + $0x1ee] sm:$0xff]
        %v2925 = vld [vmem:[#allocation2 + $0x206] sm:$0xff]
        %v2926 = vld [vmem:[#allocation2 + $0x20e] sm:$0xff]
        %v2927 = vld [vmem:[#allocation2 + $0x226] sm:$0xff]
        %v2928 = vld [vmem:[#allocation2 + $0x22e] sm:$0xff]
        %v2929 = vld [vmem:[#allocation2 + $0x246] sm:$0xff]
        %v2930 = vld [vmem:[#allocation2 + $0x24e] sm:$0xff]
        %v2931 = vld [vmem:[#allocation2 + $0x266] sm:$0xff]
        %v2932 = vld [vmem:[#allocation2 + $0x26e] sm:$0xff]
        %v2933 = vld [vmem:[#allocation2 + $0x286] sm:$0xff]
        %v2934 = vld [vmem:[#allocation2 + $0x28e] sm:$0xff]
        %v2935 = vld [vmem:[#allocation2 + $0x2a6] sm:$0xff]
        %v2936 = vld [vmem:[#allocation2 + $0x2ae] sm:$0xff]
        %v2937 = vld [vmem:[#allocation2 + $0x2c6] sm:$0xff]
        %v2938 = vld [vmem:[#allocation2 + $0x2ce] sm:$0xff]
        %v2939 = vld [vmem:[#allocation2 + $0x2e6] sm:$0xff]
        %v2940 = vld [vmem:[#allocation2 + $0x2ee] sm:$0xff]
        %v2941 = vld [vmem:[#allocation2 + $0x7] sm:$0xff]
        %v2942 = vld [vmem:[#allocation2 + $0xf] sm:$0xff]
        %v2943 = vld [vmem:[#allocation2 + $0x27] sm:$0xff]
        %v2944 = vld [vmem:[#allocation2 + $0x2f] sm:$0xff]
        %v2945 = vld [vmem:[#allocation2 + $0x47] sm:$0xff]
        %v2946 = vld [vmem:[#allocation2 + $0x4f] sm:$0xff]
        %v2947 = vld [vmem:[#allocation2 + $0x67] sm:$0xff]
        %v2948 = vld [vmem:[#allocation2 + $0x6f] sm:$0xff]
        %v2949 = vld [vmem:[#allocation2 + $0x87] sm:$0xff]
        %v2950 = vld [vmem:[#allocation2 + $0x8f] sm:$0xff]
        %v2951 = vld [vmem:[#allocation2 + $0xa7] sm:$0xff]
        %v2952 = vld [vmem:[#allocation2 + $0xaf] sm:$0xff]
        %v2953 = vld [vmem:[#allocation2 + $0xc7] sm:$0xff]
        %v2954 = vld [vmem:[#allocation2 + $0xcf] sm:$0xff]
        %v2955 = vld [vmem:[#allocation2 + $0xe7] sm:$0xff]
        %v2956 = vld [vmem:[#allocation2 + $0xef] sm:$0xff]
        %v2957 = vld [vmem:[#allocation2 + $0x107] sm:$0xff]
        %v2958 = vld [vmem:[#allocation2 + $0x10f] sm:$0xff]
        %v2959 = vld [vmem:[#allocation2 + $0x127] sm:$0xff]
        %v2960 = vld [vmem:[#allocation2 + $0x12f] sm:$0xff]
        %v2961 = vld [vmem:[#allocation2 + $0x147] sm:$0xff]
        %v2962 = vld [vmem:[#allocation2 + $0x14f] sm:$0xff]
        %v2963 = vld [vmem:[#allocation2 + $0x167] sm:$0xff]
        %v2964 = vld [vmem:[#allocation2 + $0x16f] sm:$0xff]
        %v2965 = vld [vmem:[#allocation2 + $0x187] sm:$0xff]
        %v2966 = vld [vmem:[#allocation2 + $0x18f] sm:$0xff]
        %v2967 = vld [vmem:[#allocation2 + $0x1a7] sm:$0xff]
        %v2968 = vld [vmem:[#allocation2 + $0x1af] sm:$0xff]
        %v2969 = vld [vmem:[#allocation2 + $0x1c7] sm:$0xff]
        %v2970 = vld [vmem:[#allocation2 + $0x1cf] sm:$0xff]
        %v2971 = vld [vmem:[#allocation2 + $0x1e7] sm:$0xff]
        %v2972 = vld [vmem:[#allocation2 + $0x1ef] sm:$0xff]
        %v2973 = vld [vmem:[#allocation2 + $0x207] sm:$0xff]
        %v2974 = vld [vmem:[#allocation2 + $0x20f] sm:$0xff]
        %v2975 = vld [vmem:[#allocation2 + $0x227] sm:$0xff]
        %v2976 = vld [vmem:[#allocation2 + $0x22f] sm:$0xff]
        %v2977 = vld [vmem:[#allocation2 + $0x247] sm:$0xff]
        %v2978 = vld [vmem:[#allocation2 + $0x24f] sm:$0xff]
        %v2979 = vld [vmem:[#allocation2 + $0x267] sm:$0xff]
        %v2980 = vld [vmem:[#allocation2 + $0x26f] sm:$0xff]
        %v2981 = vld [vmem:[#allocation2 + $0x287] sm:$0xff]
        %v2982 = vld [vmem:[#allocation2 + $0x28f] sm:$0xff]
        %v2983 = vld [vmem:[#allocation2 + $0x2a7] sm:$0xff]
        %v2984 = vld [vmem:[#allocation2 + $0x2af] sm:$0xff]
        %v2985 = vld [vmem:[#allocation2 + $0x2c7] sm:$0xff]
        %v2986 = vld [vmem:[#allocation2 + $0x2cf] sm:$0xff]
        %v2987 = vld [vmem:[#allocation2 + $0x2e7] sm:$0xff]
        %v2988 = vld [vmem:[#allocation2 + $0x2ef] sm:$0xff]
        %v2989 = vmax.f32 %v2893, %v2941
        %v2990 = vmax.f32 %v2894, %v2942
        %v2991 = vmax.f32 %v2895, %v2943
        %v2992 = vmax.f32 %v2896, %v2944
        %v2993 = vmax.f32 %v2897, %v2945
        %v2994 = vmax.f32 %v2898, %v2946
        %v2995 = vmax.f32 %v2899, %v2947
        %v2996 = vmax.f32 %v2900, %v2948
        %v2997 = vmax.f32 %v2901, %v2949
        %v2998 = vmax.f32 %v2902, %v2950
        %v2999 = vmax.f32 %v2903, %v2951
        %v3000 = vmax.f32 %v2904, %v2952
        %v3001 = vmax.f32 %v2905, %v2953
        %v3002 = vmax.f32 %v2906, %v2954
        %v3003 = vmax.f32 %v2907, %v2955
        %v3004 = vmax.f32 %v2908, %v2956
        %v3005 = vmax.f32 %v2909, %v2957
        %v3006 = vmax.f32 %v2910, %v2958
        %v3007 = vmax.f32 %v2911, %v2959
        %v3008 = vmax.f32 %v2912, %v2960
        %v3009 = vmax.f32 %v2913, %v2961
        %v3010 = vmax.f32 %v2914, %v2962
        %v3011 = vmax.f32 %v2915, %v2963
        %v3012 = vmax.f32 %v2916, %v2964
        %v3013 = vmax.f32 %v2917, %v2965
        %v3014 = vmax.f32 %v2918, %v2966
        %v3015 = vmax.f32 %v2919, %v2967
        %v3016 = vmax.f32 %v2920, %v2968
        %v3017 = vmax.f32 %v2921, %v2969
        %v3018 = vmax.f32 %v2922, %v2970
        %v3019 = vmax.f32 %v2923, %v2971
        %v3020 = vmax.f32 %v2924, %v2972
        %v3021 = vmax.f32 %v2925, %v2973
        %v3022 = vmax.f32 %v2926, %v2974
        %v3023 = vmax.f32 %v2927, %v2975
        %v3024 = vmax.f32 %v2928, %v2976
        %v3025 = vmax.f32 %v2929, %v2977
        %v3026 = vmax.f32 %v2930, %v2978
        %v3027 = vmax.f32 %v2931, %v2979
        %v3028 = vmax.f32 %v2932, %v2980
        %v3029 = vmax.f32 %v2933, %v2981
        %v3030 = vmax.f32 %v2934, %v2982
        %v3031 = vmax.f32 %v2935, %v2983
        %v3032 = vmax.f32 %v2936, %v2984
        %v3033 = vmax.f32 %v2937, %v2985
        %v3034 = vmax.f32 %v2938, %v2986
        %v3035 = vmax.f32 %v2939, %v2987
        %v3036 = vmax.f32 %v2940, %v2988
        %v3037 = vld [vmem:[#allocation2 + $0x8] sm:$0xff]
        %v3038 = vld [vmem:[#allocation2 + $0x10] sm:$0xff]
        %v3039 = vld [vmem:[#allocation2 + $0x28] sm:$0xff]
        %v3040 = vld [vmem:[#allocation2 + $0x30] sm:$0xff]
        %v3041 = vld [vmem:[#allocation2 + $0x48] sm:$0xff]
        %v3042 = vld [vmem:[#allocation2 + $0x50] sm:$0xff]
        %v3043 = vld [vmem:[#allocation2 + $0x68] sm:$0xff]
        %v3044 = vld [vmem:[#allocation2 + $0x70] sm:$0xff]
        %v3045 = vld [vmem:[#allocation2 + $0x88] sm:$0xff]
        %v3046 = vld [vmem:[#allocation2 + $0x90] sm:$0xff]
        %v3047 = vld [vmem:[#allocation2 + $0xa8] sm:$0xff]
        %v3048 = vld [vmem:[#allocation2 + $0xb0] sm:$0xff]
        %v3049 = vld [vmem:[#allocation2 + $0xc8] sm:$0xff]
        %v3050 = vld [vmem:[#allocation2 + $0xd0] sm:$0xff]
        %v3051 = vld [vmem:[#allocation2 + $0xe8] sm:$0xff]
        %v3052 = vld [vmem:[#allocation2 + $0xf0] sm:$0xff]
        %v3053 = vld [vmem:[#allocation2 + $0x108] sm:$0xff]
        %v3054 = vld [vmem:[#allocation2 + $0x110] sm:$0xff]
        %v3055 = vld [vmem:[#allocation2 + $0x128] sm:$0xff]
        %v3056 = vld [vmem:[#allocation2 + $0x130] sm:$0xff]
        %v3057 = vld [vmem:[#allocation2 + $0x148] sm:$0xff]
        %v3058 = vld [vmem:[#allocation2 + $0x150] sm:$0xff]
        %v3059 = vld [vmem:[#allocation2 + $0x168] sm:$0xff]
        %v3060 = vld [vmem:[#allocation2 + $0x170] sm:$0xff]
        %v3061 = vld [vmem:[#allocation2 + $0x188] sm:$0xff]
        %v3062 = vld [vmem:[#allocation2 + $0x190] sm:$0xff]
        %v3063 = vld [vmem:[#allocation2 + $0x1a8] sm:$0xff]
        %v3064 = vld [vmem:[#allocation2 + $0x1b0] sm:$0xff]
        %v3065 = vld [vmem:[#allocation2 + $0x1c8] sm:$0xff]
        %v3066 = vld [vmem:[#allocation2 + $0x1d0] sm:$0xff]
        %v3067 = vld [vmem:[#allocation2 + $0x1e8] sm:$0xff]
        %v3068 = vld [vmem:[#allocation2 + $0x1f0] sm:$0xff]
        %v3069 = vld [vmem:[#allocation2 + $0x208] sm:$0xff]
        %v3070 = vld [vmem:[#allocation2 + $0x210] sm:$0xff]
        %v3071 = vld [vmem:[#allocation2 + $0x228] sm:$0xff]
        %v3072 = vld [vmem:[#allocation2 + $0x230] sm:$0xff]
        %v3073 = vld [vmem:[#allocation2 + $0x248] sm:$0xff]
        %v3074 = vld [vmem:[#allocation2 + $0x250] sm:$0xff]
        %v3075 = vld [vmem:[#allocation2 + $0x268] sm:$0xff]
        %v3076 = vld [vmem:[#allocation2 + $0x270] sm:$0xff]
        %v3077 = vld [vmem:[#allocation2 + $0x288] sm:$0xff]
        %v3078 = vld [vmem:[#allocation2 + $0x290] sm:$0xff]
        %v3079 = vld [vmem:[#allocation2 + $0x2a8] sm:$0xff]
        %v3080 = vld [vmem:[#allocation2 + $0x2b0] sm:$0xff]
        %v3081 = vld [vmem:[#allocation2 + $0x2c8] sm:$0xff]
        %v3082 = vld [vmem:[#allocation2 + $0x2d0] sm:$0xff]
        %v3083 = vld [vmem:[#allocation2 + $0x2e8] sm:$0xff]
        %v3084 = vld [vmem:[#allocation2 + $0x2f0] sm:$0xff]
        %v3085 = vmax.f32 %v2989, %v3037
        %v3086 = vmax.f32 %v2990, %v3038
        %v3087 = vmax.f32 %v2991, %v3039
        %v3088 = vmax.f32 %v2992, %v3040
        %v3089 = vmax.f32 %v2993, %v3041
        %v3090 = vmax.f32 %v2994, %v3042
        %v3091 = vmax.f32 %v2995, %v3043
        %v3092 = vmax.f32 %v2996, %v3044
        %v3093 = vmax.f32 %v2997, %v3045
        %v3094 = vmax.f32 %v2998, %v3046
        %v3095 = vmax.f32 %v2999, %v3047
        %v3096 = vmax.f32 %v3000, %v3048
        %v3097 = vmax.f32 %v3001, %v3049
        %v3098 = vmax.f32 %v3002, %v3050
        %v3099 = vmax.f32 %v3003, %v3051
        %v3100 = vmax.f32 %v3004, %v3052
        %v3101 = vmax.f32 %v3005, %v3053
        %v3102 = vmax.f32 %v3006, %v3054
        %v3103 = vmax.f32 %v3007, %v3055
        %v3104 = vmax.f32 %v3008, %v3056
        %v3105 = vmax.f32 %v3009, %v3057
        %v3106 = vmax.f32 %v3010, %v3058
        %v3107 = vmax.f32 %v3011, %v3059
        %v3108 = vmax.f32 %v3012, %v3060
        %v3109 = vmax.f32 %v3013, %v3061
        %v3110 = vmax.f32 %v3014, %v3062
        %v3111 = vmax.f32 %v3015, %v3063
        %v3112 = vmax.f32 %v3016, %v3064
        %v3113 = vmax.f32 %v3017, %v3065
        %v3114 = vmax.f32 %v3018, %v3066
        %v3115 = vmax.f32 %v3019, %v3067
        %v3116 = vmax.f32 %v3020, %v3068
        %v3117 = vmax.f32 %v3021, %v3069
        %v3118 = vmax.f32 %v3022, %v3070
        %v3119 = vmax.f32 %v3023, %v3071
        %v3120 = vmax.f32 %v3024, %v3072
        %v3121 = vmax.f32 %v3025, %v3073
        %v3122 = vmax.f32 %v3026, %v3074
        %v3123 = vmax.f32 %v3027, %v3075
        %v3124 = vmax.f32 %v3028, %v3076
        %v3125 = vmax.f32 %v3029, %v3077
        %v3126 = vmax.f32 %v3030, %v3078
        %v3127 = vmax.f32 %v3031, %v3079
        %v3128 = vmax.f32 %v3032, %v3080
        %v3129 = vmax.f32 %v3033, %v3081
        %v3130 = vmax.f32 %v3034, %v3082
        %v3131 = vmax.f32 %v3035, %v3083
        %v3132 = vmax.f32 %v3036, %v3084
        %v3133 = vld [vmem:[#allocation2 + $0x9] sm:$0xff]
        %v3134 = vld [vmem:[#allocation2 + $0x11] sm:$0xff]
        %v3135 = vld [vmem:[#allocation2 + $0x29] sm:$0xff]
        %v3136 = vld [vmem:[#allocation2 + $0x31] sm:$0xff]
        %v3137 = vld [vmem:[#allocation2 + $0x49] sm:$0xff]
        %v3138 = vld [vmem:[#allocation2 + $0x51] sm:$0xff]
        %v3139 = vld [vmem:[#allocation2 + $0x69] sm:$0xff]
        %v3140 = vld [vmem:[#allocation2 + $0x71] sm:$0xff]
        %v3141 = vld [vmem:[#allocation2 + $0x89] sm:$0xff]
        %v3142 = vld [vmem:[#allocation2 + $0x91] sm:$0xff]
        %v3143 = vld [vmem:[#allocation2 + $0xa9] sm:$0xff]
        %v3144 = vld [vmem:[#allocation2 + $0xb1] sm:$0xff]
        %v3145 = vld [vmem:[#allocation2 + $0xc9] sm:$0xff]
        %v3146 = vld [vmem:[#allocation2 + $0xd1] sm:$0xff]
        %v3147 = vld [vmem:[#allocation2 + $0xe9] sm:$0xff]
        %v3148 = vld [vmem:[#allocation2 + $0xf1] sm:$0xff]
        %v3149 = vld [vmem:[#allocation2 + $0x109] sm:$0xff]
        %v3150 = vld [vmem:[#allocation2 + $0x111] sm:$0xff]
        %v3151 = vld [vmem:[#allocation2 + $0x129] sm:$0xff]
        %v3152 = vld [vmem:[#allocation2 + $0x131] sm:$0xff]
        %v3153 = vld [vmem:[#allocation2 + $0x149] sm:$0xff]
        %v3154 = vld [vmem:[#allocation2 + $0x151] sm:$0xff]
        %v3155 = vld [vmem:[#allocation2 + $0x169] sm:$0xff]
        %v3156 = vld [vmem:[#allocation2 + $0x171] sm:$0xff]
        %v3157 = vld [vmem:[#allocation2 + $0x189] sm:$0xff]
        %v3158 = vld [vmem:[#allocation2 + $0x191] sm:$0xff]
        %v3159 = vld [vmem:[#allocation2 + $0x1a9] sm:$0xff]
        %v3160 = vld [vmem:[#allocation2 + $0x1b1] sm:$0xff]
        %v3161 = vld [vmem:[#allocation2 + $0x1c9] sm:$0xff]
        %v3162 = vld [vmem:[#allocation2 + $0x1d1] sm:$0xff]
        %v3163 = vld [vmem:[#allocation2 + $0x1e9] sm:$0xff]
        %v3164 = vld [vmem:[#allocation2 + $0x1f1] sm:$0xff]
        %v3165 = vld [vmem:[#allocation2 + $0x209] sm:$0xff]
        %v3166 = vld [vmem:[#allocation2 + $0x211] sm:$0xff]
        %v3167 = vld [vmem:[#allocation2 + $0x229] sm:$0xff]
        %v3168 = vld [vmem:[#allocation2 + $0x231] sm:$0xff]
        %v3169 = vld [vmem:[#allocation2 + $0x249] sm:$0xff]
        %v3170 = vld [vmem:[#allocation2 + $0x251] sm:$0xff]
        %v3171 = vld [vmem:[#allocation2 + $0x269] sm:$0xff]
        %v3172 = vld [vmem:[#allocation2 + $0x271] sm:$0xff]
        %v3173 = vld [vmem:[#allocation2 + $0x289] sm:$0xff]
        %v3174 = vld [vmem:[#allocation2 + $0x291] sm:$0xff]
        %v3175 = vld [vmem:[#allocation2 + $0x2a9] sm:$0xff]
        %v3176 = vld [vmem:[#allocation2 + $0x2b1] sm:$0xff]
        %v3177 = vld [vmem:[#allocation2 + $0x2c9] sm:$0xff]
        %v3178 = vld [vmem:[#allocation2 + $0x2d1] sm:$0xff]
        %v3179 = vld [vmem:[#allocation2 + $0x2e9] sm:$0xff]
        %v3180 = vld [vmem:[#allocation2 + $0x2f1] sm:$0xff]
        %v3181 = vmax.f32 %v3085, %v3133
        %v3182 = vmax.f32 %v3086, %v3134
        %v3183 = vmax.f32 %v3087, %v3135
        %v3184 = vmax.f32 %v3088, %v3136
        %v3185 = vmax.f32 %v3089, %v3137
        %v3186 = vmax.f32 %v3090, %v3138
        %v3187 = vmax.f32 %v3091, %v3139
        %v3188 = vmax.f32 %v3092, %v3140
        %v3189 = vmax.f32 %v3093, %v3141
        %v3190 = vmax.f32 %v3094, %v3142
        %v3191 = vmax.f32 %v3095, %v3143
        %v3192 = vmax.f32 %v3096, %v3144
        %v3193 = vmax.f32 %v3097, %v3145
        %v3194 = vmax.f32 %v3098, %v3146
        %v3195 = vmax.f32 %v3099, %v3147
        %v3196 = vmax.f32 %v3100, %v3148
        %v3197 = vmax.f32 %v3101, %v3149
        %v3198 = vmax.f32 %v3102, %v3150
        %v3199 = vmax.f32 %v3103, %v3151
        %v3200 = vmax.f32 %v3104, %v3152
        %v3201 = vmax.f32 %v3105, %v3153
        %v3202 = vmax.f32 %v3106, %v3154
        %v3203 = vmax.f32 %v3107, %v3155
        %v3204 = vmax.f32 %v3108, %v3156
        %v3205 = vmax.f32 %v3109, %v3157
        %v3206 = vmax.f32 %v3110, %v3158
        %v3207 = vmax.f32 %v3111, %v3159
        %v3208 = vmax.f32 %v3112, %v3160
        %v3209 = vmax.f32 %v3113, %v3161
        %v3210 = vmax.f32 %v3114, %v3162
        %v3211 = vmax.f32 %v3115, %v3163
        %v3212 = vmax.f32 %v3116, %v3164
        %v3213 = vmax.f32 %v3117, %v3165
        %v3214 = vmax.f32 %v3118, %v3166
        %v3215 = vmax.f32 %v3119, %v3167
        %v3216 = vmax.f32 %v3120, %v3168
        %v3217 = vmax.f32 %v3121, %v3169
        %v3218 = vmax.f32 %v3122, %v3170
        %v3219 = vmax.f32 %v3123, %v3171
        %v3220 = vmax.f32 %v3124, %v3172
        %v3221 = vmax.f32 %v3125, %v3173
        %v3222 = vmax.f32 %v3126, %v3174
        %v3223 = vmax.f32 %v3127, %v3175
        %v3224 = vmax.f32 %v3128, %v3176
        %v3225 = vmax.f32 %v3129, %v3177
        %v3226 = vmax.f32 %v3130, %v3178
        %v3227 = vmax.f32 %v3131, %v3179
        %v3228 = vmax.f32 %v3132, %v3180
        %v3229 = vld [vmem:[#allocation2 + $0xa] sm:$0xff]
        %v3230 = vld [vmem:[#allocation2 + $0x12] sm:$0xff]
        %v3231 = vld [vmem:[#allocation2 + $0x2a] sm:$0xff]
        %v3232 = vld [vmem:[#allocation2 + $0x32] sm:$0xff]
        %v3233 = vld [vmem:[#allocation2 + $0x4a] sm:$0xff]
        %v3234 = vld [vmem:[#allocation2 + $0x52] sm:$0xff]
        %v3235 = vld [vmem:[#allocation2 + $0x6a] sm:$0xff]
        %v3236 = vld [vmem:[#allocation2 + $0x72] sm:$0xff]
        %v3237 = vld [vmem:[#allocation2 + $0x8a] sm:$0xff]
        %v3238 = vld [vmem:[#allocation2 + $0x92] sm:$0xff]
        %v3239 = vld [vmem:[#allocation2 + $0xaa] sm:$0xff]
        %v3240 = vld [vmem:[#allocation2 + $0xb2] sm:$0xff]
        %v3241 = vld [vmem:[#allocation2 + $0xca] sm:$0xff]
        %v3242 = vld [vmem:[#allocation2 + $0xd2] sm:$0xff]
        %v3243 = vld [vmem:[#allocation2 + $0xea] sm:$0xff]
        %v3244 = vld [vmem:[#allocation2 + $0xf2] sm:$0xff]
        %v3245 = vld [vmem:[#allocation2 + $0x10a] sm:$0xff]
        %v3246 = vld [vmem:[#allocation2 + $0x112] sm:$0xff]
        %v3247 = vld [vmem:[#allocation2 + $0x12a] sm:$0xff]
        %v3248 = vld [vmem:[#allocation2 + $0x132] sm:$0xff]
        %v3249 = vld [vmem:[#allocation2 + $0x14a] sm:$0xff]
        %v3250 = vld [vmem:[#allocation2 + $0x152] sm:$0xff]
        %v3251 = vld [vmem:[#allocation2 + $0x16a] sm:$0xff]
        %v3252 = vld [vmem:[#allocation2 + $0x172] sm:$0xff]
        %v3253 = vld [vmem:[#allocation2 + $0x18a] sm:$0xff]
        %v3254 = vld [vmem:[#allocation2 + $0x192] sm:$0xff]
        %v3255 = vld [vmem:[#allocation2 + $0x1aa] sm:$0xff]
        %v3256 = vld [vmem:[#allocation2 + $0x1b2] sm:$0xff]
        %v3257 = vld [vmem:[#allocation2 + $0x1ca] sm:$0xff]
        %v3258 = vld [vmem:[#allocation2 + $0x1d2] sm:$0xff]
        %v3259 = vld [vmem:[#allocation2 + $0x1ea] sm:$0xff]
        %v3260 = vld [vmem:[#allocation2 + $0x1f2] sm:$0xff]
        %v3261 = vld [vmem:[#allocation2 + $0x20a] sm:$0xff]
        %v3262 = vld [vmem:[#allocation2 + $0x212] sm:$0xff]
        %v3263 = vld [vmem:[#allocation2 + $0x22a] sm:$0xff]
        %v3264 = vld [vmem:[#allocation2 + $0x232] sm:$0xff]
        %v3265 = vld [vmem:[#allocation2 + $0x24a] sm:$0xff]
        %v3266 = vld [vmem:[#allocation2 + $0x252] sm:$0xff]
        %v3267 = vld [vmem:[#allocation2 + $0x26a] sm:$0xff]
        %v3268 = vld [vmem:[#allocation2 + $0x272] sm:$0xff]
        %v3269 = vld [vmem:[#allocation2 + $0x28a] sm:$0xff]
        %v3270 = vld [vmem:[#allocation2 + $0x292] sm:$0xff]
        %v3271 = vld [vmem:[#allocation2 + $0x2aa] sm:$0xff]
        %v3272 = vld [vmem:[#allocation2 + $0x2b2] sm:$0xff]
        %v3273 = vld [vmem:[#allocation2 + $0x2ca] sm:$0xff]
        %v3274 = vld [vmem:[#allocation2 + $0x2d2] sm:$0xff]
        %v3275 = vld [vmem:[#allocation2 + $0x2ea] sm:$0xff]
        %v3276 = vld [vmem:[#allocation2 + $0x2f2] sm:$0xff]
        %v3277 = vmax.f32 %v3181, %v3229
        %v3278 = vmax.f32 %v3182, %v3230
        %v3279 = vmax.f32 %v3183, %v3231
        %v3280 = vmax.f32 %v3184, %v3232
        %v3281 = vmax.f32 %v3185, %v3233
        %v3282 = vmax.f32 %v3186, %v3234
        %v3283 = vmax.f32 %v3187, %v3235
        %v3284 = vmax.f32 %v3188, %v3236
        %v3285 = vmax.f32 %v3189, %v3237
        %v3286 = vmax.f32 %v3190, %v3238
        %v3287 = vmax.f32 %v3191, %v3239
        %v3288 = vmax.f32 %v3192, %v3240
        %v3289 = vmax.f32 %v3193, %v3241
        %v3290 = vmax.f32 %v3194, %v3242
        %v3291 = vmax.f32 %v3195, %v3243
        %v3292 = vmax.f32 %v3196, %v3244
        %v3293 = vmax.f32 %v3197, %v3245
        %v3294 = vmax.f32 %v3198, %v3246
        %v3295 = vmax.f32 %v3199, %v3247
        %v3296 = vmax.f32 %v3200, %v3248
        %v3297 = vmax.f32 %v3201, %v3249
        %v3298 = vmax.f32 %v3202, %v3250
        %v3299 = vmax.f32 %v3203, %v3251
        %v3300 = vmax.f32 %v3204, %v3252
        %v3301 = vmax.f32 %v3205, %v3253
        %v3302 = vmax.f32 %v3206, %v3254
        %v3303 = vmax.f32 %v3207, %v3255
        %v3304 = vmax.f32 %v3208, %v3256
        %v3305 = vmax.f32 %v3209, %v3257
        %v3306 = vmax.f32 %v3210, %v3258
        %v3307 = vmax.f32 %v3211, %v3259
        %v3308 = vmax.f32 %v3212, %v3260
        %v3309 = vmax.f32 %v3213, %v3261
        %v3310 = vmax.f32 %v3214, %v3262
        %v3311 = vmax.f32 %v3215, %v3263
        %v3312 = vmax.f32 %v3216, %v3264
        %v3313 = vmax.f32 %v3217, %v3265
        %v3314 = vmax.f32 %v3218, %v3266
        %v3315 = vmax.f32 %v3219, %v3267
        %v3316 = vmax.f32 %v3220, %v3268
        %v3317 = vmax.f32 %v3221, %v3269
        %v3318 = vmax.f32 %v3222, %v3270
        %v3319 = vmax.f32 %v3223, %v3271
        %v3320 = vmax.f32 %v3224, %v3272
        %v3321 = vmax.f32 %v3225, %v3273
        %v3322 = vmax.f32 %v3226, %v3274
        %v3323 = vmax.f32 %v3227, %v3275
        %v3324 = vmax.f32 %v3228, %v3276
        %v3325 = vmax.f32 %v3277, %v3279
        %v3326 = vmax.f32 %v3278, %v3280
        %v3327 = vmax.f32 %v3279, %v3281
        %v3328 = vmax.f32 %v3280, %v3282
        %v3329 = vmax.f32 %v3281, %v3283
        %v3330 = vmax.f32 %v3282, %v3284
        %v3331 = vmax.f32 %v3283, %v3285
        %v3332 = vmax.f32 %v3284, %v3286
        %v3333 = vmax.f32 %v3285, %v3287
        %v3334 = vmax.f32 %v3286, %v3288
        %v3335 = vmax.f32 %v3287, %v3289
        %v3336 = vmax.f32 %v3288, %v3290
        %v3337 = vmax.f32 %v3289, %v3291
        %v3338 = vmax.f32 %v3290, %v3292
        %v3339 = vmax.f32 %v3291, %v3293
        %v3340 = vmax.f32 %v3292, %v3294
        %v3341 = vmax.f32 %v3293, %v3295
        %v3342 = vmax.f32 %v3294, %v3296
        %v3343 = vmax.f32 %v3295, %v3297
        %v3344 = vmax.f32 %v3296, %v3298
        %v3345 = vmax.f32 %v3297, %v3299
        %v3346 = vmax.f32 %v3298, %v3300
        %v3347 = vmax.f32 %v3299, %v3301
        %v3348 = vmax.f32 %v3300, %v3302
        %v3349 = vmax.f32 %v3301, %v3303
        %v3350 = vmax.f32 %v3302, %v3304
        %v3351 = vmax.f32 %v3303, %v3305
        %v3352 = vmax.f32 %v3304, %v3306
        %v3353 = vmax.f32 %v3305, %v3307
        %v3354 = vmax.f32 %v3306, %v3308
        %v3355 = vmax.f32 %v3307, %v3309
        %v3356 = vmax.f32 %v3308, %v3310
        %v3357 = vmax.f32 %v3309, %v3311
        %v3358 = vmax.f32 %v3310, %v3312
        %v3359 = vmax.f32 %v3311, %v3313
        %v3360 = vmax.f32 %v3312, %v3314
        %v3361 = vmax.f32 %v3313, %v3315
        %v3362 = vmax.f32 %v3314, %v3316
        %v3363 = vmax.f32 %v3315, %v3317
        %v3364 = vmax.f32 %v3316, %v3318
        %v3365 = vmax.f32 %v3325, %v3281
        %v3366 = vmax.f32 %v3326, %v3282
        %v3367 = vmax.f32 %v3327, %v3283
        %v3368 = vmax.f32 %v3328, %v3284
        %v3369 = vmax.f32 %v3329, %v3285
        %v3370 = vmax.f32 %v3330, %v3286
        %v3371 = vmax.f32 %v3331, %v3287
        %v3372 = vmax.f32 %v3332, %v3288
        %v3373 = vmax.f32 %v3333, %v3289
        %v3374 = vmax.f32 %v3334, %v3290
        %v3375 = vmax.f32 %v3335, %v3291
        %v3376 = vmax.f32 %v3336, %v3292
        %v3377 = vmax.f32 %v3337, %v3293
        %v3378 = vmax.f32 %v3338, %v3294
        %v3379 = vmax.f32 %v3339, %v3295
        %v3380 = vmax.f32 %v3340, %v3296
        %v3381 = vmax.f32 %v3341, %v3297
        %v3382 = vmax.f32 %v3342, %v3298
        %v3383 = vmax.f32 %v3343, %v3299
        %v3384 = vmax.f32 %v3344, %v3300
        %v3385 = vmax.f32 %v3345, %v3301
        %v3386 = vmax.f32 %v3346, %v3302
        %v3387 = vmax.f32 %v3347, %v3303
        %v3388 = vmax.f32 %v3348, %v3304
        %v3389 = vmax.f32 %v3349, %v3305
        %v3390 = vmax.f32 %v3350, %v3306
        %v3391 = vmax.f32 %v3351, %v3307
        %v3392 = vmax.f32 %v3352, %v3308
        %v3393 = vmax.f32 %v3353, %v3309
        %v3394 = vmax.f32 %v3354, %v3310
        %v3395 = vmax.f32 %v3355, %v3311
        %v3396 = vmax.f32 %v3356, %v3312
        %v3397 = vmax.f32 %v3357, %v3313
        %v3398 = vmax.f32 %v3358, %v3314
        %v3399 = vmax.f32 %v3359, %v3315
        %v3400 = vmax.f32 %v3360, %v3316
        %v3401 = vmax.f32 %v3361, %v3317
        %v3402 = vmax.f32 %v3362, %v3318
        %v3403 = vmax.f32 %v3363, %v3319
        %v3404 = vmax.f32 %v3364, %v3320
        %v3405 = vmax.f32 %v3365, %v3283
        %v3406 = vmax.f32 %v3366, %v3284
        %v3407 = vmax.f32 %v3367, %v3285
        %v3408 = vmax.f32 %v3368, %v3286
        %v3409 = vmax.f32 %v3369, %v3287
        %v3410 = vmax.f32 %v3370, %v3288
        %v3411 = vmax.f32 %v3371, %v3289
        %v3412 = vmax.f32 %v3372, %v3290
        %v3413 = vmax.f32 %v3373, %v3291
        %v3414 = vmax.f32 %v3374, %v3292
        %v3415 = vmax.f32 %v3375, %v3293
        %v3416 = vmax.f32 %v3376, %v3294
        %v3417 = vmax.f32 %v3377, %v3295
        %v3418 = vmax.f32 %v3378, %v3296
        %v3419 = vmax.f32 %v3379, %v3297
        %v3420 = vmax.f32 %v3380, %v3298
        %v3421 = vmax.f32 %v3381, %v3299
        %v3422 = vmax.f32 %v3382, %v3300
        %v3423 = vmax.f32 %v3383, %v3301
        %v3424 = vmax.f32 %v3384, %v3302
        %v3425 = vmax.f32 %v3385, %v3303
        %v3426 = vmax.f32 %v3386, %v3304
        %v3427 = vmax.f32 %v3387, %v3305
        %v3428 = vmax.f32 %v3388, %v3306
        %v3429 = vmax.f32 %v3389, %v3307
        %v3430 = vmax.f32 %v3390, %v3308
        %v3431 = vmax.f32 %v3391, %v3309
        %v3432 = vmax.f32 %v3392, %v3310
        %v3433 = vmax.f32 %v3393, %v3311
        %v3434 = vmax.f32 %v3394, %v3312
        %v3435 = vmax.f32 %v3395, %v3313
        %v3436 = vmax.f32 %v3396, %v3314
        %v3437 = vmax.f32 %v3397, %v3315
        %v3438 = vmax.f32 %v3398, %v3316
        %v3439 = vmax.f32 %v3399, %v3317
        %v3440 = vmax.f32 %v3400, %v3318
        %v3441 = vmax.f32 %v3401, %v3319
        %v3442 = vmax.f32 %v3402, %v3320
        %v3443 = vmax.f32 %v3403, %v3321
        %v3444 = vmax.f32 %v3404, %v3322
        %v3445 = vmax.f32 %v3405, %v3285
        %v3446 = vmax.f32 %v3406, %v3286
        %v3447 = vmax.f32 %v3407, %v3287
        %v3448 = vmax.f32 %v3408, %v3288
        %v3449 = vmax.f32 %v3409, %v3289
        %v3450 = vmax.f32 %v3410, %v3290
        %v3451 = vmax.f32 %v3411, %v3291
        %v3452 = vmax.f32 %v3412, %v3292
        %v3453 = vmax.f32 %v3413, %v3293
        %v3454 = vmax.f32 %v3414, %v3294
        %v3455 = vmax.f32 %v3415, %v3295
        %v3456 = vmax.f32 %v3416, %v3296
        %v3457 = vmax.f32 %v3417, %v3297
        %v3458 = vmax.f32 %v3418, %v3298
        %v3459 = vmax.f32 %v3419, %v3299
        %v3460 = vmax.f32 %v3420, %v3300
        %v3461 = vmax.f32 %v3421, %v3301
        %v3462 = vmax.f32 %v3422, %v3302
        %v3463 = vmax.f32 %v3423, %v3303
        %v3464 = vmax.f32 %v3424, %v3304
        %v3465 = vmax.f32 %v3425, %v3305
        %v3466 = vmax.f32 %v3426, %v3306
        %v3467 = vmax.f32 %v3427, %v3307
        %v3468 = vmax.f32 %v3428, %v3308
        %v3469 = vmax.f32 %v3429, %v3309
        %v3470 = vmax.f32 %v3430, %v3310
        %v3471 = vmax.f32 %v3431, %v3311
        %v3472 = vmax.f32 %v3432, %v3312
        %v3473 = vmax.f32 %v3433, %v3313
        %v3474 = vmax.f32 %v3434, %v3314
        %v3475 = vmax.f32 %v3435, %v3315
        %v3476 = vmax.f32 %v3436, %v3316
        %v3477 = vmax.f32 %v3437, %v3317
        %v3478 = vmax.f32 %v3438, %v3318
        %v3479 = vmax.f32 %v3439, %v3319
        %v3480 = vmax.f32 %v3440, %v3320
        %v3481 = vmax.f32 %v3441, %v3321
        %v3482 = vmax.f32 %v3442, %v3322
        %v3483 = vmax.f32 %v3443, %v3323
        %v3484 = vmax.f32 %v3444, %v3324
        %v3485 = vld [vmem:[%s3 + $0x4] sm:$0x3]
        %v3487 = vsel %vm1442, %v3449, 0
        %v3490 = vsel %vm1442, %v3450, 0
        %v3493 = vsel %vm1442, %v3451, 0
        %v3496 = vsel %vm1442, %v3452, 0
        %v3499 = vsel %vm1442, %v3453, 0
        %v3502 = vsel %vm1442, %v3454, 0
        %v3505 = vsel %vm1442, %v3455, 0
        %v3508 = vsel %vm1442, %v3456, 0
        %v3511 = vsel %vm1442, %v3457, 0
        %v3514 = vsel %vm1442, %v3458, 0
        %v3517 = vsel %vm1442, %v3459, 0
        %v3520 = vsel %vm1442, %v3460, 0
        %v3523 = vsel %vm1442, %v3461, 0
        %v3526 = vsel %vm1442, %v3462, 0
        %v3529 = vsel %vm1442, %v3463, 0
        %v3532 = vsel %vm1442, %v3464, 0
        %v3535 = vsel %vm1442, %v3465, 0
        %v3538 = vsel %vm1442, %v3466, 0
        %v3541 = vsel %vm1442, %v3467, 0
        %v3544 = vsel %vm1442, %v3468, 0
        %v3547 = vsel %vm1442, %v3469, 0
        %v3550 = vsel %vm1442, %v3470, 0
        %v3553 = vsel %vm1442, %v3471, 0
        %v3556 = vsel %vm1442, %v3472, 0
        %v3559 = vsel %vm1442, %v3473, 0
        %v3562 = vsel %vm1442, %v3474, 0
        %v3565 = vsel %vm1442, %v3475, 0
        %v3568 = vsel %vm1442, %v3476, 0
        %v3571 = vsel %vm1442, %v3477, 0
        %v3574 = vsel %vm1442, %v3478, 0
        %v3577 = vsel %vm1442, %v3479, 0
        %v3580 = vsel %vm1442, %v3480, 0
        %v3583 = vsel %vm2292, %v3485, 0
        %3585 = vmatprep.subr.mxu0 0.0
        %3586 = vmatpush1.msra.mxu0 0.0
        %3587 = vmatprep.subr.mxu0 0.0
        %3588 = vmatpush1.msra.mxu0 0.0
        %3589 = vmatprep.subr.mxu0 0.0
        %3590 = vmatpush1.msra.mxu0 0.0
        %3591 = vmatprep.subr.mxu0 0.0
        %3592 = vmatpush1.msra.mxu0 0.0
        %3593 = vmatprep.subr.mxu0 0.0
        %3594 = vmatpush1.msra.mxu0 0.0
        %3595 = vmatprep.subr.mxu0 0.0
        %3596 = vmatpush1.msra.mxu0 0.0
        %3597 = vmatprep.subr.mxu0 0.0
        %3598 = vmatpush1.msra.mxu0 0.0
        %3599 = vmatprep.subr.mxu0 0.0
        %3600 = vmatpush1.msra.mxu0 0.0
        %3601 = vmatprep.subr.mxu0 0.0
        %3602 = vmatpush1.msra.mxu0 0.0
        %3603 = vmatprep.subr.mxu0 0.0
        %3604 = vmatpush1.msra.mxu0 0.0
        %3605 = vmatprep.subr.mxu0 0.0
        %3606 = vmatpush1.msra.mxu0 0.0
        %3607 = vmatprep.subr.mxu0 0.0
        %3608 = vmatpush1.msra.mxu0 0.0
        %3609 = vmatprep.subr.mxu0 0.0
        %3610 = vmatpush1.msra.mxu0 0.0
        %3611 = vmatprep.subr.mxu0 0.0
        %3612 = vmatpush1.msra.mxu0 0.0
        %3613 = vmatprep.subr.mxu0 0.0
        %3614 = vmatpush1.msra.mxu0 0.0
        %3615 = vmatprep.subr.mxu0 0.0
        %3616 = vmatpush1.msra.mxu0 %v3583
        %3617 = vmatprep.subr.mxu0 0.0
        %3618 = vmatpush2.msra.mxu0 0.0
        %3619 = vmatprep.subr.mxu0 0.0
        %3620 = vmatpush2.msra.mxu0 0.0
        %3621 = vmatprep.subr.mxu0 0.0
        %3622 = vmatpush2.msra.mxu0 0.0
        %3623 = vmatprep.subr.mxu0 0.0
        %3624 = vmatpush2.msra.mxu0 0.0
        %3625 = vmatprep.subr.mxu0 0.0
        %3626 = vmatpush2.msra.mxu0 0.0
        %3627 = vmatprep.subr.mxu0 0.0
        %3628 = vmatpush2.msra.mxu0 0.0
        %3629 = vmatprep.subr.mxu0 0.0
        %3630 = vmatpush2.msra.mxu0 0.0
        %3631 = vmatprep.subr.mxu0 0.0
        %3632 = vmatpush2.msra.mxu0 0.0
        %3633 = vmatprep.subr.mxu0 0.0
        %3634 = vmatpush2.msra.mxu0 0.0
        %3635 = vmatprep.subr.mxu0 0.0
        %3636 = vmatpush2.msra.mxu0 0.0
        %3637 = vmatprep.subr.mxu0 0.0
        %3638 = vmatpush2.msra.mxu0 0.0
        %3639 = vmatprep.subr.mxu0 0.0
        %3640 = vmatpush2.msra.mxu0 0.0
        %3641 = vmatprep.subr.mxu0 0.0
        %3642 = vmatpush2.msra.mxu0 0.0
        %3643 = vmatprep.subr.mxu0 0.0
        %3644 = vmatpush2.msra.mxu0 0.0
        %3645 = vmatprep.subr.mxu0 0.0
        %3646 = vmatpush2.msra.mxu0 0.0
        %3647 = vmatprep.subr.mxu0 0.0
        %3648 = vmatpush2.msra.mxu0 0.0
        %3649 = vmatprep.mubr.f32.mxu0 0.0
        %3650 = vmatmul.mubr.f32.gmra.mxu0 %v3487
        %v3651 = vpop.f32.mrf.mxu0
        %v3652 = vadd.f32 0.0, %v3651
        %v3653 = vpop.f32.mrf.mxu0
        %3654 = vmatprep.mubr.f32.mxu0 0.0
        %3655 = vmatmul.mubr.f32.gmra.mxu0 %v3490
        %v3656 = vpop.f32.mrf.mxu0
        %v3657 = vadd.f32 0.0, %v3656
        %v3658 = vpop.f32.mrf.mxu0
        %3659 = vmatprep.mubr.f32.mxu0 0.0
        %3660 = vmatmul.mubr.f32.gmra.mxu0 %v3493
        %v3661 = vpop.f32.mrf.mxu0
        %v3662 = vadd.f32 0.0, %v3661
        %v3663 = vpop.f32.mrf.mxu0
        %3664 = vmatprep.mubr.f32.mxu0 0.0
        %3665 = vmatmul.mubr.f32.gmra.mxu0 %v3496
        %v3666 = vpop.f32.mrf.mxu0
        %v3667 = vadd.f32 0.0, %v3666
        %v3668 = vpop.f32.mrf.mxu0
        %3669 = vmatprep.mubr.f32.mxu0 0.0
        %3670 = vmatmul.mubr.f32.gmra.mxu0 %v3499
        %v3671 = vpop.f32.mrf.mxu0
        %v3672 = vadd.f32 0.0, %v3671
        %v3673 = vpop.f32.mrf.mxu0
        %3674 = vmatprep.mubr.f32.mxu0 0.0
        %3675 = vmatmul.mubr.f32.gmra.mxu0 %v3502
        %v3676 = vpop.f32.mrf.mxu0
        %v3677 = vadd.f32 0.0, %v3676
        %v3678 = vpop.f32.mrf.mxu0
        %3679 = vmatprep.mubr.f32.mxu0 0.0
        %3680 = vmatmul.mubr.f32.gmra.mxu0 %v3505
        %v3681 = vpop.f32.mrf.mxu0
        %v3682 = vadd.f32 0.0, %v3681
        %v3683 = vpop.f32.mrf.mxu0
        %3684 = vmatprep.mubr.f32.mxu0 0.0
        %3685 = vmatmul.mubr.f32.gmra.mxu0 %v3508
        %v3686 = vpop.f32.mrf.mxu0
        %v3687 = vadd.f32 0.0, %v3686
        %v3688 = vpop.f32.mrf.mxu0
        %3689 = vmatprep.mubr.f32.mxu0 0.0
        %3690 = vmatmul.mubr.f32.gmra.mxu0 %v3511
        %v3691 = vpop.f32.mrf.mxu0
        %v3692 = vadd.f32 0.0, %v3691
        %v3693 = vpop.f32.mrf.mxu0
        %3694 = vmatprep.mubr.f32.mxu0 0.0
        %3695 = vmatmul.mubr.f32.gmra.mxu0 %v3514
        %v3696 = vpop.f32.mrf.mxu0
        %v3697 = vadd.f32 0.0, %v3696
        %v3698 = vpop.f32.mrf.mxu0
        %3699 = vmatprep.mubr.f32.mxu0 0.0
        %3700 = vmatmul.mubr.f32.gmra.mxu0 %v3517
        %v3701 = vpop.f32.mrf.mxu0
        %v3702 = vadd.f32 0.0, %v3701
        %v3703 = vpop.f32.mrf.mxu0
        %3704 = vmatprep.mubr.f32.mxu0 0.0
        %3705 = vmatmul.mubr.f32.gmra.mxu0 %v3520
        %v3706 = vpop.f32.mrf.mxu0
        %v3707 = vadd.f32 0.0, %v3706
        %v3708 = vpop.f32.mrf.mxu0
        %3709 = vmatprep.mubr.f32.mxu0 0.0
        %3710 = vmatmul.mubr.f32.gmra.mxu0 %v3523
        %v3711 = vpop.f32.mrf.mxu0
        %v3712 = vadd.f32 0.0, %v3711
        %v3713 = vpop.f32.mrf.mxu0
        %3714 = vmatprep.mubr.f32.mxu0 0.0
        %3715 = vmatmul.mubr.f32.gmra.mxu0 %v3526
        %v3716 = vpop.f32.mrf.mxu0
        %v3717 = vadd.f32 0.0, %v3716
        %v3718 = vpop.f32.mrf.mxu0
        %3719 = vmatprep.mubr.f32.mxu0 0.0
        %3720 = vmatmul.mubr.f32.gmra.mxu0 %v3529
        %v3721 = vpop.f32.mrf.mxu0
        %v3722 = vadd.f32 0.0, %v3721
        %v3723 = vpop.f32.mrf.mxu0
        %3724 = vmatprep.mubr.f32.mxu0 0.0
        %3725 = vmatmul.mubr.f32.gmra.mxu0 %v3532
        %v3726 = vpop.f32.mrf.mxu0
        %v3727 = vadd.f32 0.0, %v3726
        %v3728 = vpop.f32.mrf.mxu0
        %3729 = vmatprep.mubr.f32.mxu0 0.0
        %3730 = vmatmul.mubr.f32.gmra.mxu0 %v3535
        %v3731 = vpop.f32.mrf.mxu0
        %v3732 = vadd.f32 0.0, %v3731
        %v3733 = vpop.f32.mrf.mxu0
        %3734 = vmatprep.mubr.f32.mxu0 0.0
        %3735 = vmatmul.mubr.f32.gmra.mxu0 %v3538
        %v3736 = vpop.f32.mrf.mxu0
        %v3737 = vadd.f32 0.0, %v3736
        %v3738 = vpop.f32.mrf.mxu0
        %3739 = vmatprep.mubr.f32.mxu0 0.0
        %3740 = vmatmul.mubr.f32.gmra.mxu0 %v3541
        %v3741 = vpop.f32.mrf.mxu0
        %v3742 = vadd.f32 0.0, %v3741
        %v3743 = vpop.f32.mrf.mxu0
        %3744 = vmatprep.mubr.f32.mxu0 0.0
        %3745 = vmatmul.mubr.f32.gmra.mxu0 %v3544
        %v3746 = vpop.f32.mrf.mxu0
        %v3747 = vadd.f32 0.0, %v3746
        %v3748 = vpop.f32.mrf.mxu0
        %3749 = vmatprep.mubr.f32.mxu0 0.0
        %3750 = vmatmul.mubr.f32.gmra.mxu0 %v3547
        %v3751 = vpop.f32.mrf.mxu0
        %v3752 = vadd.f32 0.0, %v3751
        %v3753 = vpop.f32.mrf.mxu0
        %3754 = vmatprep.mubr.f32.mxu0 0.0
        %3755 = vmatmul.mubr.f32.gmra.mxu0 %v3550
        %v3756 = vpop.f32.mrf.mxu0
        %v3757 = vadd.f32 0.0, %v3756
        %v3758 = vpop.f32.mrf.mxu0
        %3759 = vmatprep.mubr.f32.mxu0 0.0
        %3760 = vmatmul.mubr.f32.gmra.mxu0 %v3553
        %v3761 = vpop.f32.mrf.mxu0
        %v3762 = vadd.f32 0.0, %v3761
        %v3763 = vpop.f32.mrf.mxu0
        %3764 = vmatprep.mubr.f32.mxu0 0.0
        %3765 = vmatmul.mubr.f32.gmra.mxu0 %v3556
        %v3766 = vpop.f32.mrf.mxu0
        %v3767 = vadd.f32 0.0, %v3766
        %v3768 = vpop.f32.mrf.mxu0
        %3769 = vmatprep.mubr.f32.mxu0 0.0
        %3770 = vmatmul.mubr.f32.gmra.mxu0 %v3559
        %v3771 = vpop.f32.mrf.mxu0
        %v3772 = vadd.f32 0.0, %v3771
        %v3773 = vpop.f32.mrf.mxu0
        %3774 = vmatprep.mubr.f32.mxu0 0.0
        %3775 = vmatmul.mubr.f32.gmra.mxu0 %v3562
        %v3776 = vpop.f32.mrf.mxu0
        %v3777 = vadd.f32 0.0, %v3776
        %v3778 = vpop.f32.mrf.mxu0
        %3779 = vmatprep.mubr.f32.mxu0 0.0
        %3780 = vmatmul.mubr.f32.gmra.mxu0 %v3565
        %v3781 = vpop.f32.mrf.mxu0
        %v3782 = vadd.f32 0.0, %v3781
        %v3783 = vpop.f32.mrf.mxu0
        %3784 = vmatprep.mubr.f32.mxu0 0.0
        %3785 = vmatmul.mubr.f32.gmra.mxu0 %v3568
        %v3786 = vpop.f32.mrf.mxu0
        %v3787 = vadd.f32 0.0, %v3786
        %v3788 = vpop.f32.mrf.mxu0
        %3789 = vmatprep.mubr.f32.mxu0 0.0
        %3790 = vmatmul.mubr.f32.gmra.mxu0 %v3571
        %v3791 = vpop.f32.mrf.mxu0
        %v3792 = vadd.f32 0.0, %v3791
        %v3793 = vpop.f32.mrf.mxu0
        %3794 = vmatprep.mubr.f32.mxu0 0.0
        %3795 = vmatmul.mubr.f32.gmra.mxu0 %v3574
        %v3796 = vpop.f32.mrf.mxu0
        %v3797 = vadd.f32 0.0, %v3796
        %v3798 = vpop.f32.mrf.mxu0
        %3799 = vmatprep.mubr.f32.mxu0 0.0
        %3800 = vmatmul.mubr.f32.gmra.mxu0 %v3577
        %v3801 = vpop.f32.mrf.mxu0
        %v3802 = vadd.f32 0.0, %v3801
        %v3803 = vpop.f32.mrf.mxu0
        %3804 = vmatprep.mubr.f32.mxu0 0.0
        %3805 = vmatmul.mubr.f32.gmra.mxu0 %v3580
        %v3806 = vpop.f32.mrf.mxu0
        %v3807 = vadd.f32 0.0, %v3806
        %v3808 = vpop.f32.mrf.mxu0
        %3809 = vdwg.mxu0
        %v3810 = vadd.f32 %v2687, %v3652
        %v3811 = vadd.f32 %v2692, %v3657
        %v3812 = vadd.f32 %v2697, %v3662
        %v3813 = vadd.f32 %v2702, %v3667
        %v3814 = vadd.f32 %v2707, %v3672
        %v3815 = vadd.f32 %v2712, %v3677
        %v3816 = vadd.f32 %v2717, %v3682
        %v3817 = vadd.f32 %v2722, %v3687
        %v3818 = vadd.f32 %v2727, %v3692
        %v3819 = vadd.f32 %v2732, %v3697
        %v3820 = vadd.f32 %v2737, %v3702
        %v3821 = vadd.f32 %v2742, %v3707
        %v3822 = vadd.f32 %v2747, %v3712
        %v3823 = vadd.f32 %v2752, %v3717
        %v3824 = vadd.f32 %v2757, %v3722
        %v3825 = vadd.f32 %v2762, %v3727
        %v3826 = vadd.f32 %v2767, %v3732
        %v3827 = vadd.f32 %v2772, %v3737
        %v3828 = vadd.f32 %v2777, %v3742
        %v3829 = vadd.f32 %v2782, %v3747
        %v3830 = vadd.f32 %v2787, %v3752
        %v3831 = vadd.f32 %v2792, %v3757
        %v3832 = vadd.f32 %v2797, %v3762
        %v3833 = vadd.f32 %v2802, %v3767
        %v3834 = vadd.f32 %v2807, %v3772
        %v3835 = vadd.f32 %v2812, %v3777
        %v3836 = vadd.f32 %v2817, %v3782
        %v3837 = vadd.f32 %v2822, %v3787
        %v3838 = vadd.f32 %v2827, %v3792
        %v3839 = vadd.f32 %v2832, %v3797
        %v3840 = vadd.f32 %v2837, %v3802
        %v3841 = vadd.f32 %v2842, %v3807
        %3842 = vst.msk [vmem:[#allocation2 + $0x8] sm:$0xff] %vm1442, %v3445
        %3843 = vst.msk [vmem:[#allocation2 + $0x10] sm:$0xff] %vm1442, %v3446
        %3844 = vst.msk [vmem:[#allocation2 + $0x28] sm:$0xff] %vm1442, %v3447
        %3845 = vst.msk [vmem:[#allocation2 + $0x30] sm:$0xff] %vm1442, %v3448
        %3846 = vst.msk [vmem:[#allocation2 + $0x48] sm:$0xff] %vm1442, %v3449
        %3847 = vst.msk [vmem:[#allocation2 + $0x50] sm:$0xff] %vm1442, %v3450
        %3848 = vst.msk [vmem:[#allocation2 + $0x68] sm:$0xff] %vm1442, %v3451
        %3849 = vst.msk [vmem:[#allocation2 + $0x70] sm:$0xff] %vm1442, %v3452
        %3850 = vst.msk [vmem:[#allocation2 + $0x88] sm:$0xff] %vm1442, %v3453
        %3851 = vst.msk [vmem:[#allocation2 + $0x90] sm:$0xff] %vm1442, %v3454
        %3852 = vst.msk [vmem:[#allocation2 + $0xa8] sm:$0xff] %vm1442, %v3455
        %3853 = vst.msk [vmem:[#allocation2 + $0xb0] sm:$0xff] %vm1442, %v3456
        %3854 = vst.msk [vmem:[#allocation2 + $0xc8] sm:$0xff] %vm1442, %v3457
        %3855 = vst.msk [vmem:[#allocation2 + $0xd0] sm:$0xff] %vm1442, %v3458
        %3856 = vst.msk [vmem:[#allocation2 + $0xe8] sm:$0xff] %vm1442, %v3459
        %3857 = vst.msk [vmem:[#allocation2 + $0xf0] sm:$0xff] %vm1442, %v3460
        %3858 = vst.msk [vmem:[#allocation2 + $0x108] sm:$0xff] %vm1442, %v3461
        %3859 = vst.msk [vmem:[#allocation2 + $0x110] sm:$0xff] %vm1442, %v3462
        %3860 = vst.msk [vmem:[#allocation2 + $0x128] sm:$0xff] %vm1442, %v3463
        %3861 = vst.msk [vmem:[#allocation2 + $0x130] sm:$0xff] %vm1442, %v3464
        %3862 = vst.msk [vmem:[#allocation2 + $0x148] sm:$0xff] %vm1442, %v3465
        %3863 = vst.msk [vmem:[#allocation2 + $0x150] sm:$0xff] %vm1442, %v3466
        %3864 = vst.msk [vmem:[#allocation2 + $0x168] sm:$0xff] %vm1442, %v3467
        %3865 = vst.msk [vmem:[#allocation2 + $0x170] sm:$0xff] %vm1442, %v3468
        %3866 = vst.msk [vmem:[#allocation2 + $0x188] sm:$0xff] %vm1442, %v3469
        %3867 = vst.msk [vmem:[#allocation2 + $0x190] sm:$0xff] %vm1442, %v3470
        %3868 = vst.msk [vmem:[#allocation2 + $0x1a8] sm:$0xff] %vm1442, %v3471
        %3869 = vst.msk [vmem:[#allocation2 + $0x1b0] sm:$0xff] %vm1442, %v3472
        %3870 = vst.msk [vmem:[#allocation2 + $0x1c8] sm:$0xff] %vm1442, %v3473
        %3871 = vst.msk [vmem:[#allocation2 + $0x1d0] sm:$0xff] %vm1442, %v3474
        %3872 = vst.msk [vmem:[#allocation2 + $0x1e8] sm:$0xff] %vm1442, %v3475
        %3873 = vst.msk [vmem:[#allocation2 + $0x1f0] sm:$0xff] %vm1442, %v3476
        %3874 = vst.msk [vmem:[#allocation2 + $0x208] sm:$0xff] %vm1442, %v3477
        %3875 = vst.msk [vmem:[#allocation2 + $0x210] sm:$0xff] %vm1442, %v3478
        %3876 = vst.msk [vmem:[#allocation2 + $0x228] sm:$0xff] %vm1442, %v3479
        %3877 = vst.msk [vmem:[#allocation2 + $0x230] sm:$0xff] %vm1442, %v3480
        %3878 = vst.msk [vmem:[#allocation2 + $0x248] sm:$0xff] %vm1442, %v3481
        %3879 = vst.msk [vmem:[#allocation2 + $0x250] sm:$0xff] %vm1442, %v3482
        %3880 = vst.msk [vmem:[#allocation2 + $0x268] sm:$0xff] %vm1442, %v3483
        %3881 = vst.msk [vmem:[#allocation2 + $0x270] sm:$0xff] %vm1442, %v3484
        %v3882 = vld [vmem:[#allocation2 + $0x6] sm:$0xff]
        %v3883 = vld [vmem:[#allocation2 + $0xe] sm:$0xff]
        %v3884 = vld [vmem:[#allocation2 + $0x26] sm:$0xff]
        %v3885 = vld [vmem:[#allocation2 + $0x2e] sm:$0xff]
        %v3886 = vld [vmem:[#allocation2 + $0x46] sm:$0xff]
        %v3887 = vld [vmem:[#allocation2 + $0x4e] sm:$0xff]
        %v3888 = vld [vmem:[#allocation2 + $0x66] sm:$0xff]
        %v3889 = vld [vmem:[#allocation2 + $0x6e] sm:$0xff]
        %v3890 = vld [vmem:[#allocation2 + $0x86] sm:$0xff]
        %v3891 = vld [vmem:[#allocation2 + $0x8e] sm:$0xff]
        %v3892 = vld [vmem:[#allocation2 + $0xa6] sm:$0xff]
        %v3893 = vld [vmem:[#allocation2 + $0xae] sm:$0xff]
        %v3894 = vld [vmem:[#allocation2 + $0xc6] sm:$0xff]
        %v3895 = vld [vmem:[#allocation2 + $0xce] sm:$0xff]
        %v3896 = vld [vmem:[#allocation2 + $0xe6] sm:$0xff]
        %v3897 = vld [vmem:[#allocation2 + $0xee] sm:$0xff]
        %v3898 = vld [vmem:[#allocation2 + $0x106] sm:$0xff]
        %v3899 = vld [vmem:[#allocation2 + $0x10e] sm:$0xff]
        %v3900 = vld [vmem:[#allocation2 + $0x126] sm:$0xff]
        %v3901 = vld [vmem:[#allocation2 + $0x12e] sm:$0xff]
        %v3902 = vld [vmem:[#allocation2 + $0x146] sm:$0xff]
        %v3903 = vld [vmem:[#allocation2 + $0x14e] sm:$0xff]
        %v3904 = vld [vmem:[#allocation2 + $0x166] sm:$0xff]
        %v3905 = vld [vmem:[#allocation2 + $0x16e] sm:$0xff]
        %v3906 = vld [vmem:[#allocation2 + $0x186] sm:$0xff]
        %v3907 = vld [vmem:[#allocation2 + $0x18e] sm:$0xff]
        %v3908 = vld [vmem:[#allocation2 + $0x1a6] sm:$0xff]
        %v3909 = vld [vmem:[#allocation2 + $0x1ae] sm:$0xff]
        %v3910 = vld [vmem:[#allocation2 + $0x1c6] sm:$0xff]
        %v3911 = vld [vmem:[#allocation2 + $0x1ce] sm:$0xff]
        %v3912 = vld [vmem:[#allocation2 + $0x1e6] sm:$0xff]
        %v3913 = vld [vmem:[#allocation2 + $0x1ee] sm:$0xff]
        %v3914 = vld [vmem:[#allocation2 + $0x206] sm:$0xff]
        %v3915 = vld [vmem:[#allocation2 + $0x20e] sm:$0xff]
        %v3916 = vld [vmem:[#allocation2 + $0x226] sm:$0xff]
        %v3917 = vld [vmem:[#allocation2 + $0x22e] sm:$0xff]
        %v3918 = vld [vmem:[#allocation2 + $0x246] sm:$0xff]
        %v3919 = vld [vmem:[#allocation2 + $0x24e] sm:$0xff]
        %v3920 = vld [vmem:[#allocation2 + $0x266] sm:$0xff]
        %v3921 = vld [vmem:[#allocation2 + $0x26e] sm:$0xff]
        %v3922 = vld [vmem:[#allocation2 + $0x7] sm:$0xff]
        %v3923 = vld [vmem:[#allocation2 + $0xf] sm:$0xff]
        %v3924 = vld [vmem:[#allocation2 + $0x27] sm:$0xff]
        %v3925 = vld [vmem:[#allocation2 + $0x2f] sm:$0xff]
        %v3926 = vld [vmem:[#allocation2 + $0x47] sm:$0xff]
        %v3927 = vld [vmem:[#allocation2 + $0x4f] sm:$0xff]
        %v3928 = vld [vmem:[#allocation2 + $0x67] sm:$0xff]
        %v3929 = vld [vmem:[#allocation2 + $0x6f] sm:$0xff]
        %v3930 = vld [vmem:[#allocation2 + $0x87] sm:$0xff]
        %v3931 = vld [vmem:[#allocation2 + $0x8f] sm:$0xff]
        %v3932 = vld [vmem:[#allocation2 + $0xa7] sm:$0xff]
        %v3933 = vld [vmem:[#allocation2 + $0xaf] sm:$0xff]
        %v3934 = vld [vmem:[#allocation2 + $0xc7] sm:$0xff]
        %v3935 = vld [vmem:[#allocation2 + $0xcf] sm:$0xff]
        %v3936 = vld [vmem:[#allocation2 + $0xe7] sm:$0xff]
        %v3937 = vld [vmem:[#allocation2 + $0xef] sm:$0xff]
        %v3938 = vld [vmem:[#allocation2 + $0x107] sm:$0xff]
        %v3939 = vld [vmem:[#allocation2 + $0x10f] sm:$0xff]
        %v3940 = vld [vmem:[#allocation2 + $0x127] sm:$0xff]
        %v3941 = vld [vmem:[#allocation2 + $0x12f] sm:$0xff]
        %v3942 = vld [vmem:[#allocation2 + $0x147] sm:$0xff]
        %v3943 = vld [vmem:[#allocation2 + $0x14f] sm:$0xff]
        %v3944 = vld [vmem:[#allocation2 + $0x167] sm:$0xff]
        %v3945 = vld [vmem:[#allocation2 + $0x16f] sm:$0xff]
        %v3946 = vld [vmem:[#allocation2 + $0x187] sm:$0xff]
        %v3947 = vld [vmem:[#allocation2 + $0x18f] sm:$0xff]
        %v3948 = vld [vmem:[#allocation2 + $0x1a7] sm:$0xff]
        %v3949 = vld [vmem:[#allocation2 + $0x1af] sm:$0xff]
        %v3950 = vld [vmem:[#allocation2 + $0x1c7] sm:$0xff]
        %v3951 = vld [vmem:[#allocation2 + $0x1cf] sm:$0xff]
        %v3952 = vld [vmem:[#allocation2 + $0x1e7] sm:$0xff]
        %v3953 = vld [vmem:[#allocation2 + $0x1ef] sm:$0xff]
        %v3954 = vld [vmem:[#allocation2 + $0x207] sm:$0xff]
        %v3955 = vld [vmem:[#allocation2 + $0x20f] sm:$0xff]
        %v3956 = vld [vmem:[#allocation2 + $0x227] sm:$0xff]
        %v3957 = vld [vmem:[#allocation2 + $0x22f] sm:$0xff]
        %v3958 = vld [vmem:[#allocation2 + $0x247] sm:$0xff]
        %v3959 = vld [vmem:[#allocation2 + $0x24f] sm:$0xff]
        %v3960 = vld [vmem:[#allocation2 + $0x267] sm:$0xff]
        %v3961 = vld [vmem:[#allocation2 + $0x26f] sm:$0xff]
        %v3962 = vmax.f32 %v3882, %v3922
        %v3963 = vmax.f32 %v3883, %v3923
        %v3964 = vmax.f32 %v3884, %v3924
        %v3965 = vmax.f32 %v3885, %v3925
        %v3966 = vmax.f32 %v3886, %v3926
        %v3967 = vmax.f32 %v3887, %v3927
        %v3968 = vmax.f32 %v3888, %v3928
        %v3969 = vmax.f32 %v3889, %v3929
        %v3970 = vmax.f32 %v3890, %v3930
        %v3971 = vmax.f32 %v3891, %v3931
        %v3972 = vmax.f32 %v3892, %v3932
        %v3973 = vmax.f32 %v3893, %v3933
        %v3974 = vmax.f32 %v3894, %v3934
        %v3975 = vmax.f32 %v3895, %v3935
        %v3976 = vmax.f32 %v3896, %v3936
        %v3977 = vmax.f32 %v3897, %v3937
        %v3978 = vmax.f32 %v3898, %v3938
        %v3979 = vmax.f32 %v3899, %v3939
        %v3980 = vmax.f32 %v3900, %v3940
        %v3981 = vmax.f32 %v3901, %v3941
        %v3982 = vmax.f32 %v3902, %v3942
        %v3983 = vmax.f32 %v3903, %v3943
        %v3984 = vmax.f32 %v3904, %v3944
        %v3985 = vmax.f32 %v3905, %v3945
        %v3986 = vmax.f32 %v3906, %v3946
        %v3987 = vmax.f32 %v3907, %v3947
        %v3988 = vmax.f32 %v3908, %v3948
        %v3989 = vmax.f32 %v3909, %v3949
        %v3990 = vmax.f32 %v3910, %v3950
        %v3991 = vmax.f32 %v3911, %v3951
        %v3992 = vmax.f32 %v3912, %v3952
        %v3993 = vmax.f32 %v3913, %v3953
        %v3994 = vmax.f32 %v3914, %v3954
        %v3995 = vmax.f32 %v3915, %v3955
        %v3996 = vmax.f32 %v3916, %v3956
        %v3997 = vmax.f32 %v3917, %v3957
        %v3998 = vmax.f32 %v3918, %v3958
        %v3999 = vmax.f32 %v3919, %v3959
        %v4000 = vmax.f32 %v3920, %v3960
        %v4001 = vmax.f32 %v3921, %v3961
        %v4002 = vld [vmem:[#allocation2 + $0x8] sm:$0xff]
        %v4003 = vld [vmem:[#allocation2 + $0x10] sm:$0xff]
        %v4004 = vld [vmem:[#allocation2 + $0x28] sm:$0xff]
        %v4005 = vld [vmem:[#allocation2 + $0x30] sm:$0xff]
        %v4006 = vld [vmem:[#allocation2 + $0x48] sm:$0xff]
        %v4007 = vld [vmem:[#allocation2 + $0x50] sm:$0xff]
        %v4008 = vld [vmem:[#allocation2 + $0x68] sm:$0xff]
        %v4009 = vld [vmem:[#allocation2 + $0x70] sm:$0xff]
        %v4010 = vld [vmem:[#allocation2 + $0x88] sm:$0xff]
        %v4011 = vld [vmem:[#allocation2 + $0x90] sm:$0xff]
        %v4012 = vld [vmem:[#allocation2 + $0xa8] sm:$0xff]
        %v4013 = vld [vmem:[#allocation2 + $0xb0] sm:$0xff]
        %v4014 = vld [vmem:[#allocation2 + $0xc8] sm:$0xff]
        %v4015 = vld [vmem:[#allocation2 + $0xd0] sm:$0xff]
        %v4016 = vld [vmem:[#allocation2 + $0xe8] sm:$0xff]
        %v4017 = vld [vmem:[#allocation2 + $0xf0] sm:$0xff]
        %v4018 = vld [vmem:[#allocation2 + $0x108] sm:$0xff]
        %v4019 = vld [vmem:[#allocation2 + $0x110] sm:$0xff]
        %v4020 = vld [vmem:[#allocation2 + $0x128] sm:$0xff]
        %v4021 = vld [vmem:[#allocation2 + $0x130] sm:$0xff]
        %v4022 = vld [vmem:[#allocation2 + $0x148] sm:$0xff]
        %v4023 = vld [vmem:[#allocation2 + $0x150] sm:$0xff]
        %v4024 = vld [vmem:[#allocation2 + $0x168] sm:$0xff]
        %v4025 = vld [vmem:[#allocation2 + $0x170] sm:$0xff]
        %v4026 = vld [vmem:[#allocation2 + $0x188] sm:$0xff]
        %v4027 = vld [vmem:[#allocation2 + $0x190] sm:$0xff]
        %v4028 = vld [vmem:[#allocation2 + $0x1a8] sm:$0xff]
        %v4029 = vld [vmem:[#allocation2 + $0x1b0] sm:$0xff]
        %v4030 = vld [vmem:[#allocation2 + $0x1c8] sm:$0xff]
        %v4031 = vld [vmem:[#allocation2 + $0x1d0] sm:$0xff]
        %v4032 = vld [vmem:[#allocation2 + $0x1e8] sm:$0xff]
        %v4033 = vld [vmem:[#allocation2 + $0x1f0] sm:$0xff]
        %v4034 = vld [vmem:[#allocation2 + $0x208] sm:$0xff]
        %v4035 = vld [vmem:[#allocation2 + $0x210] sm:$0xff]
        %v4036 = vld [vmem:[#allocation2 + $0x228] sm:$0xff]
        %v4037 = vld [vmem:[#allocation2 + $0x230] sm:$0xff]
        %v4038 = vld [vmem:[#allocation2 + $0x248] sm:$0xff]
        %v4039 = vld [vmem:[#allocation2 + $0x250] sm:$0xff]
        %v4040 = vld [vmem:[#allocation2 + $0x268] sm:$0xff]
        %v4041 = vld [vmem:[#allocation2 + $0x270] sm:$0xff]
        %v4042 = vmax.f32 %v3962, %v4002
        %v4043 = vmax.f32 %v3963, %v4003
        %v4044 = vmax.f32 %v3964, %v4004
        %v4045 = vmax.f32 %v3965, %v4005
        %v4046 = vmax.f32 %v3966, %v4006
        %v4047 = vmax.f32 %v3967, %v4007
        %v4048 = vmax.f32 %v3968, %v4008
        %v4049 = vmax.f32 %v3969, %v4009
        %v4050 = vmax.f32 %v3970, %v4010
        %v4051 = vmax.f32 %v3971, %v4011
        %v4052 = vmax.f32 %v3972, %v4012
        %v4053 = vmax.f32 %v3973, %v4013
        %v4054 = vmax.f32 %v3974, %v4014
        %v4055 = vmax.f32 %v3975, %v4015
        %v4056 = vmax.f32 %v3976, %v4016
        %v4057 = vmax.f32 %v3977, %v4017
        %v4058 = vmax.f32 %v3978, %v4018
        %v4059 = vmax.f32 %v3979, %v4019
        %v4060 = vmax.f32 %v3980, %v4020
        %v4061 = vmax.f32 %v3981, %v4021
        %v4062 = vmax.f32 %v3982, %v4022
        %v4063 = vmax.f32 %v3983, %v4023
        %v4064 = vmax.f32 %v3984, %v4024
        %v4065 = vmax.f32 %v3985, %v4025
        %v4066 = vmax.f32 %v3986, %v4026
        %v4067 = vmax.f32 %v3987, %v4027
        %v4068 = vmax.f32 %v3988, %v4028
        %v4069 = vmax.f32 %v3989, %v4029
        %v4070 = vmax.f32 %v3990, %v4030
        %v4071 = vmax.f32 %v3991, %v4031
        %v4072 = vmax.f32 %v3992, %v4032
        %v4073 = vmax.f32 %v3993, %v4033
        %v4074 = vmax.f32 %v3994, %v4034
        %v4075 = vmax.f32 %v3995, %v4035
        %v4076 = vmax.f32 %v3996, %v4036
        %v4077 = vmax.f32 %v3997, %v4037
        %v4078 = vmax.f32 %v3998, %v4038
        %v4079 = vmax.f32 %v3999, %v4039
        %v4080 = vmax.f32 %v4000, %v4040
        %v4081 = vmax.f32 %v4001, %v4041
        %v4082 = vld [vmem:[#allocation2 + $0x9] sm:$0xff]
        %v4083 = vld [vmem:[#allocation2 + $0x11] sm:$0xff]
        %v4084 = vld [vmem:[#allocation2 + $0x29] sm:$0xff]
        %v4085 = vld [vmem:[#allocation2 + $0x31] sm:$0xff]
        %v4086 = vld [vmem:[#allocation2 + $0x49] sm:$0xff]
        %v4087 = vld [vmem:[#allocation2 + $0x51] sm:$0xff]
        %v4088 = vld [vmem:[#allocation2 + $0x69] sm:$0xff]
        %v4089 = vld [vmem:[#allocation2 + $0x71] sm:$0xff]
        %v4090 = vld [vmem:[#allocation2 + $0x89] sm:$0xff]
        %v4091 = vld [vmem:[#allocation2 + $0x91] sm:$0xff]
        %v4092 = vld [vmem:[#allocation2 + $0xa9] sm:$0xff]
        %v4093 = vld [vmem:[#allocation2 + $0xb1] sm:$0xff]
        %v4094 = vld [vmem:[#allocation2 + $0xc9] sm:$0xff]
        %v4095 = vld [vmem:[#allocation2 + $0xd1] sm:$0xff]
        %v4096 = vld [vmem:[#allocation2 + $0xe9] sm:$0xff]
        %v4097 = vld [vmem:[#allocation2 + $0xf1] sm:$0xff]
        %v4098 = vld [vmem:[#allocation2 + $0x109] sm:$0xff]
        %v4099 = vld [vmem:[#allocation2 + $0x111] sm:$0xff]
        %v4100 = vld [vmem:[#allocation2 + $0x129] sm:$0xff]
        %v4101 = vld [vmem:[#allocation2 + $0x131] sm:$0xff]
        %v4102 = vld [vmem:[#allocation2 + $0x149] sm:$0xff]
        %v4103 = vld [vmem:[#allocation2 + $0x151] sm:$0xff]
        %v4104 = vld [vmem:[#allocation2 + $0x169] sm:$0xff]
        %v4105 = vld [vmem:[#allocation2 + $0x171] sm:$0xff]
        %v4106 = vld [vmem:[#allocation2 + $0x189] sm:$0xff]
        %v4107 = vld [vmem:[#allocation2 + $0x191] sm:$0xff]
        %v4108 = vld [vmem:[#allocation2 + $0x1a9] sm:$0xff]
        %v4109 = vld [vmem:[#allocation2 + $0x1b1] sm:$0xff]
        %v4110 = vld [vmem:[#allocation2 + $0x1c9] sm:$0xff]
        %v4111 = vld [vmem:[#allocation2 + $0x1d1] sm:$0xff]
        %v4112 = vld [vmem:[#allocation2 + $0x1e9] sm:$0xff]
        %v4113 = vld [vmem:[#allocation2 + $0x1f1] sm:$0xff]
        %v4114 = vld [vmem:[#allocation2 + $0x209] sm:$0xff]
        %v4115 = vld [vmem:[#allocation2 + $0x211] sm:$0xff]
        %v4116 = vld [vmem:[#allocation2 + $0x229] sm:$0xff]
        %v4117 = vld [vmem:[#allocation2 + $0x231] sm:$0xff]
        %v4118 = vld [vmem:[#allocation2 + $0x249] sm:$0xff]
        %v4119 = vld [vmem:[#allocation2 + $0x251] sm:$0xff]
        %v4120 = vld [vmem:[#allocation2 + $0x269] sm:$0xff]
        %v4121 = vld [vmem:[#allocation2 + $0x271] sm:$0xff]
        %v4122 = vmax.f32 %v4042, %v4082
        %v4123 = vmax.f32 %v4043, %v4083
        %v4124 = vmax.f32 %v4044, %v4084
        %v4125 = vmax.f32 %v4045, %v4085
        %v4126 = vmax.f32 %v4046, %v4086
        %v4127 = vmax.f32 %v4047, %v4087
        %v4128 = vmax.f32 %v4048, %v4088
        %v4129 = vmax.f32 %v4049, %v4089
        %v4130 = vmax.f32 %v4050, %v4090
        %v4131 = vmax.f32 %v4051, %v4091
        %v4132 = vmax.f32 %v4052, %v4092
        %v4133 = vmax.f32 %v4053, %v4093
        %v4134 = vmax.f32 %v4054, %v4094
        %v4135 = vmax.f32 %v4055, %v4095
        %v4136 = vmax.f32 %v4056, %v4096
        %v4137 = vmax.f32 %v4057, %v4097
        %v4138 = vmax.f32 %v4058, %v4098
        %v4139 = vmax.f32 %v4059, %v4099
        %v4140 = vmax.f32 %v4060, %v4100
        %v4141 = vmax.f32 %v4061, %v4101
        %v4142 = vmax.f32 %v4062, %v4102
        %v4143 = vmax.f32 %v4063, %v4103
        %v4144 = vmax.f32 %v4064, %v4104
        %v4145 = vmax.f32 %v4065, %v4105
        %v4146 = vmax.f32 %v4066, %v4106
        %v4147 = vmax.f32 %v4067, %v4107
        %v4148 = vmax.f32 %v4068, %v4108
        %v4149 = vmax.f32 %v4069, %v4109
        %v4150 = vmax.f32 %v4070, %v4110
        %v4151 = vmax.f32 %v4071, %v4111
        %v4152 = vmax.f32 %v4072, %v4112
        %v4153 = vmax.f32 %v4073, %v4113
        %v4154 = vmax.f32 %v4074, %v4114
        %v4155 = vmax.f32 %v4075, %v4115
        %v4156 = vmax.f32 %v4076, %v4116
        %v4157 = vmax.f32 %v4077, %v4117
        %v4158 = vmax.f32 %v4078, %v4118
        %v4159 = vmax.f32 %v4079, %v4119
        %v4160 = vmax.f32 %v4080, %v4120
        %v4161 = vmax.f32 %v4081, %v4121
        %v4162 = vld [vmem:[#allocation2 + $0xa] sm:$0xff]
        %v4163 = vld [vmem:[#allocation2 + $0x12] sm:$0xff]
        %v4164 = vld [vmem:[#allocation2 + $0x2a] sm:$0xff]
        %v4165 = vld [vmem:[#allocation2 + $0x32] sm:$0xff]
        %v4166 = vld [vmem:[#allocation2 + $0x4a] sm:$0xff]
        %v4167 = vld [vmem:[#allocation2 + $0x52] sm:$0xff]
        %v4168 = vld [vmem:[#allocation2 + $0x6a] sm:$0xff]
        %v4169 = vld [vmem:[#allocation2 + $0x72] sm:$0xff]
        %v4170 = vld [vmem:[#allocation2 + $0x8a] sm:$0xff]
        %v4171 = vld [vmem:[#allocation2 + $0x92] sm:$0xff]
        %v4172 = vld [vmem:[#allocation2 + $0xaa] sm:$0xff]
        %v4173 = vld [vmem:[#allocation2 + $0xb2] sm:$0xff]
        %v4174 = vld [vmem:[#allocation2 + $0xca] sm:$0xff]
        %v4175 = vld [vmem:[#allocation2 + $0xd2] sm:$0xff]
        %v4176 = vld [vmem:[#allocation2 + $0xea] sm:$0xff]
        %v4177 = vld [vmem:[#allocation2 + $0xf2] sm:$0xff]
        %v4178 = vld [vmem:[#allocation2 + $0x10a] sm:$0xff]
        %v4179 = vld [vmem:[#allocation2 + $0x112] sm:$0xff]
        %v4180 = vld [vmem:[#allocation2 + $0x12a] sm:$0xff]
        %v4181 = vld [vmem:[#allocation2 + $0x132] sm:$0xff]
        %v4182 = vld [vmem:[#allocation2 + $0x14a] sm:$0xff]
        %v4183 = vld [vmem:[#allocation2 + $0x152] sm:$0xff]
        %v4184 = vld [vmem:[#allocation2 + $0x16a] sm:$0xff]
        %v4185 = vld [vmem:[#allocation2 + $0x172] sm:$0xff]
        %v4186 = vld [vmem:[#allocation2 + $0x18a] sm:$0xff]
        %v4187 = vld [vmem:[#allocation2 + $0x192] sm:$0xff]
        %v4188 = vld [vmem:[#allocation2 + $0x1aa] sm:$0xff]
        %v4189 = vld [vmem:[#allocation2 + $0x1b2] sm:$0xff]
        %v4190 = vld [vmem:[#allocation2 + $0x1ca] sm:$0xff]
        %v4191 = vld [vmem:[#allocation2 + $0x1d2] sm:$0xff]
        %v4192 = vld [vmem:[#allocation2 + $0x1ea] sm:$0xff]
        %v4193 = vld [vmem:[#allocation2 + $0x1f2] sm:$0xff]
        %v4194 = vld [vmem:[#allocation2 + $0x20a] sm:$0xff]
        %v4195 = vld [vmem:[#allocation2 + $0x212] sm:$0xff]
        %v4196 = vld [vmem:[#allocation2 + $0x22a] sm:$0xff]
        %v4197 = vld [vmem:[#allocation2 + $0x232] sm:$0xff]
        %v4198 = vld [vmem:[#allocation2 + $0x24a] sm:$0xff]
        %v4199 = vld [vmem:[#allocation2 + $0x252] sm:$0xff]
        %v4200 = vld [vmem:[#allocation2 + $0x26a] sm:$0xff]
        %v4201 = vld [vmem:[#allocation2 + $0x272] sm:$0xff]
        %v4202 = vmax.f32 %v4122, %v4162
        %v4203 = vmax.f32 %v4123, %v4163
        %v4204 = vmax.f32 %v4124, %v4164
        %v4205 = vmax.f32 %v4125, %v4165
        %v4206 = vmax.f32 %v4126, %v4166
        %v4207 = vmax.f32 %v4127, %v4167
        %v4208 = vmax.f32 %v4128, %v4168
        %v4209 = vmax.f32 %v4129, %v4169
        %v4210 = vmax.f32 %v4130, %v4170
        %v4211 = vmax.f32 %v4131, %v4171
        %v4212 = vmax.f32 %v4132, %v4172
        %v4213 = vmax.f32 %v4133, %v4173
        %v4214 = vmax.f32 %v4134, %v4174
        %v4215 = vmax.f32 %v4135, %v4175
        %v4216 = vmax.f32 %v4136, %v4176
        %v4217 = vmax.f32 %v4137, %v4177
        %v4218 = vmax.f32 %v4138, %v4178
        %v4219 = vmax.f32 %v4139, %v4179
        %v4220 = vmax.f32 %v4140, %v4180
        %v4221 = vmax.f32 %v4141, %v4181
        %v4222 = vmax.f32 %v4142, %v4182
        %v4223 = vmax.f32 %v4143, %v4183
        %v4224 = vmax.f32 %v4144, %v4184
        %v4225 = vmax.f32 %v4145, %v4185
        %v4226 = vmax.f32 %v4146, %v4186
        %v4227 = vmax.f32 %v4147, %v4187
        %v4228 = vmax.f32 %v4148, %v4188
        %v4229 = vmax.f32 %v4149, %v4189
        %v4230 = vmax.f32 %v4150, %v4190
        %v4231 = vmax.f32 %v4151, %v4191
        %v4232 = vmax.f32 %v4152, %v4192
        %v4233 = vmax.f32 %v4153, %v4193
        %v4234 = vmax.f32 %v4154, %v4194
        %v4235 = vmax.f32 %v4155, %v4195
        %v4236 = vmax.f32 %v4156, %v4196
        %v4237 = vmax.f32 %v4157, %v4197
        %v4238 = vmax.f32 %v4158, %v4198
        %v4239 = vmax.f32 %v4159, %v4199
        %v4240 = vmax.f32 %v4160, %v4200
        %v4241 = vmax.f32 %v4161, %v4201
        %v4242 = vmax.f32 %v4202, %v4204
        %v4243 = vmax.f32 %v4203, %v4205
        %v4244 = vmax.f32 %v4204, %v4206
        %v4245 = vmax.f32 %v4205, %v4207
        %v4246 = vmax.f32 %v4206, %v4208
        %v4247 = vmax.f32 %v4207, %v4209
        %v4248 = vmax.f32 %v4208, %v4210
        %v4249 = vmax.f32 %v4209, %v4211
        %v4250 = vmax.f32 %v4210, %v4212
        %v4251 = vmax.f32 %v4211, %v4213
        %v4252 = vmax.f32 %v4212, %v4214
        %v4253 = vmax.f32 %v4213, %v4215
        %v4254 = vmax.f32 %v4214, %v4216
        %v4255 = vmax.f32 %v4215, %v4217
        %v4256 = vmax.f32 %v4216, %v4218
        %v4257 = vmax.f32 %v4217, %v4219
        %v4258 = vmax.f32 %v4218, %v4220
        %v4259 = vmax.f32 %v4219, %v4221
        %v4260 = vmax.f32 %v4220, %v4222
        %v4261 = vmax.f32 %v4221, %v4223
        %v4262 = vmax.f32 %v4222, %v4224
        %v4263 = vmax.f32 %v4223, %v4225
        %v4264 = vmax.f32 %v4224, %v4226
        %v4265 = vmax.f32 %v4225, %v4227
        %v4266 = vmax.f32 %v4226, %v4228
        %v4267 = vmax.f32 %v4227, %v4229
        %v4268 = vmax.f32 %v4228, %v4230
        %v4269 = vmax.f32 %v4229, %v4231
        %v4270 = vmax.f32 %v4230, %v4232
        %v4271 = vmax.f32 %v4231, %v4233
        %v4272 = vmax.f32 %v4232, %v4234
        %v4273 = vmax.f32 %v4233, %v4235
        %v4274 = vmax.f32 %v4242, %v4206
        %v4275 = vmax.f32 %v4243, %v4207
        %v4276 = vmax.f32 %v4244, %v4208
        %v4277 = vmax.f32 %v4245, %v4209
        %v4278 = vmax.f32 %v4246, %v4210
        %v4279 = vmax.f32 %v4247, %v4211
        %v4280 = vmax.f32 %v4248, %v4212
        %v4281 = vmax.f32 %v4249, %v4213
        %v4282 = vmax.f32 %v4250, %v4214
        %v4283 = vmax.f32 %v4251, %v4215
        %v4284 = vmax.f32 %v4252, %v4216
        %v4285 = vmax.f32 %v4253, %v4217
        %v4286 = vmax.f32 %v4254, %v4218
        %v4287 = vmax.f32 %v4255, %v4219
        %v4288 = vmax.f32 %v4256, %v4220
        %v4289 = vmax.f32 %v4257, %v4221
        %v4290 = vmax.f32 %v4258, %v4222
        %v4291 = vmax.f32 %v4259, %v4223
        %v4292 = vmax.f32 %v4260, %v4224
        %v4293 = vmax.f32 %v4261, %v4225
        %v4294 = vmax.f32 %v4262, %v4226
        %v4295 = vmax.f32 %v4263, %v4227
        %v4296 = vmax.f32 %v4264, %v4228
        %v4297 = vmax.f32 %v4265, %v4229
        %v4298 = vmax.f32 %v4266, %v4230
        %v4299 = vmax.f32 %v4267, %v4231
        %v4300 = vmax.f32 %v4268, %v4232
        %v4301 = vmax.f32 %v4269, %v4233
        %v4302 = vmax.f32 %v4270, %v4234
        %v4303 = vmax.f32 %v4271, %v4235
        %v4304 = vmax.f32 %v4272, %v4236
        %v4305 = vmax.f32 %v4273, %v4237
        %v4306 = vmax.f32 %v4274, %v4208
        %v4307 = vmax.f32 %v4275, %v4209
        %v4308 = vmax.f32 %v4276, %v4210
        %v4309 = vmax.f32 %v4277, %v4211
        %v4310 = vmax.f32 %v4278, %v4212
        %v4311 = vmax.f32 %v4279, %v4213
        %v4312 = vmax.f32 %v4280, %v4214
        %v4313 = vmax.f32 %v4281, %v4215
        %v4314 = vmax.f32 %v4282, %v4216
        %v4315 = vmax.f32 %v4283, %v4217
        %v4316 = vmax.f32 %v4284, %v4218
        %v4317 = vmax.f32 %v4285, %v4219
        %v4318 = vmax.f32 %v4286, %v4220
        %v4319 = vmax.f32 %v4287, %v4221
        %v4320 = vmax.f32 %v4288, %v4222
        %v4321 = vmax.f32 %v4289, %v4223
        %v4322 = vmax.f32 %v4290, %v4224
        %v4323 = vmax.f32 %v4291, %v4225
        %v4324 = vmax.f32 %v4292, %v4226
        %v4325 = vmax.f32 %v4293, %v4227
        %v4326 = vmax.f32 %v4294, %v4228
        %v4327 = vmax.f32 %v4295, %v4229
        %v4328 = vmax.f32 %v4296, %v4230
        %v4329 = vmax.f32 %v4297, %v4231
        %v4330 = vmax.f32 %v4298, %v4232
        %v4331 = vmax.f32 %v4299, %v4233
        %v4332 = vmax.f32 %v4300, %v4234
        %v4333 = vmax.f32 %v4301, %v4235
        %v4334 = vmax.f32 %v4302, %v4236
        %v4335 = vmax.f32 %v4303, %v4237
        %v4336 = vmax.f32 %v4304, %v4238
        %v4337 = vmax.f32 %v4305, %v4239
        %v4338 = vmax.f32 %v4306, %v4210
        %v4339 = vmax.f32 %v4307, %v4211
        %v4340 = vmax.f32 %v4308, %v4212
        %v4341 = vmax.f32 %v4309, %v4213
        %v4342 = vmax.f32 %v4310, %v4214
        %v4343 = vmax.f32 %v4311, %v4215
        %v4344 = vmax.f32 %v4312, %v4216
        %v4345 = vmax.f32 %v4313, %v4217
        %v4346 = vmax.f32 %v4314, %v4218
        %v4347 = vmax.f32 %v4315, %v4219
        %v4348 = vmax.f32 %v4316, %v4220
        %v4349 = vmax.f32 %v4317, %v4221
        %v4350 = vmax.f32 %v4318, %v4222
        %v4351 = vmax.f32 %v4319, %v4223
        %v4352 = vmax.f32 %v4320, %v4224
        %v4353 = vmax.f32 %v4321, %v4225
        %v4354 = vmax.f32 %v4322, %v4226
        %v4355 = vmax.f32 %v4323, %v4227
        %v4356 = vmax.f32 %v4324, %v4228
        %v4357 = vmax.f32 %v4325, %v4229
        %v4358 = vmax.f32 %v4326, %v4230
        %v4359 = vmax.f32 %v4327, %v4231
        %v4360 = vmax.f32 %v4328, %v4232
        %v4361 = vmax.f32 %v4329, %v4233
        %v4362 = vmax.f32 %v4330, %v4234
        %v4363 = vmax.f32 %v4331, %v4235
        %v4364 = vmax.f32 %v4332, %v4236
        %v4365 = vmax.f32 %v4333, %v4237
        %v4366 = vmax.f32 %v4334, %v4238
        %v4367 = vmax.f32 %v4335, %v4239
        %v4368 = vmax.f32 %v4336, %v4240
        %v4369 = vmax.f32 %v4337, %v4241
        %v4370 = vld [vmem:[%s3 + $0x6] sm:$0x3]
        %v4372 = vsel %vm1442, %v4338, 0
        %v4375 = vsel %vm1442, %v4339, 0
        %v4378 = vsel %vm1442, %v4340, 0
        %v4381 = vsel %vm1442, %v4341, 0
        %v4384 = vsel %vm1442, %v4342, 0
        %v4387 = vsel %vm1442, %v4343, 0
        %v4390 = vsel %vm1442, %v4344, 0
        %v4393 = vsel %vm1442, %v4345, 0
        %v4396 = vsel %vm1442, %v4346, 0
        %v4399 = vsel %vm1442, %v4347, 0
        %v4402 = vsel %vm1442, %v4348, 0
        %v4405 = vsel %vm1442, %v4349, 0
        %v4408 = vsel %vm1442, %v4350, 0
        %v4411 = vsel %vm1442, %v4351, 0
        %v4414 = vsel %vm1442, %v4352, 0
        %v4417 = vsel %vm1442, %v4353, 0
        %v4420 = vsel %vm1442, %v4354, 0
        %v4423 = vsel %vm1442, %v4355, 0
        %v4426 = vsel %vm1442, %v4356, 0
        %v4429 = vsel %vm1442, %v4357, 0
        %v4432 = vsel %vm1442, %v4358, 0
        %v4435 = vsel %vm1442, %v4359, 0
        %v4438 = vsel %vm1442, %v4360, 0
        %v4441 = vsel %vm1442, %v4361, 0
        %v4444 = vsel %vm1442, %v4362, 0
        %v4447 = vsel %vm1442, %v4363, 0
        %v4450 = vsel %vm1442, %v4364, 0
        %v4453 = vsel %vm1442, %v4365, 0
        %v4456 = vsel %vm1442, %v4366, 0
        %v4459 = vsel %vm1442, %v4367, 0
        %v4462 = vsel %vm1442, %v4368, 0
        %v4465 = vsel %vm1442, %v4369, 0
        %v4468 = vsel %vm2292, %v4370, 0
        %4470 = vmatprep.subr.mxu0 0.0
        %4471 = vmatpush1.msra.mxu0 0.0
        %4472 = vmatprep.subr.mxu0 0.0
        %4473 = vmatpush1.msra.mxu0 0.0
        %4474 = vmatprep.subr.mxu0 0.0
        %4475 = vmatpush1.msra.mxu0 0.0
        %4476 = vmatprep.subr.mxu0 0.0
        %4477 = vmatpush1.msra.mxu0 0.0
        %4478 = vmatprep.subr.mxu0 0.0
        %4479 = vmatpush1.msra.mxu0 0.0
        %4480 = vmatprep.subr.mxu0 0.0
        %4481 = vmatpush1.msra.mxu0 0.0
        %4482 = vmatprep.subr.mxu0 0.0
        %4483 = vmatpush1.msra.mxu0 0.0
        %4484 = vmatprep.subr.mxu0 0.0
        %4485 = vmatpush1.msra.mxu0 0.0
        %4486 = vmatprep.subr.mxu0 0.0
        %4487 = vmatpush1.msra.mxu0 0.0
        %4488 = vmatprep.subr.mxu0 0.0
        %4489 = vmatpush1.msra.mxu0 0.0
        %4490 = vmatprep.subr.mxu0 0.0
        %4491 = vmatpush1.msra.mxu0 0.0
        %4492 = vmatprep.subr.mxu0 0.0
        %4493 = vmatpush1.msra.mxu0 0.0
        %4494 = vmatprep.subr.mxu0 0.0
        %4495 = vmatpush1.msra.mxu0 0.0
        %4496 = vmatprep.subr.mxu0 0.0
        %4497 = vmatpush1.msra.mxu0 0.0
        %4498 = vmatprep.subr.mxu0 0.0
        %4499 = vmatpush1.msra.mxu0 0.0
        %4500 = vmatprep.subr.mxu0 0.0
        %4501 = vmatpush1.msra.mxu0 %v4468
        %4502 = vmatprep.subr.mxu0 0.0
        %4503 = vmatpush2.msra.mxu0 0.0
        %4504 = vmatprep.subr.mxu0 0.0
        %4505 = vmatpush2.msra.mxu0 0.0
        %4506 = vmatprep.subr.mxu0 0.0
        %4507 = vmatpush2.msra.mxu0 0.0
        %4508 = vmatprep.subr.mxu0 0.0
        %4509 = vmatpush2.msra.mxu0 0.0
        %4510 = vmatprep.subr.mxu0 0.0
        %4511 = vmatpush2.msra.mxu0 0.0
        %4512 = vmatprep.subr.mxu0 0.0
        %4513 = vmatpush2.msra.mxu0 0.0
        %4514 = vmatprep.subr.mxu0 0.0
        %4515 = vmatpush2.msra.mxu0 0.0
        %4516 = vmatprep.subr.mxu0 0.0
        %4517 = vmatpush2.msra.mxu0 0.0
        %4518 = vmatprep.subr.mxu0 0.0
        %4519 = vmatpush2.msra.mxu0 0.0
        %4520 = vmatprep.subr.mxu0 0.0
        %4521 = vmatpush2.msra.mxu0 0.0
        %4522 = vmatprep.subr.mxu0 0.0
        %4523 = vmatpush2.msra.mxu0 0.0
        %4524 = vmatprep.subr.mxu0 0.0
        %4525 = vmatpush2.msra.mxu0 0.0
        %4526 = vmatprep.subr.mxu0 0.0
        %4527 = vmatpush2.msra.mxu0 0.0
        %4528 = vmatprep.subr.mxu0 0.0
        %4529 = vmatpush2.msra.mxu0 0.0
        %4530 = vmatprep.subr.mxu0 0.0
        %4531 = vmatpush2.msra.mxu0 0.0
        %4532 = vmatprep.subr.mxu0 0.0
        %4533 = vmatpush2.msra.mxu0 0.0
        %4534 = vmatprep.mubr.f32.mxu0 0.0
        %4535 = vmatmul.mubr.f32.gmra.mxu0 %v4372
        %v4536 = vpop.f32.mrf.mxu0
        %v4537 = vadd.f32 0.0, %v4536
        %v4538 = vpop.f32.mrf.mxu0
        %4539 = vmatprep.mubr.f32.mxu0 0.0
        %4540 = vmatmul.mubr.f32.gmra.mxu0 %v4375
        %v4541 = vpop.f32.mrf.mxu0
        %v4542 = vadd.f32 0.0, %v4541
        %v4543 = vpop.f32.mrf.mxu0
        %4544 = vmatprep.mubr.f32.mxu0 0.0
        %4545 = vmatmul.mubr.f32.gmra.mxu0 %v4378
        %v4546 = vpop.f32.mrf.mxu0
        %v4547 = vadd.f32 0.0, %v4546
        %v4548 = vpop.f32.mrf.mxu0
        %4549 = vmatprep.mubr.f32.mxu0 0.0
        %4550 = vmatmul.mubr.f32.gmra.mxu0 %v4381
        %v4551 = vpop.f32.mrf.mxu0
        %v4552 = vadd.f32 0.0, %v4551
        %v4553 = vpop.f32.mrf.mxu0
        %4554 = vmatprep.mubr.f32.mxu0 0.0
        %4555 = vmatmul.mubr.f32.gmra.mxu0 %v4384
        %v4556 = vpop.f32.mrf.mxu0
        %v4557 = vadd.f32 0.0, %v4556
        %v4558 = vpop.f32.mrf.mxu0
        %4559 = vmatprep.mubr.f32.mxu0 0.0
        %4560 = vmatmul.mubr.f32.gmra.mxu0 %v4387
        %v4561 = vpop.f32.mrf.mxu0
        %v4562 = vadd.f32 0.0, %v4561
        %v4563 = vpop.f32.mrf.mxu0
        %4564 = vmatprep.mubr.f32.mxu0 0.0
        %4565 = vmatmul.mubr.f32.gmra.mxu0 %v4390
        %v4566 = vpop.f32.mrf.mxu0
        %v4567 = vadd.f32 0.0, %v4566
        %v4568 = vpop.f32.mrf.mxu0
        %4569 = vmatprep.mubr.f32.mxu0 0.0
        %4570 = vmatmul.mubr.f32.gmra.mxu0 %v4393
        %v4571 = vpop.f32.mrf.mxu0
        %v4572 = vadd.f32 0.0, %v4571
        %v4573 = vpop.f32.mrf.mxu0
        %4574 = vmatprep.mubr.f32.mxu0 0.0
        %4575 = vmatmul.mubr.f32.gmra.mxu0 %v4396
        %v4576 = vpop.f32.mrf.mxu0
        %v4577 = vadd.f32 0.0, %v4576
        %v4578 = vpop.f32.mrf.mxu0
        %4579 = vmatprep.mubr.f32.mxu0 0.0
        %4580 = vmatmul.mubr.f32.gmra.mxu0 %v4399
        %v4581 = vpop.f32.mrf.mxu0
        %v4582 = vadd.f32 0.0, %v4581
        %v4583 = vpop.f32.mrf.mxu0
        %4584 = vmatprep.mubr.f32.mxu0 0.0
        %4585 = vmatmul.mubr.f32.gmra.mxu0 %v4402
        %v4586 = vpop.f32.mrf.mxu0
        %v4587 = vadd.f32 0.0, %v4586
        %v4588 = vpop.f32.mrf.mxu0
        %4589 = vmatprep.mubr.f32.mxu0 0.0
        %4590 = vmatmul.mubr.f32.gmra.mxu0 %v4405
        %v4591 = vpop.f32.mrf.mxu0
        %v4592 = vadd.f32 0.0, %v4591
        %v4593 = vpop.f32.mrf.mxu0
        %4594 = vmatprep.mubr.f32.mxu0 0.0
        %4595 = vmatmul.mubr.f32.gmra.mxu0 %v4408
        %v4596 = vpop.f32.mrf.mxu0
        %v4597 = vadd.f32 0.0, %v4596
        %v4598 = vpop.f32.mrf.mxu0
        %4599 = vmatprep.mubr.f32.mxu0 0.0
        %4600 = vmatmul.mubr.f32.gmra.mxu0 %v4411
        %v4601 = vpop.f32.mrf.mxu0
        %v4602 = vadd.f32 0.0, %v4601
        %v4603 = vpop.f32.mrf.mxu0
        %4604 = vmatprep.mubr.f32.mxu0 0.0
        %4605 = vmatmul.mubr.f32.gmra.mxu0 %v4414
        %v4606 = vpop.f32.mrf.mxu0
        %v4607 = vadd.f32 0.0, %v4606
        %v4608 = vpop.f32.mrf.mxu0
        %4609 = vmatprep.mubr.f32.mxu0 0.0
        %4610 = vmatmul.mubr.f32.gmra.mxu0 %v4417
        %v4611 = vpop.f32.mrf.mxu0
        %v4612 = vadd.f32 0.0, %v4611
        %v4613 = vpop.f32.mrf.mxu0
        %4614 = vmatprep.mubr.f32.mxu0 0.0
        %4615 = vmatmul.mubr.f32.gmra.mxu0 %v4420
        %v4616 = vpop.f32.mrf.mxu0
        %v4617 = vadd.f32 0.0, %v4616
        %v4618 = vpop.f32.mrf.mxu0
        %4619 = vmatprep.mubr.f32.mxu0 0.0
        %4620 = vmatmul.mubr.f32.gmra.mxu0 %v4423
        %v4621 = vpop.f32.mrf.mxu0
        %v4622 = vadd.f32 0.0, %v4621
        %v4623 = vpop.f32.mrf.mxu0
        %4624 = vmatprep.mubr.f32.mxu0 0.0
        %4625 = vmatmul.mubr.f32.gmra.mxu0 %v4426
        %v4626 = vpop.f32.mrf.mxu0
        %v4627 = vadd.f32 0.0, %v4626
        %v4628 = vpop.f32.mrf.mxu0
        %4629 = vmatprep.mubr.f32.mxu0 0.0
        %4630 = vmatmul.mubr.f32.gmra.mxu0 %v4429
        %v4631 = vpop.f32.mrf.mxu0
        %v4632 = vadd.f32 0.0, %v4631
        %v4633 = vpop.f32.mrf.mxu0
        %4634 = vmatprep.mubr.f32.mxu0 0.0
        %4635 = vmatmul.mubr.f32.gmra.mxu0 %v4432
        %v4636 = vpop.f32.mrf.mxu0
        %v4637 = vadd.f32 0.0, %v4636
        %v4638 = vpop.f32.mrf.mxu0
        %4639 = vmatprep.mubr.f32.mxu0 0.0
        %4640 = vmatmul.mubr.f32.gmra.mxu0 %v4435
        %v4641 = vpop.f32.mrf.mxu0
        %v4642 = vadd.f32 0.0, %v4641
        %v4643 = vpop.f32.mrf.mxu0
        %4644 = vmatprep.mubr.f32.mxu0 0.0
        %4645 = vmatmul.mubr.f32.gmra.mxu0 %v4438
        %v4646 = vpop.f32.mrf.mxu0
        %v4647 = vadd.f32 0.0, %v4646
        %v4648 = vpop.f32.mrf.mxu0
        %4649 = vmatprep.mubr.f32.mxu0 0.0
        %4650 = vmatmul.mubr.f32.gmra.mxu0 %v4441
        %v4651 = vpop.f32.mrf.mxu0
        %v4652 = vadd.f32 0.0, %v4651
        %v4653 = vpop.f32.mrf.mxu0
        %4654 = vmatprep.mubr.f32.mxu0 0.0
        %4655 = vmatmul.mubr.f32.gmra.mxu0 %v4444
        %v4656 = vpop.f32.mrf.mxu0
        %v4657 = vadd.f32 0.0, %v4656
        %v4658 = vpop.f32.mrf.mxu0
        %4659 = vmatprep.mubr.f32.mxu0 0.0
        %4660 = vmatmul.mubr.f32.gmra.mxu0 %v4447
        %v4661 = vpop.f32.mrf.mxu0
        %v4662 = vadd.f32 0.0, %v4661
        %v4663 = vpop.f32.mrf.mxu0
        %4664 = vmatprep.mubr.f32.mxu0 0.0
        %4665 = vmatmul.mubr.f32.gmra.mxu0 %v4450
        %v4666 = vpop.f32.mrf.mxu0
        %v4667 = vadd.f32 0.0, %v4666
        %v4668 = vpop.f32.mrf.mxu0
        %4669 = vmatprep.mubr.f32.mxu0 0.0
        %4670 = vmatmul.mubr.f32.gmra.mxu0 %v4453
        %v4671 = vpop.f32.mrf.mxu0
        %v4672 = vadd.f32 0.0, %v4671
        %v4673 = vpop.f32.mrf.mxu0
        %4674 = vmatprep.mubr.f32.mxu0 0.0
        %4675 = vmatmul.mubr.f32.gmra.mxu0 %v4456
        %v4676 = vpop.f32.mrf.mxu0
        %v4677 = vadd.f32 0.0, %v4676
        %v4678 = vpop.f32.mrf.mxu0
        %4679 = vmatprep.mubr.f32.mxu0 0.0
        %4680 = vmatmul.mubr.f32.gmra.mxu0 %v4459
        %v4681 = vpop.f32.mrf.mxu0
        %v4682 = vadd.f32 0.0, %v4681
        %v4683 = vpop.f32.mrf.mxu0
        %4684 = vmatprep.mubr.f32.mxu0 0.0
        %4685 = vmatmul.mubr.f32.gmra.mxu0 %v4462
        %v4686 = vpop.f32.mrf.mxu0
        %v4687 = vadd.f32 0.0, %v4686
        %v4688 = vpop.f32.mrf.mxu0
        %4689 = vmatprep.mubr.f32.mxu0 0.0
        %4690 = vmatmul.mubr.f32.gmra.mxu0 %v4465
        %v4691 = vpop.f32.mrf.mxu0
        %v4692 = vadd.f32 0.0, %v4691
        %v4693 = vpop.f32.mrf.mxu0
        %4694 = vdwg.mxu0
        %v4695 = vadd.f32 %v3810, %v4537
        %v4696 = vadd.f32 %v3811, %v4542
        %v4697 = vadd.f32 %v3812, %v4547
        %v4698 = vadd.f32 %v3813, %v4552
        %v4699 = vadd.f32 %v3814, %v4557
        %v4700 = vadd.f32 %v3815, %v4562
        %v4701 = vadd.f32 %v3816, %v4567
        %v4702 = vadd.f32 %v3817, %v4572
        %v4703 = vadd.f32 %v3818, %v4577
        %v4704 = vadd.f32 %v3819, %v4582
        %v4705 = vadd.f32 %v3820, %v4587
        %v4706 = vadd.f32 %v3821, %v4592
        %v4707 = vadd.f32 %v3822, %v4597
        %v4708 = vadd.f32 %v3823, %v4602
        %v4709 = vadd.f32 %v3824, %v4607
        %v4710 = vadd.f32 %v3825, %v4612
        %v4711 = vadd.f32 %v3826, %v4617
        %v4712 = vadd.f32 %v3827, %v4622
        %v4713 = vadd.f32 %v3828, %v4627
        %v4714 = vadd.f32 %v3829, %v4632
        %v4715 = vadd.f32 %v3830, %v4637
        %v4716 = vadd.f32 %v3831, %v4642
        %v4717 = vadd.f32 %v3832, %v4647
        %v4718 = vadd.f32 %v3833, %v4652
        %v4719 = vadd.f32 %v3834, %v4657
        %v4720 = vadd.f32 %v3835, %v4662
        %v4721 = vadd.f32 %v3836, %v4667
        %v4722 = vadd.f32 %v3837, %v4672
        %v4723 = vadd.f32 %v3838, %v4677
        %v4724 = vadd.f32 %v3839, %v4682
        %v4725 = vadd.f32 %v3840, %v4687
        %v4726 = vadd.f32 %v3841, %v4692
        %v4727 = vld [vmem:[%s4] sm:$0x1]
        %v4729 = vlaneseq
        %v4730 = vshrl.u32 %v4729, 7
        %v4731 = vsub.s32 0, %v4730
        %v4732 = vrot.slane %v4727, %v4731
        %v4734 = vadd.f32 %v4695, %v4732
        %v4735 = vadd.f32 %v4696, %v4732
        %v4736 = vadd.f32 %v4697, %v4732
        %v4737 = vadd.f32 %v4698, %v4732
        %v4738 = vadd.f32 %v4699, %v4732
        %v4739 = vadd.f32 %v4700, %v4732
        %v4740 = vadd.f32 %v4701, %v4732
        %v4741 = vadd.f32 %v4702, %v4732
        %v4742 = vadd.f32 %v4703, %v4732
        %v4743 = vadd.f32 %v4704, %v4732
        %v4744 = vadd.f32 %v4705, %v4732
        %v4745 = vadd.f32 %v4706, %v4732
        %v4746 = vadd.f32 %v4707, %v4732
        %v4747 = vadd.f32 %v4708, %v4732
        %v4748 = vadd.f32 %v4709, %v4732
        %v4749 = vadd.f32 %v4710, %v4732
        %v4750 = vadd.f32 %v4711, %v4732
        %v4751 = vadd.f32 %v4712, %v4732
        %v4752 = vadd.f32 %v4713, %v4732
        %v4753 = vadd.f32 %v4714, %v4732
        %v4754 = vadd.f32 %v4715, %v4732
        %v4755 = vadd.f32 %v4716, %v4732
        %v4756 = vadd.f32 %v4717, %v4732
        %v4757 = vadd.f32 %v4718, %v4732
        %v4758 = vadd.f32 %v4719, %v4732
        %v4759 = vadd.f32 %v4720, %v4732
        %v4760 = vadd.f32 %v4721, %v4732
        %v4761 = vadd.f32 %v4722, %v4732
        %v4762 = vadd.f32 %v4723, %v4732
        %v4763 = vadd.f32 %v4724, %v4732
        %v4764 = vadd.f32 %v4725, %v4732
        %v4765 = vadd.f32 %v4726, %v4732
        %v4766 = vsub.f32 0.0, %v4734
        %v4767 = vsub.f32 0.0, %v4735
        %v4768 = vsub.f32 0.0, %v4736
        %v4769 = vsub.f32 0.0, %v4737
        %v4770 = vsub.f32 0.0, %v4738
        %v4771 = vsub.f32 0.0, %v4739
        %v4772 = vsub.f32 0.0, %v4740
        %v4773 = vsub.f32 0.0, %v4741
        %v4774 = vsub.f32 0.0, %v4742
        %v4775 = vsub.f32 0.0, %v4743
        %v4776 = vsub.f32 0.0, %v4744
        %v4777 = vsub.f32 0.0, %v4745
        %v4778 = vsub.f32 0.0, %v4746
        %v4779 = vsub.f32 0.0, %v4747
        %v4780 = vsub.f32 0.0, %v4748
        %v4781 = vsub.f32 0.0, %v4749
        %v4782 = vsub.f32 0.0, %v4750
        %v4783 = vsub.f32 0.0, %v4751
        %v4784 = vsub.f32 0.0, %v4752
        %v4785 = vsub.f32 0.0, %v4753
        %v4786 = vsub.f32 0.0, %v4754
        %v4787 = vsub.f32 0.0, %v4755
        %v4788 = vsub.f32 0.0, %v4756
        %v4789 = vsub.f32 0.0, %v4757
        %v4790 = vsub.f32 0.0, %v4758
        %v4791 = vsub.f32 0.0, %v4759
        %v4792 = vsub.f32 0.0, %v4760
        %v4793 = vsub.f32 0.0, %v4761
        %v4794 = vsub.f32 0.0, %v4762
        %v4795 = vsub.f32 0.0, %v4763
        %v4796 = vsub.f32 0.0, %v4764
        %v4797 = vsub.f32 0.0, %v4765
        %v4798 = vmul.f32 %v4766, 1.442695
        %v4799 = vpow.pop %v4798
        %v4800 = vmul.f32 %v4767, 1.442695
        %v4801 = vpow.pop %v4800
        %v4802 = vmul.f32 %v4768, 1.442695
        %v4803 = vpow.pop %v4802
        %v4804 = vmul.f32 %v4769, 1.442695
        %v4805 = vpow.pop %v4804
        %v4806 = vmul.f32 %v4770, 1.442695
        %v4807 = vpow.pop %v4806
        %v4808 = vmul.f32 %v4771, 1.442695
        %v4809 = vpow.pop %v4808
        %v4810 = vmul.f32 %v4772, 1.442695
        %v4811 = vpow.pop %v4810
        %v4812 = vmul.f32 %v4773, 1.442695
        %v4813 = vpow.pop %v4812
        %v4814 = vmul.f32 %v4774, 1.442695
        %v4815 = vpow.pop %v4814
        %v4816 = vmul.f32 %v4775, 1.442695
        %v4817 = vpow.pop %v4816
        %v4818 = vmul.f32 %v4776, 1.442695
        %v4819 = vpow.pop %v4818
        %v4820 = vmul.f32 %v4777, 1.442695
        %v4821 = vpow.pop %v4820
        %v4822 = vmul.f32 %v4778, 1.442695
        %v4823 = vpow.pop %v4822
        %v4824 = vmul.f32 %v4779, 1.442695
        %v4825 = vpow.pop %v4824
        %v4826 = vmul.f32 %v4780, 1.442695
        %v4827 = vpow.pop %v4826
        %v4828 = vmul.f32 %v4781, 1.442695
        %v4829 = vpow.pop %v4828
        %v4830 = vmul.f32 %v4782, 1.442695
        %v4831 = vpow.pop %v4830
        %v4832 = vmul.f32 %v4783, 1.442695
        %v4833 = vpow.pop %v4832
        %v4834 = vmul.f32 %v4784, 1.442695
        %v4835 = vpow.pop %v4834
        %v4836 = vmul.f32 %v4785, 1.442695
        %v4837 = vpow.pop %v4836
        %v4838 = vmul.f32 %v4786, 1.442695
        %v4839 = vpow.pop %v4838
        %v4840 = vmul.f32 %v4787, 1.442695
        %v4841 = vpow.pop %v4840
        %v4842 = vmul.f32 %v4788, 1.442695
        %v4843 = vpow.pop %v4842
        %v4844 = vmul.f32 %v4789, 1.442695
        %v4845 = vpow.pop %v4844
        %v4846 = vmul.f32 %v4790, 1.442695
        %v4847 = vpow.pop %v4846
        %v4848 = vmul.f32 %v4791, 1.442695
        %v4849 = vpow.pop %v4848
        %v4850 = vmul.f32 %v4792, 1.442695
        %v4851 = vpow.pop %v4850
        %v4852 = vmul.f32 %v4793, 1.442695
        %v4853 = vpow.pop %v4852
        %v4854 = vmul.f32 %v4794, 1.442695
        %v4855 = vpow.pop %v4854
        %v4856 = vmul.f32 %v4795, 1.442695
        %v4857 = vpow.pop %v4856
        %v4858 = vmul.f32 %v4796, 1.442695
        %v4859 = vpow.pop %v4858
        %v4860 = vmul.f32 %v4797, 1.442695
        %v4861 = vpow.pop %v4860
        %v4862 = vadd.f32 %v4799, 1.0
        %v4863 = vadd.f32 %v4801, 1.0
        %v4864 = vadd.f32 %v4803, 1.0
        %v4865 = vadd.f32 %v4805, 1.0
        %v4866 = vadd.f32 %v4807, 1.0
        %v4867 = vadd.f32 %v4809, 1.0
        %v4868 = vadd.f32 %v4811, 1.0
        %v4869 = vadd.f32 %v4813, 1.0
        %v4870 = vadd.f32 %v4815, 1.0
        %v4871 = vadd.f32 %v4817, 1.0
        %v4872 = vadd.f32 %v4819, 1.0
        %v4873 = vadd.f32 %v4821, 1.0
        %v4874 = vadd.f32 %v4823, 1.0
        %v4875 = vadd.f32 %v4825, 1.0
        %v4876 = vadd.f32 %v4827, 1.0
        %v4877 = vadd.f32 %v4829, 1.0
        %v4878 = vadd.f32 %v4831, 1.0
        %v4879 = vadd.f32 %v4833, 1.0
        %v4880 = vadd.f32 %v4835, 1.0
        %v4881 = vadd.f32 %v4837, 1.0
        %v4882 = vadd.f32 %v4839, 1.0
        %v4883 = vadd.f32 %v4841, 1.0
        %v4884 = vadd.f32 %v4843, 1.0
        %v4885 = vadd.f32 %v4845, 1.0
        %v4886 = vadd.f32 %v4847, 1.0
        %v4887 = vadd.f32 %v4849, 1.0
        %v4888 = vadd.f32 %v4851, 1.0
        %v4889 = vadd.f32 %v4853, 1.0
        %v4890 = vadd.f32 %v4855, 1.0
        %v4891 = vadd.f32 %v4857, 1.0
        %v4892 = vadd.f32 %v4859, 1.0
        %v4893 = vadd.f32 %v4861, 1.0
        %v4894 = vrcp.pop %v4862
        %v4895 = vmul.f32 %v4734, %v4894
        %v4896 = vrcp.pop %v4863
        %v4897 = vmul.f32 %v4735, %v4896
        %v4898 = vrcp.pop %v4864
        %v4899 = vmul.f32 %v4736, %v4898
        %v4900 = vrcp.pop %v4865
        %v4901 = vmul.f32 %v4737, %v4900
        %v4902 = vrcp.pop %v4866
        %v4903 = vmul.f32 %v4738, %v4902
        %v4904 = vrcp.pop %v4867
        %v4905 = vmul.f32 %v4739, %v4904
        %v4906 = vrcp.pop %v4868
        %v4907 = vmul.f32 %v4740, %v4906
        %v4908 = vrcp.pop %v4869
        %v4909 = vmul.f32 %v4741, %v4908
        %v4910 = vrcp.pop %v4870
        %v4911 = vmul.f32 %v4742, %v4910
        %v4912 = vrcp.pop %v4871
        %v4913 = vmul.f32 %v4743, %v4912
        %v4914 = vrcp.pop %v4872
        %v4915 = vmul.f32 %v4744, %v4914
        %v4916 = vrcp.pop %v4873
        %v4917 = vmul.f32 %v4745, %v4916
        %v4918 = vrcp.pop %v4874
        %v4919 = vmul.f32 %v4746, %v4918
        %v4920 = vrcp.pop %v4875
        %v4921 = vmul.f32 %v4747, %v4920
        %v4922 = vrcp.pop %v4876
        %v4923 = vmul.f32 %v4748, %v4922
        %v4924 = vrcp.pop %v4877
        %v4925 = vmul.f32 %v4749, %v4924
        %v4926 = vrcp.pop %v4878
        %v4927 = vmul.f32 %v4750, %v4926
        %v4928 = vrcp.pop %v4879
        %v4929 = vmul.f32 %v4751, %v4928
        %v4930 = vrcp.pop %v4880
        %v4931 = vmul.f32 %v4752, %v4930
        %v4932 = vrcp.pop %v4881
        %v4933 = vmul.f32 %v4753, %v4932
        %v4934 = vrcp.pop %v4882
        %v4935 = vmul.f32 %v4754, %v4934
        %v4936 = vrcp.pop %v4883
        %v4937 = vmul.f32 %v4755, %v4936
        %v4938 = vrcp.pop %v4884
        %v4939 = vmul.f32 %v4756, %v4938
        %v4940 = vrcp.pop %v4885
        %v4941 = vmul.f32 %v4757, %v4940
        %v4942 = vrcp.pop %v4886
        %v4943 = vmul.f32 %v4758, %v4942
        %v4944 = vrcp.pop %v4887
        %v4945 = vmul.f32 %v4759, %v4944
        %v4946 = vrcp.pop %v4888
        %v4947 = vmul.f32 %v4760, %v4946
        %v4948 = vrcp.pop %v4889
        %v4949 = vmul.f32 %v4761, %v4948
        %v4950 = vrcp.pop %v4890
        %v4951 = vmul.f32 %v4762, %v4950
        %v4952 = vrcp.pop %v4891
        %v4953 = vmul.f32 %v4763, %v4952
        %v4954 = vrcp.pop %v4892
        %v4955 = vmul.f32 %v4764, %v4954
        %v4956 = vrcp.pop %v4893
        %v4957 = vmul.f32 %v4765, %v4956
        %vm4958 = vcmask 261120
        %4959 = vst.msk [vmem:[%s231] sm:$0xff] %vm4958, %v4895
        %4960 = vst.msk [vmem:[%s231 + $0x8] sm:$0xff] %vm4958, %v4897
        %4961 = vst.msk [vmem:[%s231 + $0x10] sm:$0xff] %vm4958, %v4899
        %4962 = vst.msk [vmem:[%s231 + $0x18] sm:$0xff] %vm4958, %v4901
        %4963 = vst.msk [vmem:[%s231 + $0x20] sm:$0xff] %vm4958, %v4903
        %4964 = vst.msk [vmem:[%s231 + $0x28] sm:$0xff] %vm4958, %v4905
        %4965 = vst.msk [vmem:[%s231 + $0x30] sm:$0xff] %vm4958, %v4907
        %4966 = vst.msk [vmem:[%s231 + $0x38] sm:$0xff] %vm4958, %v4909
        %4967 = vst.msk [vmem:[%s231 + $0x40] sm:$0xff] %vm4958, %v4911
        %4968 = vst.msk [vmem:[%s231 + $0x48] sm:$0xff] %vm4958, %v4913
        %4969 = vst.msk [vmem:[%s231 + $0x50] sm:$0xff] %vm4958, %v4915
        %4970 = vst.msk [vmem:[%s231 + $0x58] sm:$0xff] %vm4958, %v4917
        %4971 = vst.msk [vmem:[%s231 + $0x60] sm:$0xff] %vm4958, %v4919
        %4972 = vst.msk [vmem:[%s231 + $0x68] sm:$0xff] %vm4958, %v4921
        %4973 = vst.msk [vmem:[%s231 + $0x70] sm:$0xff] %vm4958, %v4923
        %4974 = vst.msk [vmem:[%s231 + $0x78] sm:$0xff] %vm4958, %v4925
        %4975 = vst.msk [vmem:[%s231 + $0x80] sm:$0xff] %vm4958, %v4927
        %4976 = vst.msk [vmem:[%s231 + $0x88] sm:$0xff] %vm4958, %v4929
        %4977 = vst.msk [vmem:[%s231 + $0x90] sm:$0xff] %vm4958, %v4931
        %4978 = vst.msk [vmem:[%s231 + $0x98] sm:$0xff] %vm4958, %v4933
        %4979 = vst.msk [vmem:[%s231 + $0xa0] sm:$0xff] %vm4958, %v4935
        %4980 = vst.msk [vmem:[%s231 + $0xa8] sm:$0xff] %vm4958, %v4937
        %4981 = vst.msk [vmem:[%s231 + $0xb0] sm:$0xff] %vm4958, %v4939
        %4982 = vst.msk [vmem:[%s231 + $0xb8] sm:$0xff] %vm4958, %v4941
        %4983 = vst.msk [vmem:[%s231 + $0xc0] sm:$0xff] %vm4958, %v4943
        %4984 = vst.msk [vmem:[%s231 + $0xc8] sm:$0xff] %vm4958, %v4945
        %4985 = vst.msk [vmem:[%s231 + $0xd0] sm:$0xff] %vm4958, %v4947
        %4986 = vst.msk [vmem:[%s231 + $0xd8] sm:$0xff] %vm4958, %v4949
        %4987 = vst.msk [vmem:[%s231 + $0xe0] sm:$0xff] %vm4958, %v4951
        %4988 = vst.msk [vmem:[%s231 + $0xe8] sm:$0xff] %vm4958, %v4953
        %4989 = vst.msk [vmem:[%s231 + $0xf0] sm:$0xff] %vm4958, %v4955
        %4990 = vst.msk [vmem:[%s231 + $0xf8] sm:$0xff] %vm4958, %v4957
        %s4991 = sand.u32 %s151, 1
        %s4992 = scalar_lea.sflag [#allocation4], %s4991
        %s4993 = sand.u32 %s151, 1
        %s4994 = smul.addr %s4993, 256
        %s4995 = scalar_lea.vmem [#allocation3], %s4994
        // Predicated region
        $region41: #{tpu_custom_call.1} parent=39 // pred_check
          %p4996 = pneg %p161
        $region42: #{tpu_custom_call.1} parent=39 // pred_check_branch
          %4998 = sbr.rel (%p4996) target = $region44
        $region43: #{tpu_custom_call.1} parent=39 // pred_region
          %s4999 = smul.u32 16, %s24
          %s5001 = ssub.s32 4096, 4096
          %5002 = vsyncadd %s4992, %s5001
          %s5003 = smul.addr %s4999, 2
          %s5004 = smul.addr %s23, 32
          %s5005 = sadd.s32 %s5003, %s5004
          %s5006 = smul.addr %s5005, 128
          %s5007 = scalar_lea.hbm %s5, %s5006
          %s5008 = sshll.u32 %s4995, 4
          %s5009 = int_to_ptr.vmem [resolvable:$true] %s5008
          %5014 = dma.vmem_to_hbm [thread:$0]  %s5009, 4096, %s5007, %s4992, 128, 128, 8
        $region44: #{tpu_custom_call.1} parent=39 // pred_fallthru
          _
      $region40: #{tpu_custom_call.1} parent=5 // pred_fallthru
        _
      %p5015 = scmp.le.s32.totalorder 2, %s14
      // Predicated region
      $region45: #{tpu_custom_call.1} parent=5 // pred_check
        %p5016 = pneg %p5015
      $region46: #{tpu_custom_call.1} parent=5 // pred_check_branch
        %5018 = sbr.rel (%p5016) target = $region48
      $region47: #{tpu_custom_call.1} parent=5 // pred_region
        %s5019 = ssub.s32 %s14, 2
        // Predicated region
        $region49: #{tpu_custom_call.1} parent=47 // pred_check
          %p5020 = pneg %p167
        $region50: #{tpu_custom_call.1} parent=47 // pred_check_branch
          %5022 = sbr.rel (%p5020) target = $region52
        $region51: #{tpu_custom_call.1} parent=47 // pred_region
          %s5023 = sand.u32 %s152, 1
          %s5024 = scalar_lea.sflag [#allocation4], %s5023
          %s5025 = sand.u32 %s152, 1
          %s5026 = smul.addr %s5025, 256
          %s5027 = scalar_lea.vmem [#allocation3], %s5026
          %5028 = dma.done %s5024, 4096
        $region52: #{tpu_custom_call.1} parent=47 // pred_fallthru
          _
      $region48: #{tpu_custom_call.1} parent=5 // pred_fallthru
        _
    $region6: #{tpu_custom_call.1} parent=1 // loop_footer
      %s18 = sadd.s32 1, %s14
    $region7: #{tpu_custom_call.1} parent=1 // loop_footer_branch
      %13 = sbr.rel target = $region3
    $region8: #{tpu_custom_call.1} parent=1 // loop_exit
      _
    %5029 = vsyncpa [#allocation4], 1
    %s5030 = scalar_lea.sflag [#allocation4], 1
    %5031 = vsyncpa %s5030, 1

</llo_original>
